<compile_context>
chip_gen: v7x
topology: tpu7x:2x2x1
jax: 0.10.0
libtpu: 0.0.40
codegen_flags: <defaults>
</compile_context>

<pallas_src>
import jax
import jax.numpy as jnp
from jax.experimental import pallas as pl
from jax.experimental.pallas import tpu as pltpu

N_INPUT = 784
N2 = 392
N_BOTTLENECK = 8
N_OUTPUT = 784

# Lane-padded sizes (multiples of 128).
N_INPUT_PAD = 896
N2_PAD = 512
NB_PAD = 128
N_OUTPUT_PAD = 896


def mlp4_kernel(x_ref,
                w1_ref, b1_ref,
                w2_ref, b2_ref,
                w3_ref, b3_ref,
                w4_ref, b4_ref,
                o_ref):
    x = x_ref[...]  # (TB, 896) bf16, lane-dense

    # encode: fc1 -> relu -> fc2 -> relu   (bf16 operands, f32 accumulation)
    h1 = jnp.dot(x, w1_ref[...], preferred_element_type=jnp.float32) + b1_ref[...]
    h1 = jnp.maximum(h1, 0.0).astype(jnp.bfloat16)          # (TB, 512)
    h2 = jnp.dot(h1, w2_ref[...], preferred_element_type=jnp.float32) + b2_ref[...]
    h2 = jnp.maximum(h2, 0.0).astype(jnp.bfloat16)          # (TB, 128)

    # decode: fc3 -> relu -> fc4 -> sigmoid
    h3 = jnp.dot(h2, w3_ref[...], preferred_element_type=jnp.float32) + b3_ref[...]
    h3 = jnp.maximum(h3, 0.0).astype(jnp.bfloat16)          # (TB, 512)
    z = jnp.dot(h3, w4_ref[...], preferred_element_type=jnp.float32) + b4_ref[...]
    o_ref[...] = jax.nn.sigmoid(z)                           # (TB, 896) f32


def _prepare_params(params):
    """Zero-pad to lane-aligned shapes; weights -> bf16, biases stay f32 rows."""
    (w1, b1), (w2, b2), (w3, b3), (w4, b4) = params
    w1p = jnp.pad(w1, ((0, N_INPUT_PAD - N_INPUT), (0, N2_PAD - N2))).astype(jnp.bfloat16)
    b1p = jnp.pad(b1, (0, N2_PAD - N2)).reshape(1, -1).astype(jnp.float32)
    w2p = jnp.pad(w2, ((0, N2_PAD - N2), (0, NB_PAD - N_BOTTLENECK))).astype(jnp.bfloat16)
    b2p = jnp.pad(b2, (0, NB_PAD - N_BOTTLENECK)).reshape(1, -1).astype(jnp.float32)
    w3p = jnp.pad(w3, ((0, NB_PAD - N_BOTTLENECK), (0, N2_PAD - N2))).astype(jnp.bfloat16)
    b3p = jnp.pad(b3, (0, N2_PAD - N2)).reshape(1, -1).astype(jnp.float32)
    w4p = jnp.pad(w4, ((0, N2_PAD - N2), (0, N_OUTPUT_PAD - N_OUTPUT))).astype(jnp.bfloat16)
    b4p = jnp.pad(b4, (0, N_OUTPUT_PAD - N_OUTPUT)).reshape(1, -1).astype(jnp.float32)
    return (w1p, b1p, w2p, b2p, w3p, b3p, w4p, b4p)


def autoencoder_mlp4_forward(x, params, *, block_b=128):
    """Fused forward pass.  x: (B, 784) float32.  Returns (B, 784) float32."""
    B = x.shape[0]
    # Batch tile: fill MXU rows for large B; round up to sublane (8) for small B.
    tb = block_b if B >= block_b else max(8, -(-B // 8) * 8)
    b_pad = -(-B // tb) * tb

    # Cast + zero-pad x to (b_pad, 896) bf16 (lane-dense loads in the kernel).
    xb = jnp.pad(x.astype(jnp.bfloat16),
                 ((0, b_pad - B), (0, N_INPUT_PAD - N_INPUT)))

    w1p, b1p, w2p, b2p, w3p, b3p, w4p, b4p = _prepare_params(params)

    # Weights/biases: constant block index -> resident in VMEM across the grid.
    def const_spec(shape):
        return pl.BlockSpec(shape, lambda i: (0, 0))

    out = pl.pallas_call(
        mlp4_kernel,
        out_shape=jax.ShapeDtypeStruct((b_pad, N_OUTPUT_PAD), jnp.float32),
        grid=(b_pad // tb,),
        in_specs=[
            pl.BlockSpec((tb, N_INPUT_PAD), lambda i: (i, 0)),
            const_spec(w1p.shape), const_spec(b1p.shape),
            const_spec(w2p.shape), const_spec(b2p.shape),
            const_spec(w3p.shape), const_spec(b3p.shape),
            const_spec(w4p.shape), const_spec(b4p.shape),
        ],
        out_specs=pl.BlockSpec((tb, N_OUTPUT_PAD), lambda i: (i, 0)),
        compiler_params=pltpu.CompilerParams(
            dimension_semantics=("parallel",),
        ),
    )(xb, w1p, b1p, w2p, b2p, w3p, b3p, w4p, b4p)

    return out[:B, :N_OUTPUT]


def init_params(key):
    """nn.Linear default init: U(-1/sqrt(fan_in), +1/sqrt(fan_in)).
    Weights stored transposed as (in, out), f32."""
    dims = [(N_INPUT, N2), (N2, N_BOTTLENECK), (N_BOTTLENECK, N2), (N2, N_OUTPUT)]
    params = []
    for (fan_in, fan_out) in dims:
        key, kw, kb = jax.random.split(key, 3)
        bound = 1.0 / jnp.sqrt(float(fan_in))
        w = jax.random.uniform(kw, (fan_in, fan_out), jnp.float32, -bound, bound)
        b = jax.random.uniform(kb, (fan_out,), jnp.float32, -bound, bound)
        params.append((w, b))
    return params


def reference_forward(x, params):
    (w1, b1), (w2, b2), (w3, b3), (w4, b4) = params
    h = jnp.maximum(x @ w1 + b1, 0.0)
    h = jnp.maximum(h @ w2 + b2, 0.0)
    h = jnp.maximum(h @ w3 + b3, 0.0)
    return jax.nn.sigmoid(h @ w4 + b4)


if __name__ == "__main__":
    key = jax.random.PRNGKey(0)
    key, kx = jax.random.split(key)
    params = init_params(key)

    # Small-batch path (B=4 -> one 8-row tile).
    B = 4
    x = jax.random.uniform(kx, (B, N_INPUT), jnp.float32)  # MNIST-like pixels in [0, 1)
    out = jax.block_until_ready(autoencoder_mlp4_forward(x, params))
    ref = reference_forward(x, params)
    assert out.shape == (B, N_OUTPUT)
    # bf16 weights/activations with f32 accumulation -> loosened tolerance.
    assert jnp.allclose(out, ref, atol=2e-2, rtol=2e-2), float(jnp.max(jnp.abs(out - ref)))

    # Multi-tile path (B=256 -> two 128-row tiles, exercises the pipelined grid).
    B2 = 256
    x2 = jax.random.uniform(jax.random.fold_in(kx, 1), (B2, N_INPUT), jnp.float32)
    out2 = jax.block_until_ready(autoencoder_mlp4_forward(x2, params))
    ref2 = reference_forward(x2, params)
    assert out2.shape == (B2, N_OUTPUT)
    assert jnp.allclose(out2, ref2, atol=2e-2, rtol=2e-2), float(jnp.max(jnp.abs(out2 - ref2)))

    print("KERNEL_OK")
</pallas_src>

<mosaic_0001>
module attributes {stable_mosaic.version = 11 : i64} {
  func.func @mlp4_kernel(%arg0: i32, %arg1: memref<8x896xbf16, #tpu.memory_space<vmem>>, %arg2: memref<896x512xbf16, #tpu.memory_space<vmem>>, %arg3: memref<1x512xf32, #tpu.memory_space<vmem>>, %arg4: memref<512x128xbf16, #tpu.memory_space<vmem>>, %arg5: memref<1x128xf32, #tpu.memory_space<vmem>>, %arg6: memref<128x512xbf16, #tpu.memory_space<vmem>>, %arg7: memref<1x512xf32, #tpu.memory_space<vmem>>, %arg8: memref<512x896xbf16, #tpu.memory_space<vmem>>, %arg9: memref<1x896xf32, #tpu.memory_space<vmem>>, %arg10: memref<8x896xf32, #tpu.memory_space<vmem>>) attributes {dimension_semantics = [#tpu.dimension_semantics<parallel>], iteration_bounds = array<i64: 1>, scalar_prefetch = 0 : i64, scratch_operands = 0 : i64, tpu.core_type = #tpu.core_type<tc>, window_params = [{transform_indices = @transform_0, window_bounds = array<i64: 8, 896>}, {pipeline_mode = #tpu.pipeline_mode<synchronous>, transform_indices = @transform_1, window_bounds = array<i64: 896, 512>}, {pipeline_mode = #tpu.pipeline_mode<synchronous>, transform_indices = @transform_2, window_bounds = array<i64: 1, 512>}, {pipeline_mode = #tpu.pipeline_mode<synchronous>, transform_indices = @transform_3, window_bounds = array<i64: 512, 128>}, {pipeline_mode = #tpu.pipeline_mode<synchronous>, transform_indices = @transform_4, window_bounds = array<i64: 1, 128>}, {pipeline_mode = #tpu.pipeline_mode<synchronous>, transform_indices = @transform_5, window_bounds = array<i64: 128, 512>}, {pipeline_mode = #tpu.pipeline_mode<synchronous>, transform_indices = @transform_6, window_bounds = array<i64: 1, 512>}, {pipeline_mode = #tpu.pipeline_mode<synchronous>, transform_indices = @transform_7, window_bounds = array<i64: 512, 896>}, {pipeline_mode = #tpu.pipeline_mode<synchronous>, transform_indices = @transform_8, window_bounds = array<i64: 1, 896>}, {transform_indices = @transform_9, window_bounds = array<i64: 8, 896>}]} {
    %c0 = arith.constant 0 : index
    %c0_0 = arith.constant 0 : index
    %0 = vector.load %arg1[%c0, %c0_0] : memref<8x896xbf16, #tpu.memory_space<vmem>>, vector<8x896xbf16>
    %c0_1 = arith.constant 0 : index
    %c0_2 = arith.constant 0 : index
    %1 = vector.load %arg2[%c0_1, %c0_2] : memref<896x512xbf16, #tpu.memory_space<vmem>>, vector<896x512xbf16>
    %cst = arith.constant dense<0.000000e+00> : vector<8x512xf32>
    %2 = tpu.matmul %0, %1, %cst {dimension_numbers = #tpu.dot_dimension_numbers<[1], [0], [0], [1], [0, 0, 1, 1], [], []>} : vector<8x896xbf16>, vector<896x512xbf16>, vector<8x512xf32> -> vector<8x512xf32>
    %c0_3 = arith.constant 0 : index
    %c0_4 = arith.constant 0 : index
    %3 = vector.load %arg3[%c0_3, %c0_4] : memref<1x512xf32, #tpu.memory_space<vmem>>, vector<1x512xf32>
    %4 = vector.broadcast %3 : vector<1x512xf32> to vector<8x512xf32>
    %5 = arith.addf %2, %4 : vector<8x512xf32>
    %cst_5 = arith.constant 0.000000e+00 : f32
    %6 = vector.broadcast %cst_5 : f32 to vector<8x512xf32>
    %7 = arith.maximumf %5, %6 : vector<8x512xf32>
    %8 = arith.truncf %7 : vector<8x512xf32> to vector<8x512xbf16>
    %c0_6 = arith.constant 0 : index
    %c0_7 = arith.constant 0 : index
    %9 = vector.load %arg4[%c0_6, %c0_7] : memref<512x128xbf16, #tpu.memory_space<vmem>>, vector<512x128xbf16>
    %cst_8 = arith.constant dense<0.000000e+00> : vector<8x128xf32>
    %10 = tpu.matmul %8, %9, %cst_8 {dimension_numbers = #tpu.dot_dimension_numbers<[1], [0], [0], [1], [0, 0, 1, 1], [], []>} : vector<8x512xbf16>, vector<512x128xbf16>, vector<8x128xf32> -> vector<8x128xf32>
    %c0_9 = arith.constant 0 : index
    %c0_10 = arith.constant 0 : index
    %11 = vector.load %arg5[%c0_9, %c0_10] : memref<1x128xf32, #tpu.memory_space<vmem>>, vector<1x128xf32>
    %12 = vector.broadcast %11 : vector<1x128xf32> to vector<8x128xf32>
    %13 = arith.addf %10, %12 : vector<8x128xf32>
    %cst_11 = arith.constant 0.000000e+00 : f32
    %14 = vector.broadcast %cst_11 : f32 to vector<8x128xf32>
    %15 = arith.maximumf %13, %14 : vector<8x128xf32>
    %16 = arith.truncf %15 : vector<8x128xf32> to vector<8x128xbf16>
    %c0_12 = arith.constant 0 : index
    %c0_13 = arith.constant 0 : index
    %17 = vector.load %arg6[%c0_12, %c0_13] : memref<128x512xbf16, #tpu.memory_space<vmem>>, vector<128x512xbf16>
    %cst_14 = arith.constant dense<0.000000e+00> : vector<8x512xf32>
    %18 = tpu.matmul %16, %17, %cst_14 {dimension_numbers = #tpu.dot_dimension_numbers<[1], [0], [0], [1], [0, 0, 1, 1], [], []>} : vector<8x128xbf16>, vector<128x512xbf16>, vector<8x512xf32> -> vector<8x512xf32>
    %c0_15 = arith.constant 0 : index
    %c0_16 = arith.constant 0 : index
    %19 = vector.load %arg7[%c0_15, %c0_16] : memref<1x512xf32, #tpu.memory_space<vmem>>, vector<1x512xf32>
    %20 = vector.broadcast %19 : vector<1x512xf32> to vector<8x512xf32>
    %21 = arith.addf %18, %20 : vector<8x512xf32>
    %cst_17 = arith.constant 0.000000e+00 : f32
    %22 = vector.broadcast %cst_17 : f32 to vector<8x512xf32>
    %23 = arith.maximumf %21, %22 : vector<8x512xf32>
    %24 = arith.truncf %23 : vector<8x512xf32> to vector<8x512xbf16>
    %c0_18 = arith.constant 0 : index
    %c0_19 = arith.constant 0 : index
    %25 = vector.load %arg8[%c0_18, %c0_19] : memref<512x896xbf16, #tpu.memory_space<vmem>>, vector<512x896xbf16>
    %cst_20 = arith.constant dense<0.000000e+00> : vector<8x896xf32>
    %26 = tpu.matmul %24, %25, %cst_20 {dimension_numbers = #tpu.dot_dimension_numbers<[1], [0], [0], [1], [0, 0, 1, 1], [], []>} : vector<8x512xbf16>, vector<512x896xbf16>, vector<8x896xf32> -> vector<8x896xf32>
    %c0_21 = arith.constant 0 : index
    %c0_22 = arith.constant 0 : index
    %27 = vector.load %arg9[%c0_21, %c0_22] : memref<1x896xf32, #tpu.memory_space<vmem>>, vector<1x896xf32>
    %28 = vector.broadcast %27 : vector<1x896xf32> to vector<8x896xf32>
    %29 = arith.addf %26, %28 : vector<8x896xf32>
    %30 = arith.negf %29 : vector<8x896xf32>
    %31 = math.exp %30 : vector<8x896xf32>
    %cst_23 = arith.constant 1.000000e+00 : f32
    %32 = vector.broadcast %cst_23 : f32 to vector<8x896xf32>
    %33 = arith.addf %32, %31 : vector<8x896xf32>
    %34 = arith.divf %32, %33 : vector<8x896xf32>
    %c0_24 = arith.constant 0 : index
    %c0_25 = arith.constant 0 : index
    %35 = vector.load %arg10[%c0_24, %c0_25] : memref<8x896xf32, #tpu.memory_space<vmem>>, vector<8x896xf32>
    tpu.vector_store %arg10[%c0_24, %c0_25], %34 {strides = array<i32>} : memref<8x896xf32, #tpu.memory_space<vmem>>, vector<8x896xf32>,
    return
  }
  func.func @transform_0(%arg0: i32) -> (i32, i32) {
    %c0_i32 = arith.constant 0 : i32
    %c0_i32_0 = arith.constant 0 : i32
    return %arg0, %c0_i32 : i32, i32
  }
  func.func @transform_1(%arg0: i32) -> (i32, i32) {
    %c0_i32 = arith.constant 0 : i32
    %c0_i32_0 = arith.constant 0 : i32
    %c0_i32_1 = arith.constant 0 : i32
    return %c0_i32, %c0_i32_0 : i32, i32
  }
  func.func @transform_2(%arg0: i32) -> (i32, i32) {
    %c0_i32 = arith.constant 0 : i32
    %c0_i32_0 = arith.constant 0 : i32
    %c0_i32_1 = arith.constant 0 : i32
    return %c0_i32, %c0_i32_0 : i32, i32
  }
  func.func @transform_3(%arg0: i32) -> (i32, i32) {
    %c0_i32 = arith.constant 0 : i32
    %c0_i32_0 = arith.constant 0 : i32
    %c0_i32_1 = arith.constant 0 : i32
    return %c0_i32, %c0_i32_0 : i32, i32
  }
  func.func @transform_4(%arg0: i32) -> (i32, i32) {
    %c0_i32 = arith.constant 0 : i32
    %c0_i32_0 = arith.constant 0 : i32
    %c0_i32_1 = arith.constant 0 : i32
    return %c0_i32, %c0_i32_0 : i32, i32
  }
  func.func @transform_5(%arg0: i32) -> (i32, i32) {
    %c0_i32 = arith.constant 0 : i32
    %c0_i32_0 = arith.constant 0 : i32
    %c0_i32_1 = arith.constant 0 : i32
    return %c0_i32, %c0_i32_0 : i32, i32
  }
  func.func @transform_6(%arg0: i32) -> (i32, i32) {
    %c0_i32 = arith.constant 0 : i32
    %c0_i32_0 = arith.constant 0 : i32
    %c0_i32_1 = arith.constant 0 : i32
    return %c0_i32, %c0_i32_0 : i32, i32
  }
  func.func @transform_7(%arg0: i32) -> (i32, i32) {
    %c0_i32 = arith.constant 0 : i32
    %c0_i32_0 = arith.constant 0 : i32
    %c0_i32_1 = arith.constant 0 : i32
    return %c0_i32, %c0_i32_0 : i32, i32
  }
  func.func @transform_8(%arg0: i32) -> (i32, i32) {
    %c0_i32 = arith.constant 0 : i32
    %c0_i32_0 = arith.constant 0 : i32
    %c0_i32_1 = arith.constant 0 : i32
    return %c0_i32, %c0_i32_0 : i32, i32
  }
  func.func @transform_9(%arg0: i32) -> (i32, i32) {
    %c0_i32 = arith.constant 0 : i32
    %c0_i32_0 = arith.constant 0 : i32
    return %arg0, %c0_i32 : i32, i32
  }
}

</mosaic_0001>

<llo_original>
// kernel: tpu_custom_call.1
$region0: #{tpu_custom_call.1}
  #allocation0 [shape = 'u32[]', space=smem, size = 0x4, offset = 0x4, fixed_abs, tag = 'smem constant byte address 0x4 - core index']
  #allocation1 [shape = 'u32[144,128]{1,0:T(1,128)}', space=vmem, size = 0x12000, scoped, tag = 'internal scratch']
  %s0 = inlined_call_operand.hbm [shape: bf16[8,896], index: 0, kind: input, shape index: {}]
  %s1 = inlined_call_operand.hbm [shape: bf16[896,512], index: 1, kind: input, shape index: {}]
  %s2 = inlined_call_operand.vmem [shape: f32[1,512], index: 2, kind: input, shape index: {}]
  %s3 = inlined_call_operand.hbm [shape: bf16[512,128], index: 3, kind: input, shape index: {}]
  %s4 = inlined_call_operand.hbm [shape: f32[1,128], index: 4, kind: input, shape index: {}]
  %s5 = inlined_call_operand.hbm [shape: bf16[128,512], index: 5, kind: input, shape index: {}]
  %s6 = inlined_call_operand.vmem [shape: f32[1,512], index: 6, kind: input, shape index: {}]
  %s7 = inlined_call_operand.hbm [shape: bf16[512,896], index: 7, kind: input, shape index: {}]
  %s8 = inlined_call_operand.vmem [shape: f32[1,896], index: 8, kind: input, shape index: {}]
  %s9 = inlined_call_operand.hbm [shape: f32[8,896], index: 9, kind: output, shape index: {}]
  %s10 = sld [smem:[#allocation0]]
  $region70: #{tpu_custom_call.1} parent=0
    _
  %s12 = ssub.s32 1, %s10
  %s13 = scalar_select 0, %s12, %s10
  $region1: #{tpu_custom_call.1} parent=0
    #allocation2 [shape = 'u8[14336]{0}', space=vmem, size = 0x3800, scoped, tag = 'input window, operand 0, single buffered']
    #allocation3 [shape = 's32[1]{0}', space=sflag, size = 0x4, scoped, tag = 'scoped memory for tpu_custom_call.1']
    #allocation4 [shape = 's32[1]{0}', space=sflag, size = 0x4, scoped, tag = 'scoped memory for tpu_custom_call.1']
    #allocation5 [shape = 'u8[917504]{0}', space=vmem, size = 0xe0000, scoped, tag = 'input window, operand 1, single buffered']
    #allocation6 [shape = 's32[1]{0}', space=sflag, size = 0x4, scoped, tag = 'scoped memory for tpu_custom_call.1']
    #allocation7 [shape = 'u8[131072]{0}', space=vmem, size = 0x20000, scoped, tag = 'input window, operand 3, single buffered']
    #allocation8 [shape = 'u8[512]{0}', space=vmem, size = 0x400, scoped, tag = 'input window, operand 4, single buffered']
    #allocation9 [shape = 's32[1]{0}', space=sflag, size = 0x4, scoped, tag = 'scoped memory for tpu_custom_call.1']
    #allocation10 [shape = 'u8[131072]{0}', space=vmem, size = 0x20000, scoped, tag = 'input window, operand 5, single buffered']
    #allocation11 [shape = 'u8[917504]{0}', space=vmem, size = 0xe0000, scoped, tag = 'input window, operand 7, single buffered']
    #allocation12 [shape = 's32[1]{0}', space=sflag, size = 0x4, scoped, tag = 'scoped memory for tpu_custom_call.1']
    #allocation13 [shape = 'u8[28672]{0}', space=vmem, size = 0x7000, scoped, tag = 'output window, operand 0, single buffered']
    %14 = vsyncpa [#allocation3], 0
    %15 = vsyncpa [#allocation6], 0
    %16 = vsyncpa [#allocation9], 0
    %17 = vsyncpa [#allocation12], 0
    %18 = vsyncpa [#allocation4], 0
    // Predicated region
    $region2: #{tpu_custom_call.1} parent=1 // pred_check
      _
    $region3: #{tpu_custom_call.1} parent=1 // pred_check_branch
      %20 = sbr.rel (0) target = $region5
    $region4: #{tpu_custom_call.1} parent=1 // pred_region
      %s22 = ssub.s32 448, 448
      %23 = vsyncadd [#allocation3], %s22
      %s25 = sshll.u32 [#allocation2], 4
      %s26 = int_to_ptr.vmem [resolvable:$true] %s25
      %28 = dma.hbm_to_vmem [thread:$0]  %s0, 448, %s26, [#allocation3]
    $region5: #{tpu_custom_call.1} parent=1 // pred_fallthru
      _
    // Predicated region
    $region6: #{tpu_custom_call.1} parent=1 // pred_check
      _
    $region7: #{tpu_custom_call.1} parent=1 // pred_check_branch
      %30 = sbr.rel (0) target = $region9
    $region8: #{tpu_custom_call.1} parent=1 // pred_region
      %s32 = ssub.s32 28672, 28672
      %33 = vsyncadd [#allocation6], %s32
      %s34 = sshll.u32 [#allocation5], 4
      %s35 = int_to_ptr.vmem [resolvable:$true] %s34
      %40 = dma.hbm_to_vmem [thread:$0]  %s1, 28672, %s35, [#allocation6], 256, 256, 16
    $region9: #{tpu_custom_call.1} parent=1 // pred_fallthru
      _
    // Predicated region
    $region10: #{tpu_custom_call.1} parent=1 // pred_check
      _
    $region11: #{tpu_custom_call.1} parent=1 // pred_check_branch
      %42 = sbr.rel (0) target = $region13
    $region12: #{tpu_custom_call.1} parent=1 // pred_region
      _
    $region13: #{tpu_custom_call.1} parent=1 // pred_fallthru
      _
    // Predicated region
    $region14: #{tpu_custom_call.1} parent=1 // pred_check
      _
    $region15: #{tpu_custom_call.1} parent=1 // pred_check_branch
      %44 = sbr.rel (0) target = $region17
    $region16: #{tpu_custom_call.1} parent=1 // pred_region
      %s46 = ssub.s32 4096, 4096
      %47 = vsyncadd [#allocation6], %s46
      %s48 = sshll.u32 [#allocation7], 4
      %s49 = int_to_ptr.vmem [resolvable:$true] %s48
      %54 = dma.hbm_to_vmem [thread:$0]  %s3, 4096, %s49, [#allocation6], 64, 64, 4
    $region17: #{tpu_custom_call.1} parent=1 // pred_fallthru
      _
    // Predicated region
    $region18: #{tpu_custom_call.1} parent=1 // pred_check
      _
    $region19: #{tpu_custom_call.1} parent=1 // pred_check_branch
      %56 = sbr.rel (0) target = $region21
    $region20: #{tpu_custom_call.1} parent=1 // pred_region
      %s58 = ssub.s32 16, 16
      %59 = vsyncadd [#allocation9], %s58
      %s61 = sshll.u32 [#allocation8], 4
      %s62 = int_to_ptr.vmem [resolvable:$true] %s61
      %64 = dma.hbm_to_vmem [thread:$0]  %s4, 16, %s62, [#allocation9]
    $region21: #{tpu_custom_call.1} parent=1 // pred_fallthru
      _
    // Predicated region
    $region22: #{tpu_custom_call.1} parent=1 // pred_check
      _
    $region23: #{tpu_custom_call.1} parent=1 // pred_check_branch
      %66 = sbr.rel (0) target = $region25
    $region24: #{tpu_custom_call.1} parent=1 // pred_region
      %s68 = ssub.s32 4096, 4096
      %69 = vsyncadd [#allocation9], %s68
      %s70 = sshll.u32 [#allocation10], 4
      %s71 = int_to_ptr.vmem [resolvable:$true] %s70
      %76 = dma.hbm_to_vmem [thread:$0]  %s5, 4096, %s71, [#allocation9], 256, 256, 16
    $region25: #{tpu_custom_call.1} parent=1 // pred_fallthru
      _
    // Predicated region
    $region26: #{tpu_custom_call.1} parent=1 // pred_check
      _
    $region27: #{tpu_custom_call.1} parent=1 // pred_check_branch
      %78 = sbr.rel (0) target = $region29
    $region28: #{tpu_custom_call.1} parent=1 // pred_region
      _
    $region29: #{tpu_custom_call.1} parent=1 // pred_fallthru
      _
    // Predicated region
    $region30: #{tpu_custom_call.1} parent=1 // pred_check
      _
    $region31: #{tpu_custom_call.1} parent=1 // pred_check_branch
      %80 = sbr.rel (0) target = $region33
    $region32: #{tpu_custom_call.1} parent=1 // pred_region
      %s82 = ssub.s32 28672, 28672
      %83 = vsyncadd [#allocation12], %s82
      %s84 = sshll.u32 [#allocation11], 4
      %s85 = int_to_ptr.vmem [resolvable:$true] %s84
      %90 = dma.hbm_to_vmem [thread:$0]  %s7, 28672, %s85, [#allocation12], 448, 448, 28
    $region33: #{tpu_custom_call.1} parent=1 // pred_fallthru
      _
    // Predicated region
    $region34: #{tpu_custom_call.1} parent=1 // pred_check
      _
    $region35: #{tpu_custom_call.1} parent=1 // pred_check_branch
      %92 = sbr.rel (0) target = $region37
    $region36: #{tpu_custom_call.1} parent=1 // pred_region
      _
    $region37: #{tpu_custom_call.1} parent=1 // pred_fallthru
      _
    // Predicated region
    $region38: #{tpu_custom_call.1} parent=1 // pred_check
      _
    $region39: #{tpu_custom_call.1} parent=1 // pred_check_branch
      %94 = sbr.rel (0) target = $region41
    $region40: #{tpu_custom_call.1} parent=1 // pred_region
      %95 = dma.done [#allocation3], 448
    $region41: #{tpu_custom_call.1} parent=1 // pred_fallthru
      _
    // Predicated region
    $region42: #{tpu_custom_call.1} parent=1 // pred_check
      _
    $region43: #{tpu_custom_call.1} parent=1 // pred_check_branch
      %97 = sbr.rel (0) target = $region45
    $region44: #{tpu_custom_call.1} parent=1 // pred_region
      %98 = dma.done [#allocation6], 28672
    $region45: #{tpu_custom_call.1} parent=1 // pred_fallthru
      _
    // Predicated region
    $region46: #{tpu_custom_call.1} parent=1 // pred_check
      _
    $region47: #{tpu_custom_call.1} parent=1 // pred_check_branch
      %100 = sbr.rel (0) target = $region49
    $region48: #{tpu_custom_call.1} parent=1 // pred_region
      %101 = dma.done [#allocation6], 4096
    $region49: #{tpu_custom_call.1} parent=1 // pred_fallthru
      _
    // Predicated region
    $region50: #{tpu_custom_call.1} parent=1 // pred_check
      _
    $region51: #{tpu_custom_call.1} parent=1 // pred_check_branch
      %103 = sbr.rel (0) target = $region53
    $region52: #{tpu_custom_call.1} parent=1 // pred_region
      %104 = dma.done [#allocation9], 16
    $region53: #{tpu_custom_call.1} parent=1 // pred_fallthru
      _
    // Predicated region
    $region54: #{tpu_custom_call.1} parent=1 // pred_check
      _
    $region55: #{tpu_custom_call.1} parent=1 // pred_check_branch
      %106 = sbr.rel (0) target = $region57
    $region56: #{tpu_custom_call.1} parent=1 // pred_region
      %107 = dma.done [#allocation9], 4096
    $region57: #{tpu_custom_call.1} parent=1 // pred_fallthru
      _
    // Predicated region
    $region58: #{tpu_custom_call.1} parent=1 // pred_check
      _
    $region59: #{tpu_custom_call.1} parent=1 // pred_check_branch
      %109 = sbr.rel (0) target = $region61
    $region60: #{tpu_custom_call.1} parent=1 // pred_region
      %110 = dma.done [#allocation12], 28672
    $region61: #{tpu_custom_call.1} parent=1 // pred_fallthru
      _
    %v112 = vld [vmem:[#allocation2] sm:$0xff]
    %v113 = vld [vmem:[#allocation2 + $0x8] sm:$0xff]
    %v114 = vld [vmem:[#allocation2 + $0x10] sm:$0xff]
    %v115 = vld [vmem:[#allocation2 + $0x18] sm:$0xf]
    %v116 = vld [vmem:[#allocation5] sm:$0xff]
    %v117 = vld [vmem:[#allocation5 + $0x8] sm:$0xff]
    %v118 = vld [vmem:[#allocation5 + $0x10] sm:$0xff]
    %v119 = vld [vmem:[#allocation5 + $0x18] sm:$0xff]
    %v120 = vld [vmem:[#allocation5 + $0x20] sm:$0xff]
    %v121 = vld [vmem:[#allocation5 + $0x28] sm:$0xff]
    %v122 = vld [vmem:[#allocation5 + $0x30] sm:$0xff]
    %v123 = vld [vmem:[#allocation5 + $0x38] sm:$0xff]
    %v124 = vld [vmem:[#allocation5 + $0x40] sm:$0xff]
    %v125 = vld [vmem:[#allocation5 + $0x48] sm:$0xff]
    %v126 = vld [vmem:[#allocation5 + $0x50] sm:$0xff]
    %v127 = vld [vmem:[#allocation5 + $0x58] sm:$0xff]
    %v128 = vld [vmem:[#allocation5 + $0x60] sm:$0xff]
    %v129 = vld [vmem:[#allocation5 + $0x68] sm:$0xff]
    %v130 = vld [vmem:[#allocation5 + $0x70] sm:$0xff]
    %v131 = vld [vmem:[#allocation5 + $0x78] sm:$0xff]
    %v132 = vld [vmem:[#allocation5 + $0x80] sm:$0xff]
    %v133 = vld [vmem:[#allocation5 + $0x88] sm:$0xff]
    %v134 = vld [vmem:[#allocation5 + $0x90] sm:$0xff]
    %v135 = vld [vmem:[#allocation5 + $0x98] sm:$0xff]
    %v136 = vld [vmem:[#allocation5 + $0xa0] sm:$0xff]
    %v137 = vld [vmem:[#allocation5 + $0xa8] sm:$0xff]
    %v138 = vld [vmem:[#allocation5 + $0xb0] sm:$0xff]
    %v139 = vld [vmem:[#allocation5 + $0xb8] sm:$0xff]
    %v140 = vld [vmem:[#allocation5 + $0xc0] sm:$0xff]
    %v141 = vld [vmem:[#allocation5 + $0xc8] sm:$0xff]
    %v142 = vld [vmem:[#allocation5 + $0xd0] sm:$0xff]
    %v143 = vld [vmem:[#allocation5 + $0xd8] sm:$0xff]
    %v144 = vld [vmem:[#allocation5 + $0xe0] sm:$0xff]
    %v145 = vld [vmem:[#allocation5 + $0xe8] sm:$0xff]
    %v146 = vld [vmem:[#allocation5 + $0xf0] sm:$0xff]
    %v147 = vld [vmem:[#allocation5 + $0xf8] sm:$0xff]
    %v148 = vld [vmem:[#allocation5 + $0x100] sm:$0xff]
    %v149 = vld [vmem:[#allocation5 + $0x108] sm:$0xff]
    %v150 = vld [vmem:[#allocation5 + $0x110] sm:$0xff]
    %v151 = vld [vmem:[#allocation5 + $0x118] sm:$0xff]
    %v152 = vld [vmem:[#allocation5 + $0x120] sm:$0xff]
    %v153 = vld [vmem:[#allocation5 + $0x128] sm:$0xff]
    %v154 = vld [vmem:[#allocation5 + $0x130] sm:$0xff]
    %v155 = vld [vmem:[#allocation5 + $0x138] sm:$0xff]
    %v156 = vld [vmem:[#allocation5 + $0x140] sm:$0xff]
    %v157 = vld [vmem:[#allocation5 + $0x148] sm:$0xff]
    %v158 = vld [vmem:[#allocation5 + $0x150] sm:$0xff]
    %v159 = vld [vmem:[#allocation5 + $0x158] sm:$0xff]
    %v160 = vld [vmem:[#allocation5 + $0x160] sm:$0xff]
    %v161 = vld [vmem:[#allocation5 + $0x168] sm:$0xff]
    %v162 = vld [vmem:[#allocation5 + $0x170] sm:$0xff]
    %v163 = vld [vmem:[#allocation5 + $0x178] sm:$0xff]
    %v164 = vld [vmem:[#allocation5 + $0x180] sm:$0xff]
    %v165 = vld [vmem:[#allocation5 + $0x188] sm:$0xff]
    %v166 = vld [vmem:[#allocation5 + $0x190] sm:$0xff]
    %v167 = vld [vmem:[#allocation5 + $0x198] sm:$0xff]
    %v168 = vld [vmem:[#allocation5 + $0x1a0] sm:$0xff]
    %v169 = vld [vmem:[#allocation5 + $0x1a8] sm:$0xff]
    %v170 = vld [vmem:[#allocation5 + $0x1b0] sm:$0xff]
    %v171 = vld [vmem:[#allocation5 + $0x1b8] sm:$0xff]
    %v172 = vld [vmem:[#allocation5 + $0x1c0] sm:$0xff]
    %v173 = vld [vmem:[#allocation5 + $0x1c8] sm:$0xff]
    %v174 = vld [vmem:[#allocation5 + $0x1d0] sm:$0xff]
    %v175 = vld [vmem:[#allocation5 + $0x1d8] sm:$0xff]
    %v176 = vld [vmem:[#allocation5 + $0x1e0] sm:$0xff]
    %v177 = vld [vmem:[#allocation5 + $0x1e8] sm:$0xff]
    %v178 = vld [vmem:[#allocation5 + $0x1f0] sm:$0xff]
    %v179 = vld [vmem:[#allocation5 + $0x1f8] sm:$0xff]
    %v180 = vld [vmem:[#allocation5 + $0x200] sm:$0xff]
    %v181 = vld [vmem:[#allocation5 + $0x208] sm:$0xff]
    %v182 = vld [vmem:[#allocation5 + $0x210] sm:$0xff]
    %v183 = vld [vmem:[#allocation5 + $0x218] sm:$0xff]
    %v184 = vld [vmem:[#allocation5 + $0x220] sm:$0xff]
    %v185 = vld [vmem:[#allocation5 + $0x228] sm:$0xff]
    %v186 = vld [vmem:[#allocation5 + $0x230] sm:$0xff]
    %v187 = vld [vmem:[#allocation5 + $0x238] sm:$0xff]
    %v188 = vld [vmem:[#allocation5 + $0x240] sm:$0xff]
    %v189 = vld [vmem:[#allocation5 + $0x248] sm:$0xff]
    %v190 = vld [vmem:[#allocation5 + $0x250] sm:$0xff]
    %v191 = vld [vmem:[#allocation5 + $0x258] sm:$0xff]
    %v192 = vld [vmem:[#allocation5 + $0x260] sm:$0xff]
    %v193 = vld [vmem:[#allocation5 + $0x268] sm:$0xff]
    %v194 = vld [vmem:[#allocation5 + $0x270] sm:$0xff]
    %v195 = vld [vmem:[#allocation5 + $0x278] sm:$0xff]
    %v196 = vld [vmem:[#allocation5 + $0x280] sm:$0xff]
    %v197 = vld [vmem:[#allocation5 + $0x288] sm:$0xff]
    %v198 = vld [vmem:[#allocation5 + $0x290] sm:$0xff]
    %v199 = vld [vmem:[#allocation5 + $0x298] sm:$0xff]
    %v200 = vld [vmem:[#allocation5 + $0x2a0] sm:$0xff]
    %v201 = vld [vmem:[#allocation5 + $0x2a8] sm:$0xff]
    %v202 = vld [vmem:[#allocation5 + $0x2b0] sm:$0xff]
    %v203 = vld [vmem:[#allocation5 + $0x2b8] sm:$0xff]
    %v204 = vld [vmem:[#allocation5 + $0x2c0] sm:$0xff]
    %v205 = vld [vmem:[#allocation5 + $0x2c8] sm:$0xff]
    %v206 = vld [vmem:[#allocation5 + $0x2d0] sm:$0xff]
    %v207 = vld [vmem:[#allocation5 + $0x2d8] sm:$0xff]
    %v208 = vld [vmem:[#allocation5 + $0x2e0] sm:$0xff]
    %v209 = vld [vmem:[#allocation5 + $0x2e8] sm:$0xff]
    %v210 = vld [vmem:[#allocation5 + $0x2f0] sm:$0xff]
    %v211 = vld [vmem:[#allocation5 + $0x2f8] sm:$0xff]
    %v212 = vld [vmem:[#allocation5 + $0x300] sm:$0xff]
    %v213 = vld [vmem:[#allocation5 + $0x308] sm:$0xff]
    %v214 = vld [vmem:[#allocation5 + $0x310] sm:$0xff]
    %v215 = vld [vmem:[#allocation5 + $0x318] sm:$0xff]
    %v216 = vld [vmem:[#allocation5 + $0x320] sm:$0xff]
    %v217 = vld [vmem:[#allocation5 + $0x328] sm:$0xff]
    %v218 = vld [vmem:[#allocation5 + $0x330] sm:$0xff]
    %v219 = vld [vmem:[#allocation5 + $0x338] sm:$0xff]
    %v220 = vld [vmem:[#allocation5 + $0x340] sm:$0xff]
    %v221 = vld [vmem:[#allocation5 + $0x348] sm:$0xff]
    %v222 = vld [vmem:[#allocation5 + $0x350] sm:$0xff]
    %v223 = vld [vmem:[#allocation5 + $0x358] sm:$0xff]
    %v224 = vld [vmem:[#allocation5 + $0x360] sm:$0xff]
    %v225 = vld [vmem:[#allocation5 + $0x368] sm:$0xff]
    %v226 = vld [vmem:[#allocation5 + $0x370] sm:$0xff]
    %v227 = vld [vmem:[#allocation5 + $0x378] sm:$0xff]
    %v228 = vld [vmem:[#allocation5 + $0x380] sm:$0xff]
    %v229 = vld [vmem:[#allocation5 + $0x388] sm:$0xff]
    %v230 = vld [vmem:[#allocation5 + $0x390] sm:$0xff]
    %v231 = vld [vmem:[#allocation5 + $0x398] sm:$0xff]
    %v232 = vld [vmem:[#allocation5 + $0x3a0] sm:$0xff]
    %v233 = vld [vmem:[#allocation5 + $0x3a8] sm:$0xff]
    %v234 = vld [vmem:[#allocation5 + $0x3b0] sm:$0xff]
    %v235 = vld [vmem:[#allocation5 + $0x3b8] sm:$0xff]
    %v236 = vld [vmem:[#allocation5 + $0x3c0] sm:$0xff]
    %v237 = vld [vmem:[#allocation5 + $0x3c8] sm:$0xff]
    %v238 = vld [vmem:[#allocation5 + $0x3d0] sm:$0xff]
    %v239 = vld [vmem:[#allocation5 + $0x3d8] sm:$0xff]
    %v240 = vld [vmem:[#allocation5 + $0x3e0] sm:$0xff]
    %v241 = vld [vmem:[#allocation5 + $0x3e8] sm:$0xff]
    %v242 = vld [vmem:[#allocation5 + $0x3f0] sm:$0xff]
    %v243 = vld [vmem:[#allocation5 + $0x3f8] sm:$0xff]
    %v244 = vld [vmem:[#allocation5 + $0x400] sm:$0xff]
    %v245 = vld [vmem:[#allocation5 + $0x408] sm:$0xff]
    %v246 = vld [vmem:[#allocation5 + $0x410] sm:$0xff]
    %v247 = vld [vmem:[#allocation5 + $0x418] sm:$0xff]
    %v248 = vld [vmem:[#allocation5 + $0x420] sm:$0xff]
    %v249 = vld [vmem:[#allocation5 + $0x428] sm:$0xff]
    %v250 = vld [vmem:[#allocation5 + $0x430] sm:$0xff]
    %v251 = vld [vmem:[#allocation5 + $0x438] sm:$0xff]
    %v252 = vld [vmem:[#allocation5 + $0x440] sm:$0xff]
    %v253 = vld [vmem:[#allocation5 + $0x448] sm:$0xff]
    %v254 = vld [vmem:[#allocation5 + $0x450] sm:$0xff]
    %v255 = vld [vmem:[#allocation5 + $0x458] sm:$0xff]
    %v256 = vld [vmem:[#allocation5 + $0x460] sm:$0xff]
    %v257 = vld [vmem:[#allocation5 + $0x468] sm:$0xff]
    %v258 = vld [vmem:[#allocation5 + $0x470] sm:$0xff]
    %v259 = vld [vmem:[#allocation5 + $0x478] sm:$0xff]
    %v260 = vld [vmem:[#allocation5 + $0x480] sm:$0xff]
    %v261 = vld [vmem:[#allocation5 + $0x488] sm:$0xff]
    %v262 = vld [vmem:[#allocation5 + $0x490] sm:$0xff]
    %v263 = vld [vmem:[#allocation5 + $0x498] sm:$0xff]
    %v264 = vld [vmem:[#allocation5 + $0x4a0] sm:$0xff]
    %v265 = vld [vmem:[#allocation5 + $0x4a8] sm:$0xff]
    %v266 = vld [vmem:[#allocation5 + $0x4b0] sm:$0xff]
    %v267 = vld [vmem:[#allocation5 + $0x4b8] sm:$0xff]
    %v268 = vld [vmem:[#allocation5 + $0x4c0] sm:$0xff]
    %v269 = vld [vmem:[#allocation5 + $0x4c8] sm:$0xff]
    %v270 = vld [vmem:[#allocation5 + $0x4d0] sm:$0xff]
    %v271 = vld [vmem:[#allocation5 + $0x4d8] sm:$0xff]
    %v272 = vld [vmem:[#allocation5 + $0x4e0] sm:$0xff]
    %v273 = vld [vmem:[#allocation5 + $0x4e8] sm:$0xff]
    %v274 = vld [vmem:[#allocation5 + $0x4f0] sm:$0xff]
    %v275 = vld [vmem:[#allocation5 + $0x4f8] sm:$0xff]
    %v276 = vld [vmem:[#allocation5 + $0x500] sm:$0xff]
    %v277 = vld [vmem:[#allocation5 + $0x508] sm:$0xff]
    %v278 = vld [vmem:[#allocation5 + $0x510] sm:$0xff]
    %v279 = vld [vmem:[#allocation5 + $0x518] sm:$0xff]
    %v280 = vld [vmem:[#allocation5 + $0x520] sm:$0xff]
    %v281 = vld [vmem:[#allocation5 + $0x528] sm:$0xff]
    %v282 = vld [vmem:[#allocation5 + $0x530] sm:$0xff]
    %v283 = vld [vmem:[#allocation5 + $0x538] sm:$0xff]
    %v284 = vld [vmem:[#allocation5 + $0x540] sm:$0xff]
    %v285 = vld [vmem:[#allocation5 + $0x548] sm:$0xff]
    %v286 = vld [vmem:[#allocation5 + $0x550] sm:$0xff]
    %v287 = vld [vmem:[#allocation5 + $0x558] sm:$0xff]
    %v288 = vld [vmem:[#allocation5 + $0x560] sm:$0xff]
    %v289 = vld [vmem:[#allocation5 + $0x568] sm:$0xff]
    %v290 = vld [vmem:[#allocation5 + $0x570] sm:$0xff]
    %v291 = vld [vmem:[#allocation5 + $0x578] sm:$0xff]
    %v292 = vld [vmem:[#allocation5 + $0x580] sm:$0xff]
    %v293 = vld [vmem:[#allocation5 + $0x588] sm:$0xff]
    %v294 = vld [vmem:[#allocation5 + $0x590] sm:$0xff]
    %v295 = vld [vmem:[#allocation5 + $0x598] sm:$0xff]
    %v296 = vld [vmem:[#allocation5 + $0x5a0] sm:$0xff]
    %v297 = vld [vmem:[#allocation5 + $0x5a8] sm:$0xff]
    %v298 = vld [vmem:[#allocation5 + $0x5b0] sm:$0xff]
    %v299 = vld [vmem:[#allocation5 + $0x5b8] sm:$0xff]
    %v300 = vld [vmem:[#allocation5 + $0x5c0] sm:$0xff]
    %v301 = vld [vmem:[#allocation5 + $0x5c8] sm:$0xff]
    %v302 = vld [vmem:[#allocation5 + $0x5d0] sm:$0xff]
    %v303 = vld [vmem:[#allocation5 + $0x5d8] sm:$0xff]
    %v304 = vld [vmem:[#allocation5 + $0x5e0] sm:$0xff]
    %v305 = vld [vmem:[#allocation5 + $0x5e8] sm:$0xff]
    %v306 = vld [vmem:[#allocation5 + $0x5f0] sm:$0xff]
    %v307 = vld [vmem:[#allocation5 + $0x5f8] sm:$0xff]
    %v308 = vld [vmem:[#allocation5 + $0x600] sm:$0xff]
    %v309 = vld [vmem:[#allocation5 + $0x608] sm:$0xff]
    %v310 = vld [vmem:[#allocation5 + $0x610] sm:$0xff]
    %v311 = vld [vmem:[#allocation5 + $0x618] sm:$0xff]
    %v312 = vld [vmem:[#allocation5 + $0x620] sm:$0xff]
    %v313 = vld [vmem:[#allocation5 + $0x628] sm:$0xff]
    %v314 = vld [vmem:[#allocation5 + $0x630] sm:$0xff]
    %v315 = vld [vmem:[#allocation5 + $0x638] sm:$0xff]
    %v316 = vld [vmem:[#allocation5 + $0x640] sm:$0xff]
    %v317 = vld [vmem:[#allocation5 + $0x648] sm:$0xff]
    %v318 = vld [vmem:[#allocation5 + $0x650] sm:$0xff]
    %v319 = vld [vmem:[#allocation5 + $0x658] sm:$0xff]
    %v320 = vld [vmem:[#allocation5 + $0x660] sm:$0xff]
    %v321 = vld [vmem:[#allocation5 + $0x668] sm:$0xff]
    %v322 = vld [vmem:[#allocation5 + $0x670] sm:$0xff]
    %v323 = vld [vmem:[#allocation5 + $0x678] sm:$0xff]
    %v324 = vld [vmem:[#allocation5 + $0x680] sm:$0xff]
    %v325 = vld [vmem:[#allocation5 + $0x688] sm:$0xff]
    %v326 = vld [vmem:[#allocation5 + $0x690] sm:$0xff]
    %v327 = vld [vmem:[#allocation5 + $0x698] sm:$0xff]
    %v328 = vld [vmem:[#allocation5 + $0x6a0] sm:$0xff]
    %v329 = vld [vmem:[#allocation5 + $0x6a8] sm:$0xff]
    %v330 = vld [vmem:[#allocation5 + $0x6b0] sm:$0xff]
    %v331 = vld [vmem:[#allocation5 + $0x6b8] sm:$0xff]
    %v332 = vld [vmem:[#allocation5 + $0x6c0] sm:$0xff]
    %v333 = vld [vmem:[#allocation5 + $0x6c8] sm:$0xff]
    %v334 = vld [vmem:[#allocation5 + $0x6d0] sm:$0xff]
    %v335 = vld [vmem:[#allocation5 + $0x6d8] sm:$0xff]
    %v336 = vld [vmem:[#allocation5 + $0x6e0] sm:$0xff]
    %v337 = vld [vmem:[#allocation5 + $0x6e8] sm:$0xff]
    %v338 = vld [vmem:[#allocation5 + $0x6f0] sm:$0xff]
    %v339 = vld [vmem:[#allocation5 + $0x6f8] sm:$0xff]
    %v340 = vld [vmem:[%s2] sm:$0xf]
    %v342 = vlaneseq
    %v343 = vshrl.u32 %v342, 7
    %v344 = vsub.s32 0, %v343
    %v345 = vrot.slane %v340, %v344
    %v346 = vlaneseq
    %v347 = vshrl.u32 %v346, 7
    %v348 = vsub.s32 1, %v347
    %v349 = vrot.slane %v340, %v348
    %v350 = vlaneseq
    %v351 = vshrl.u32 %v350, 7
    %v352 = vsub.s32 2, %v351
    %v353 = vrot.slane %v340, %v352
    %v354 = vlaneseq
    %v355 = vshrl.u32 %v354, 7
    %v356 = vsub.s32 3, %v355
    %v357 = vrot.slane %v340, %v356
    %v366 = vunpack.c.l.b16 %v112
    %v367 = vunpack.c.h.b16 %v112
    %v368 = vunpack.c.l.b16 %v113
    %v369 = vunpack.c.h.b16 %v113
    %v370 = vunpack.c.l.b16 %v114
    %v371 = vunpack.c.h.b16 %v114
    %v372 = vunpack.c.l.b16 %v115
    %v373 = vpack.c.b16 %v366, %v366
    %v374 = vpack.c.b16 %v367, %v367
    %v375 = vpack.c.b16 %v368, %v368
    %v376 = vpack.c.b16 %v369, %v369
    %v377 = vpack.c.b16 %v370, %v370
    %v378 = vpack.c.b16 %v371, %v371
    %v379 = vpack.c.b16 %v372, %v372
    %v611 = vunpack.c.l.b16 %v116
    %v612 = vunpack.c.h.b16 %v116
    %v613 = vunpack.c.l.b16 %v117
    %v614 = vunpack.c.h.b16 %v117
    %v615 = vunpack.c.l.b16 %v118
    %v616 = vunpack.c.h.b16 %v118
    %v617 = vunpack.c.l.b16 %v119
    %v618 = vunpack.c.h.b16 %v119
    %v619 = vunpack.c.l.b16 %v120
    %v620 = vunpack.c.h.b16 %v120
    %v621 = vunpack.c.l.b16 %v121
    %v622 = vunpack.c.h.b16 %v121
    %v623 = vunpack.c.l.b16 %v122
    %v624 = vunpack.c.h.b16 %v122
    %v625 = vunpack.c.l.b16 %v123
    %v626 = vunpack.c.h.b16 %v123
    %v627 = vunpack.c.l.b16 %v124
    %v628 = vunpack.c.h.b16 %v124
    %v629 = vunpack.c.l.b16 %v125
    %v630 = vunpack.c.h.b16 %v125
    %v631 = vunpack.c.l.b16 %v126
    %v632 = vunpack.c.h.b16 %v126
    %v633 = vunpack.c.l.b16 %v127
    %v634 = vunpack.c.h.b16 %v127
    %v635 = vunpack.c.l.b16 %v128
    %v636 = vunpack.c.h.b16 %v128
    %v637 = vunpack.c.l.b16 %v129
    %v638 = vunpack.c.h.b16 %v129
    %v639 = vunpack.c.l.b16 %v130
    %v640 = vunpack.c.h.b16 %v130
    %v641 = vunpack.c.l.b16 %v131
    %v642 = vunpack.c.h.b16 %v131
    %v643 = vunpack.c.l.b16 %v132
    %v644 = vunpack.c.h.b16 %v132
    %v645 = vunpack.c.l.b16 %v133
    %v646 = vunpack.c.h.b16 %v133
    %v647 = vunpack.c.l.b16 %v134
    %v648 = vunpack.c.h.b16 %v134
    %v649 = vunpack.c.l.b16 %v135
    %v650 = vunpack.c.h.b16 %v135
    %v651 = vunpack.c.l.b16 %v136
    %v652 = vunpack.c.h.b16 %v136
    %v653 = vunpack.c.l.b16 %v137
    %v654 = vunpack.c.h.b16 %v137
    %v655 = vunpack.c.l.b16 %v138
    %v656 = vunpack.c.h.b16 %v138
    %v657 = vunpack.c.l.b16 %v139
    %v658 = vunpack.c.h.b16 %v139
    %v659 = vunpack.c.l.b16 %v140
    %v660 = vunpack.c.h.b16 %v140
    %v661 = vunpack.c.l.b16 %v141
    %v662 = vunpack.c.h.b16 %v141
    %v663 = vunpack.c.l.b16 %v142
    %v664 = vunpack.c.h.b16 %v142
    %v665 = vunpack.c.l.b16 %v143
    %v666 = vunpack.c.h.b16 %v143
    %v667 = vunpack.c.l.b16 %v144
    %v668 = vunpack.c.h.b16 %v144
    %v669 = vunpack.c.l.b16 %v145
    %v670 = vunpack.c.h.b16 %v145
    %v671 = vunpack.c.l.b16 %v146
    %v672 = vunpack.c.h.b16 %v146
    %v673 = vunpack.c.l.b16 %v147
    %v674 = vunpack.c.h.b16 %v147
    %v675 = vunpack.c.l.b16 %v148
    %v676 = vunpack.c.h.b16 %v148
    %v677 = vunpack.c.l.b16 %v149
    %v678 = vunpack.c.h.b16 %v149
    %v679 = vunpack.c.l.b16 %v150
    %v680 = vunpack.c.h.b16 %v150
    %v681 = vunpack.c.l.b16 %v151
    %v682 = vunpack.c.h.b16 %v151
    %v683 = vunpack.c.l.b16 %v152
    %v684 = vunpack.c.h.b16 %v152
    %v685 = vunpack.c.l.b16 %v153
    %v686 = vunpack.c.h.b16 %v153
    %v687 = vunpack.c.l.b16 %v154
    %v688 = vunpack.c.h.b16 %v154
    %v689 = vunpack.c.l.b16 %v155
    %v690 = vunpack.c.h.b16 %v155
    %v691 = vunpack.c.l.b16 %v156
    %v692 = vunpack.c.h.b16 %v156
    %v693 = vunpack.c.l.b16 %v157
    %v694 = vunpack.c.h.b16 %v157
    %v695 = vunpack.c.l.b16 %v158
    %v696 = vunpack.c.h.b16 %v158
    %v697 = vunpack.c.l.b16 %v159
    %v698 = vunpack.c.h.b16 %v159
    %v699 = vunpack.c.l.b16 %v160
    %v700 = vunpack.c.h.b16 %v160
    %v701 = vunpack.c.l.b16 %v161
    %v702 = vunpack.c.h.b16 %v161
    %v703 = vunpack.c.l.b16 %v162
    %v704 = vunpack.c.h.b16 %v162
    %v705 = vunpack.c.l.b16 %v163
    %v706 = vunpack.c.h.b16 %v163
    %v707 = vunpack.c.l.b16 %v164
    %v708 = vunpack.c.h.b16 %v164
    %v709 = vunpack.c.l.b16 %v165
    %v710 = vunpack.c.h.b16 %v165
    %v711 = vunpack.c.l.b16 %v166
    %v712 = vunpack.c.h.b16 %v166
    %v713 = vunpack.c.l.b16 %v167
    %v714 = vunpack.c.h.b16 %v167
    %v715 = vunpack.c.l.b16 %v168
    %v716 = vunpack.c.h.b16 %v168
    %v717 = vunpack.c.l.b16 %v169
    %v718 = vunpack.c.h.b16 %v169
    %v719 = vunpack.c.l.b16 %v170
    %v720 = vunpack.c.h.b16 %v170
    %v721 = vunpack.c.l.b16 %v171
    %v722 = vunpack.c.h.b16 %v171
    %v723 = vunpack.c.l.b16 %v172
    %v724 = vunpack.c.h.b16 %v172
    %v725 = vunpack.c.l.b16 %v173
    %v726 = vunpack.c.h.b16 %v173
    %v727 = vunpack.c.l.b16 %v174
    %v728 = vunpack.c.h.b16 %v174
    %v729 = vunpack.c.l.b16 %v175
    %v730 = vunpack.c.h.b16 %v175
    %v731 = vunpack.c.l.b16 %v176
    %v732 = vunpack.c.h.b16 %v176
    %v733 = vunpack.c.l.b16 %v177
    %v734 = vunpack.c.h.b16 %v177
    %v735 = vunpack.c.l.b16 %v178
    %v736 = vunpack.c.h.b16 %v178
    %v737 = vunpack.c.l.b16 %v179
    %v738 = vunpack.c.h.b16 %v179
    %v739 = vunpack.c.l.b16 %v180
    %v740 = vunpack.c.h.b16 %v180
    %v741 = vunpack.c.l.b16 %v181
    %v742 = vunpack.c.h.b16 %v181
    %v743 = vunpack.c.l.b16 %v182
    %v744 = vunpack.c.h.b16 %v182
    %v745 = vunpack.c.l.b16 %v183
    %v746 = vunpack.c.h.b16 %v183
    %v747 = vunpack.c.l.b16 %v184
    %v748 = vunpack.c.h.b16 %v184
    %v749 = vunpack.c.l.b16 %v185
    %v750 = vunpack.c.h.b16 %v185
    %v751 = vunpack.c.l.b16 %v186
    %v752 = vunpack.c.h.b16 %v186
    %v753 = vunpack.c.l.b16 %v187
    %v754 = vunpack.c.h.b16 %v187
    %v755 = vunpack.c.l.b16 %v188
    %v756 = vunpack.c.h.b16 %v188
    %v757 = vunpack.c.l.b16 %v189
    %v758 = vunpack.c.h.b16 %v189
    %v759 = vunpack.c.l.b16 %v190
    %v760 = vunpack.c.h.b16 %v190
    %v761 = vunpack.c.l.b16 %v191
    %v762 = vunpack.c.h.b16 %v191
    %v763 = vunpack.c.l.b16 %v192
    %v764 = vunpack.c.h.b16 %v192
    %v765 = vunpack.c.l.b16 %v193
    %v766 = vunpack.c.h.b16 %v193
    %v767 = vunpack.c.l.b16 %v194
    %v768 = vunpack.c.h.b16 %v194
    %v769 = vunpack.c.l.b16 %v195
    %v770 = vunpack.c.h.b16 %v195
    %v771 = vunpack.c.l.b16 %v196
    %v772 = vunpack.c.h.b16 %v196
    %v773 = vunpack.c.l.b16 %v197
    %v774 = vunpack.c.h.b16 %v197
    %v775 = vunpack.c.l.b16 %v198
    %v776 = vunpack.c.h.b16 %v198
    %v777 = vunpack.c.l.b16 %v199
    %v778 = vunpack.c.h.b16 %v199
    %v779 = vunpack.c.l.b16 %v200
    %v780 = vunpack.c.h.b16 %v200
    %v781 = vunpack.c.l.b16 %v201
    %v782 = vunpack.c.h.b16 %v201
    %v783 = vunpack.c.l.b16 %v202
    %v784 = vunpack.c.h.b16 %v202
    %v785 = vunpack.c.l.b16 %v203
    %v786 = vunpack.c.h.b16 %v203
    %v787 = vunpack.c.l.b16 %v204
    %v788 = vunpack.c.h.b16 %v204
    %v789 = vunpack.c.l.b16 %v205
    %v790 = vunpack.c.h.b16 %v205
    %v791 = vunpack.c.l.b16 %v206
    %v792 = vunpack.c.h.b16 %v206
    %v793 = vunpack.c.l.b16 %v207
    %v794 = vunpack.c.h.b16 %v207
    %v795 = vunpack.c.l.b16 %v208
    %v796 = vunpack.c.h.b16 %v208
    %v797 = vunpack.c.l.b16 %v209
    %v798 = vunpack.c.h.b16 %v209
    %v799 = vunpack.c.l.b16 %v210
    %v800 = vunpack.c.h.b16 %v210
    %v801 = vunpack.c.l.b16 %v211
    %v802 = vunpack.c.h.b16 %v211
    %v803 = vunpack.c.l.b16 %v212
    %v804 = vunpack.c.h.b16 %v212
    %v805 = vunpack.c.l.b16 %v213
    %v806 = vunpack.c.h.b16 %v213
    %v807 = vunpack.c.l.b16 %v214
    %v808 = vunpack.c.h.b16 %v214
    %v809 = vunpack.c.l.b16 %v215
    %v810 = vunpack.c.h.b16 %v215
    %v811 = vunpack.c.l.b16 %v216
    %v812 = vunpack.c.h.b16 %v216
    %v813 = vunpack.c.l.b16 %v217
    %v814 = vunpack.c.h.b16 %v217
    %v815 = vunpack.c.l.b16 %v218
    %v816 = vunpack.c.h.b16 %v218
    %v817 = vunpack.c.l.b16 %v219
    %v818 = vunpack.c.h.b16 %v219
    %v819 = vunpack.c.l.b16 %v220
    %v820 = vunpack.c.h.b16 %v220
    %v821 = vunpack.c.l.b16 %v221
    %v822 = vunpack.c.h.b16 %v221
    %v823 = vunpack.c.l.b16 %v222
    %v824 = vunpack.c.h.b16 %v222
    %v825 = vunpack.c.l.b16 %v223
    %v826 = vunpack.c.h.b16 %v223
    %v827 = vunpack.c.l.b16 %v224
    %v828 = vunpack.c.h.b16 %v224
    %v829 = vunpack.c.l.b16 %v225
    %v830 = vunpack.c.h.b16 %v225
    %v831 = vunpack.c.l.b16 %v226
    %v832 = vunpack.c.h.b16 %v226
    %v833 = vunpack.c.l.b16 %v227
    %v834 = vunpack.c.h.b16 %v227
    %v835 = vunpack.c.l.b16 %v228
    %v836 = vunpack.c.h.b16 %v228
    %v837 = vunpack.c.l.b16 %v229
    %v838 = vunpack.c.h.b16 %v229
    %v839 = vunpack.c.l.b16 %v230
    %v840 = vunpack.c.h.b16 %v230
    %v841 = vunpack.c.l.b16 %v231
    %v842 = vunpack.c.h.b16 %v231
    %v843 = vunpack.c.l.b16 %v232
    %v844 = vunpack.c.h.b16 %v232
    %v845 = vunpack.c.l.b16 %v233
    %v846 = vunpack.c.h.b16 %v233
    %v847 = vunpack.c.l.b16 %v234
    %v848 = vunpack.c.h.b16 %v234
    %v849 = vunpack.c.l.b16 %v235
    %v850 = vunpack.c.h.b16 %v235
    %v851 = vunpack.c.l.b16 %v236
    %v852 = vunpack.c.h.b16 %v236
    %v853 = vunpack.c.l.b16 %v237
    %v854 = vunpack.c.h.b16 %v237
    %v855 = vunpack.c.l.b16 %v238
    %v856 = vunpack.c.h.b16 %v238
    %v857 = vunpack.c.l.b16 %v239
    %v858 = vunpack.c.h.b16 %v239
    %v859 = vunpack.c.l.b16 %v240
    %v860 = vunpack.c.h.b16 %v240
    %v861 = vunpack.c.l.b16 %v241
    %v862 = vunpack.c.h.b16 %v241
    %v863 = vunpack.c.l.b16 %v242
    %v864 = vunpack.c.h.b16 %v242
    %v865 = vunpack.c.l.b16 %v243
    %v866 = vunpack.c.h.b16 %v243
    %v867 = vunpack.c.l.b16 %v244
    %v868 = vunpack.c.h.b16 %v244
    %v869 = vunpack.c.l.b16 %v245
    %v870 = vunpack.c.h.b16 %v245
    %v871 = vunpack.c.l.b16 %v246
    %v872 = vunpack.c.h.b16 %v246
    %v873 = vunpack.c.l.b16 %v247
    %v874 = vunpack.c.h.b16 %v247
    %v875 = vunpack.c.l.b16 %v248
    %v876 = vunpack.c.h.b16 %v248
    %v877 = vunpack.c.l.b16 %v249
    %v878 = vunpack.c.h.b16 %v249
    %v879 = vunpack.c.l.b16 %v250
    %v880 = vunpack.c.h.b16 %v250
    %v881 = vunpack.c.l.b16 %v251
    %v882 = vunpack.c.h.b16 %v251
    %v883 = vunpack.c.l.b16 %v252
    %v884 = vunpack.c.h.b16 %v252
    %v885 = vunpack.c.l.b16 %v253
    %v886 = vunpack.c.h.b16 %v253
    %v887 = vunpack.c.l.b16 %v254
    %v888 = vunpack.c.h.b16 %v254
    %v889 = vunpack.c.l.b16 %v255
    %v890 = vunpack.c.h.b16 %v255
    %v891 = vunpack.c.l.b16 %v256
    %v892 = vunpack.c.h.b16 %v256
    %v893 = vunpack.c.l.b16 %v257
    %v894 = vunpack.c.h.b16 %v257
    %v895 = vunpack.c.l.b16 %v258
    %v896 = vunpack.c.h.b16 %v258
    %v897 = vunpack.c.l.b16 %v259
    %v898 = vunpack.c.h.b16 %v259
    %v899 = vunpack.c.l.b16 %v260
    %v900 = vunpack.c.h.b16 %v260
    %v901 = vunpack.c.l.b16 %v261
    %v902 = vunpack.c.h.b16 %v261
    %v903 = vunpack.c.l.b16 %v262
    %v904 = vunpack.c.h.b16 %v262
    %v905 = vunpack.c.l.b16 %v263
    %v906 = vunpack.c.h.b16 %v263
    %v907 = vunpack.c.l.b16 %v264
    %v908 = vunpack.c.h.b16 %v264
    %v909 = vunpack.c.l.b16 %v265
    %v910 = vunpack.c.h.b16 %v265
    %v911 = vunpack.c.l.b16 %v266
    %v912 = vunpack.c.h.b16 %v266
    %v913 = vunpack.c.l.b16 %v267
    %v914 = vunpack.c.h.b16 %v267
    %v915 = vunpack.c.l.b16 %v268
    %v916 = vunpack.c.h.b16 %v268
    %v917 = vunpack.c.l.b16 %v269
    %v918 = vunpack.c.h.b16 %v269
    %v919 = vunpack.c.l.b16 %v270
    %v920 = vunpack.c.h.b16 %v270
    %v921 = vunpack.c.l.b16 %v271
    %v922 = vunpack.c.h.b16 %v271
    %v923 = vunpack.c.l.b16 %v272
    %v924 = vunpack.c.h.b16 %v272
    %v925 = vunpack.c.l.b16 %v273
    %v926 = vunpack.c.h.b16 %v273
    %v927 = vunpack.c.l.b16 %v274
    %v928 = vunpack.c.h.b16 %v274
    %v929 = vunpack.c.l.b16 %v275
    %v930 = vunpack.c.h.b16 %v275
    %v931 = vunpack.c.l.b16 %v276
    %v932 = vunpack.c.h.b16 %v276
    %v933 = vunpack.c.l.b16 %v277
    %v934 = vunpack.c.h.b16 %v277
    %v935 = vunpack.c.l.b16 %v278
    %v936 = vunpack.c.h.b16 %v278
    %v937 = vunpack.c.l.b16 %v279
    %v938 = vunpack.c.h.b16 %v279
    %v939 = vunpack.c.l.b16 %v280
    %v940 = vunpack.c.h.b16 %v280
    %v941 = vunpack.c.l.b16 %v281
    %v942 = vunpack.c.h.b16 %v281
    %v943 = vunpack.c.l.b16 %v282
    %v944 = vunpack.c.h.b16 %v282
    %v945 = vunpack.c.l.b16 %v283
    %v946 = vunpack.c.h.b16 %v283
    %v947 = vunpack.c.l.b16 %v284
    %v948 = vunpack.c.h.b16 %v284
    %v949 = vunpack.c.l.b16 %v285
    %v950 = vunpack.c.h.b16 %v285
    %v951 = vunpack.c.l.b16 %v286
    %v952 = vunpack.c.h.b16 %v286
    %v953 = vunpack.c.l.b16 %v287
    %v954 = vunpack.c.h.b16 %v287
    %v955 = vunpack.c.l.b16 %v288
    %v956 = vunpack.c.h.b16 %v288
    %v957 = vunpack.c.l.b16 %v289
    %v958 = vunpack.c.h.b16 %v289
    %v959 = vunpack.c.l.b16 %v290
    %v960 = vunpack.c.h.b16 %v290
    %v961 = vunpack.c.l.b16 %v291
    %v962 = vunpack.c.h.b16 %v291
    %v963 = vunpack.c.l.b16 %v292
    %v964 = vunpack.c.h.b16 %v292
    %v965 = vunpack.c.l.b16 %v293
    %v966 = vunpack.c.h.b16 %v293
    %v967 = vunpack.c.l.b16 %v294
    %v968 = vunpack.c.h.b16 %v294
    %v969 = vunpack.c.l.b16 %v295
    %v970 = vunpack.c.h.b16 %v295
    %v971 = vunpack.c.l.b16 %v296
    %v972 = vunpack.c.h.b16 %v296
    %v973 = vunpack.c.l.b16 %v297
    %v974 = vunpack.c.h.b16 %v297
    %v975 = vunpack.c.l.b16 %v298
    %v976 = vunpack.c.h.b16 %v298
    %v977 = vunpack.c.l.b16 %v299
    %v978 = vunpack.c.h.b16 %v299
    %v979 = vunpack.c.l.b16 %v300
    %v980 = vunpack.c.h.b16 %v300
    %v981 = vunpack.c.l.b16 %v301
    %v982 = vunpack.c.h.b16 %v301
    %v983 = vunpack.c.l.b16 %v302
    %v984 = vunpack.c.h.b16 %v302
    %v985 = vunpack.c.l.b16 %v303
    %v986 = vunpack.c.h.b16 %v303
    %v987 = vunpack.c.l.b16 %v304
    %v988 = vunpack.c.h.b16 %v304
    %v989 = vunpack.c.l.b16 %v305
    %v990 = vunpack.c.h.b16 %v305
    %v991 = vunpack.c.l.b16 %v306
    %v992 = vunpack.c.h.b16 %v306
    %v993 = vunpack.c.l.b16 %v307
    %v994 = vunpack.c.h.b16 %v307
    %v995 = vunpack.c.l.b16 %v308
    %v996 = vunpack.c.h.b16 %v308
    %v997 = vunpack.c.l.b16 %v309
    %v998 = vunpack.c.h.b16 %v309
    %v999 = vunpack.c.l.b16 %v310
    %v1000 = vunpack.c.h.b16 %v310
    %v1001 = vunpack.c.l.b16 %v311
    %v1002 = vunpack.c.h.b16 %v311
    %v1003 = vunpack.c.l.b16 %v312
    %v1004 = vunpack.c.h.b16 %v312
    %v1005 = vunpack.c.l.b16 %v313
    %v1006 = vunpack.c.h.b16 %v313
    %v1007 = vunpack.c.l.b16 %v314
    %v1008 = vunpack.c.h.b16 %v314
    %v1009 = vunpack.c.l.b16 %v315
    %v1010 = vunpack.c.h.b16 %v315
    %v1011 = vunpack.c.l.b16 %v316
    %v1012 = vunpack.c.h.b16 %v316
    %v1013 = vunpack.c.l.b16 %v317
    %v1014 = vunpack.c.h.b16 %v317
    %v1015 = vunpack.c.l.b16 %v318
    %v1016 = vunpack.c.h.b16 %v318
    %v1017 = vunpack.c.l.b16 %v319
    %v1018 = vunpack.c.h.b16 %v319
    %v1019 = vunpack.c.l.b16 %v320
    %v1020 = vunpack.c.h.b16 %v320
    %v1021 = vunpack.c.l.b16 %v321
    %v1022 = vunpack.c.h.b16 %v321
    %v1023 = vunpack.c.l.b16 %v322
    %v1024 = vunpack.c.h.b16 %v322
    %v1025 = vunpack.c.l.b16 %v323
    %v1026 = vunpack.c.h.b16 %v323
    %v1027 = vunpack.c.l.b16 %v324
    %v1028 = vunpack.c.h.b16 %v324
    %v1029 = vunpack.c.l.b16 %v325
    %v1030 = vunpack.c.h.b16 %v325
    %v1031 = vunpack.c.l.b16 %v326
    %v1032 = vunpack.c.h.b16 %v326
    %v1033 = vunpack.c.l.b16 %v327
    %v1034 = vunpack.c.h.b16 %v327
    %v1035 = vunpack.c.l.b16 %v328
    %v1036 = vunpack.c.h.b16 %v328
    %v1037 = vunpack.c.l.b16 %v329
    %v1038 = vunpack.c.h.b16 %v329
    %v1039 = vunpack.c.l.b16 %v330
    %v1040 = vunpack.c.h.b16 %v330
    %v1041 = vunpack.c.l.b16 %v331
    %v1042 = vunpack.c.h.b16 %v331
    %v1043 = vunpack.c.l.b16 %v332
    %v1044 = vunpack.c.h.b16 %v332
    %v1045 = vunpack.c.l.b16 %v333
    %v1046 = vunpack.c.h.b16 %v333
    %v1047 = vunpack.c.l.b16 %v334
    %v1048 = vunpack.c.h.b16 %v334
    %v1049 = vunpack.c.l.b16 %v335
    %v1050 = vunpack.c.h.b16 %v335
    %v1051 = vunpack.c.l.b16 %v336
    %v1052 = vunpack.c.h.b16 %v336
    %v1053 = vunpack.c.l.b16 %v337
    %v1054 = vunpack.c.h.b16 %v337
    %v1055 = vunpack.c.l.b16 %v338
    %v1056 = vunpack.c.h.b16 %v338
    %v1057 = vunpack.c.l.b16 %v339
    %v1058 = vunpack.c.h.b16 %v339
    %v1059 = vpack.c.b16 %v615, %v611
    %v1060 = vpack.c.b16 %v616, %v612
    %v1061 = vpack.c.b16 %v617, %v613
    %v1062 = vpack.c.b16 %v618, %v614
    %v1063 = vpack.c.b16 %v623, %v619
    %v1064 = vpack.c.b16 %v624, %v620
    %v1065 = vpack.c.b16 %v625, %v621
    %v1066 = vpack.c.b16 %v626, %v622
    %v1067 = vpack.c.b16 %v631, %v627
    %v1068 = vpack.c.b16 %v632, %v628
    %v1069 = vpack.c.b16 %v633, %v629
    %v1070 = vpack.c.b16 %v634, %v630
    %v1071 = vpack.c.b16 %v639, %v635
    %v1072 = vpack.c.b16 %v640, %v636
    %v1073 = vpack.c.b16 %v641, %v637
    %v1074 = vpack.c.b16 %v642, %v638
    %v1075 = vpack.c.b16 %v647, %v643
    %v1076 = vpack.c.b16 %v648, %v644
    %v1077 = vpack.c.b16 %v649, %v645
    %v1078 = vpack.c.b16 %v650, %v646
    %v1079 = vpack.c.b16 %v655, %v651
    %v1080 = vpack.c.b16 %v656, %v652
    %v1081 = vpack.c.b16 %v657, %v653
    %v1082 = vpack.c.b16 %v658, %v654
    %v1083 = vpack.c.b16 %v663, %v659
    %v1084 = vpack.c.b16 %v664, %v660
    %v1085 = vpack.c.b16 %v665, %v661
    %v1086 = vpack.c.b16 %v666, %v662
    %v1087 = vpack.c.b16 %v671, %v667
    %v1088 = vpack.c.b16 %v672, %v668
    %v1089 = vpack.c.b16 %v673, %v669
    %v1090 = vpack.c.b16 %v674, %v670
    %v1091 = vpack.c.b16 %v679, %v675
    %v1092 = vpack.c.b16 %v680, %v676
    %v1093 = vpack.c.b16 %v681, %v677
    %v1094 = vpack.c.b16 %v682, %v678
    %v1095 = vpack.c.b16 %v687, %v683
    %v1096 = vpack.c.b16 %v688, %v684
    %v1097 = vpack.c.b16 %v689, %v685
    %v1098 = vpack.c.b16 %v690, %v686
    %v1099 = vpack.c.b16 %v695, %v691
    %v1100 = vpack.c.b16 %v696, %v692
    %v1101 = vpack.c.b16 %v697, %v693
    %v1102 = vpack.c.b16 %v698, %v694
    %v1103 = vpack.c.b16 %v703, %v699
    %v1104 = vpack.c.b16 %v704, %v700
    %v1105 = vpack.c.b16 %v705, %v701
    %v1106 = vpack.c.b16 %v706, %v702
    %v1107 = vpack.c.b16 %v711, %v707
    %v1108 = vpack.c.b16 %v712, %v708
    %v1109 = vpack.c.b16 %v713, %v709
    %v1110 = vpack.c.b16 %v714, %v710
    %v1111 = vpack.c.b16 %v719, %v715
    %v1112 = vpack.c.b16 %v720, %v716
    %v1113 = vpack.c.b16 %v721, %v717
    %v1114 = vpack.c.b16 %v722, %v718
    %v1115 = vpack.c.b16 %v727, %v723
    %v1116 = vpack.c.b16 %v728, %v724
    %v1117 = vpack.c.b16 %v729, %v725
    %v1118 = vpack.c.b16 %v730, %v726
    %v1119 = vpack.c.b16 %v735, %v731
    %v1120 = vpack.c.b16 %v736, %v732
    %v1121 = vpack.c.b16 %v737, %v733
    %v1122 = vpack.c.b16 %v738, %v734
    %v1123 = vpack.c.b16 %v743, %v739
    %v1124 = vpack.c.b16 %v744, %v740
    %v1125 = vpack.c.b16 %v745, %v741
    %v1126 = vpack.c.b16 %v746, %v742
    %v1127 = vpack.c.b16 %v751, %v747
    %v1128 = vpack.c.b16 %v752, %v748
    %v1129 = vpack.c.b16 %v753, %v749
    %v1130 = vpack.c.b16 %v754, %v750
    %v1131 = vpack.c.b16 %v759, %v755
    %v1132 = vpack.c.b16 %v760, %v756
    %v1133 = vpack.c.b16 %v761, %v757
    %v1134 = vpack.c.b16 %v762, %v758
    %v1135 = vpack.c.b16 %v767, %v763
    %v1136 = vpack.c.b16 %v768, %v764
    %v1137 = vpack.c.b16 %v769, %v765
    %v1138 = vpack.c.b16 %v770, %v766
    %v1139 = vpack.c.b16 %v775, %v771
    %v1140 = vpack.c.b16 %v776, %v772
    %v1141 = vpack.c.b16 %v777, %v773
    %v1142 = vpack.c.b16 %v778, %v774
    %v1143 = vpack.c.b16 %v783, %v779
    %v1144 = vpack.c.b16 %v784, %v780
    %v1145 = vpack.c.b16 %v785, %v781
    %v1146 = vpack.c.b16 %v786, %v782
    %v1147 = vpack.c.b16 %v791, %v787
    %v1148 = vpack.c.b16 %v792, %v788
    %v1149 = vpack.c.b16 %v793, %v789
    %v1150 = vpack.c.b16 %v794, %v790
    %v1151 = vpack.c.b16 %v799, %v795
    %v1152 = vpack.c.b16 %v800, %v796
    %v1153 = vpack.c.b16 %v801, %v797
    %v1154 = vpack.c.b16 %v802, %v798
    %v1155 = vpack.c.b16 %v807, %v803
    %v1156 = vpack.c.b16 %v808, %v804
    %v1157 = vpack.c.b16 %v809, %v805
    %v1158 = vpack.c.b16 %v810, %v806
    %v1159 = vpack.c.b16 %v815, %v811
    %v1160 = vpack.c.b16 %v816, %v812
    %v1161 = vpack.c.b16 %v817, %v813
    %v1162 = vpack.c.b16 %v818, %v814
    %v1163 = vpack.c.b16 %v823, %v819
    %v1164 = vpack.c.b16 %v824, %v820
    %v1165 = vpack.c.b16 %v825, %v821
    %v1166 = vpack.c.b16 %v826, %v822
    %v1167 = vpack.c.b16 %v831, %v827
    %v1168 = vpack.c.b16 %v832, %v828
    %v1169 = vpack.c.b16 %v833, %v829
    %v1170 = vpack.c.b16 %v834, %v830
    %v1171 = vpack.c.b16 %v839, %v835
    %v1172 = vpack.c.b16 %v840, %v836
    %v1173 = vpack.c.b16 %v841, %v837
    %v1174 = vpack.c.b16 %v842, %v838
    %v1175 = vpack.c.b16 %v847, %v843
    %v1176 = vpack.c.b16 %v848, %v844
    %v1177 = vpack.c.b16 %v849, %v845
    %v1178 = vpack.c.b16 %v850, %v846
    %v1179 = vpack.c.b16 %v855, %v851
    %v1180 = vpack.c.b16 %v856, %v852
    %v1181 = vpack.c.b16 %v857, %v853
    %v1182 = vpack.c.b16 %v858, %v854
    %v1183 = vpack.c.b16 %v863, %v859
    %v1184 = vpack.c.b16 %v864, %v860
    %v1185 = vpack.c.b16 %v865, %v861
    %v1186 = vpack.c.b16 %v866, %v862
    %v1187 = vpack.c.b16 %v871, %v867
    %v1188 = vpack.c.b16 %v872, %v868
    %v1189 = vpack.c.b16 %v873, %v869
    %v1190 = vpack.c.b16 %v874, %v870
    %v1191 = vpack.c.b16 %v879, %v875
    %v1192 = vpack.c.b16 %v880, %v876
    %v1193 = vpack.c.b16 %v881, %v877
    %v1194 = vpack.c.b16 %v882, %v878
    %v1195 = vpack.c.b16 %v887, %v883
    %v1196 = vpack.c.b16 %v888, %v884
    %v1197 = vpack.c.b16 %v889, %v885
    %v1198 = vpack.c.b16 %v890, %v886
    %v1199 = vpack.c.b16 %v895, %v891
    %v1200 = vpack.c.b16 %v896, %v892
    %v1201 = vpack.c.b16 %v897, %v893
    %v1202 = vpack.c.b16 %v898, %v894
    %v1203 = vpack.c.b16 %v903, %v899
    %v1204 = vpack.c.b16 %v904, %v900
    %v1205 = vpack.c.b16 %v905, %v901
    %v1206 = vpack.c.b16 %v906, %v902
    %v1207 = vpack.c.b16 %v911, %v907
    %v1208 = vpack.c.b16 %v912, %v908
    %v1209 = vpack.c.b16 %v913, %v909
    %v1210 = vpack.c.b16 %v914, %v910
    %v1211 = vpack.c.b16 %v919, %v915
    %v1212 = vpack.c.b16 %v920, %v916
    %v1213 = vpack.c.b16 %v921, %v917
    %v1214 = vpack.c.b16 %v922, %v918
    %v1215 = vpack.c.b16 %v927, %v923
    %v1216 = vpack.c.b16 %v928, %v924
    %v1217 = vpack.c.b16 %v929, %v925
    %v1218 = vpack.c.b16 %v930, %v926
    %v1219 = vpack.c.b16 %v935, %v931
    %v1220 = vpack.c.b16 %v936, %v932
    %v1221 = vpack.c.b16 %v937, %v933
    %v1222 = vpack.c.b16 %v938, %v934
    %v1223 = vpack.c.b16 %v943, %v939
    %v1224 = vpack.c.b16 %v944, %v940
    %v1225 = vpack.c.b16 %v945, %v941
    %v1226 = vpack.c.b16 %v946, %v942
    %v1227 = vpack.c.b16 %v951, %v947
    %v1228 = vpack.c.b16 %v952, %v948
    %v1229 = vpack.c.b16 %v953, %v949
    %v1230 = vpack.c.b16 %v954, %v950
    %v1231 = vpack.c.b16 %v959, %v955
    %v1232 = vpack.c.b16 %v960, %v956
    %v1233 = vpack.c.b16 %v961, %v957
    %v1234 = vpack.c.b16 %v962, %v958
    %v1235 = vpack.c.b16 %v967, %v963
    %v1236 = vpack.c.b16 %v968, %v964
    %v1237 = vpack.c.b16 %v969, %v965
    %v1238 = vpack.c.b16 %v970, %v966
    %v1239 = vpack.c.b16 %v975, %v971
    %v1240 = vpack.c.b16 %v976, %v972
    %v1241 = vpack.c.b16 %v977, %v973
    %v1242 = vpack.c.b16 %v978, %v974
    %v1243 = vpack.c.b16 %v983, %v979
    %v1244 = vpack.c.b16 %v984, %v980
    %v1245 = vpack.c.b16 %v985, %v981
    %v1246 = vpack.c.b16 %v986, %v982
    %v1247 = vpack.c.b16 %v991, %v987
    %v1248 = vpack.c.b16 %v992, %v988
    %v1249 = vpack.c.b16 %v993, %v989
    %v1250 = vpack.c.b16 %v994, %v990
    %v1251 = vpack.c.b16 %v999, %v995
    %v1252 = vpack.c.b16 %v1000, %v996
    %v1253 = vpack.c.b16 %v1001, %v997
    %v1254 = vpack.c.b16 %v1002, %v998
    %v1255 = vpack.c.b16 %v1007, %v1003
    %v1256 = vpack.c.b16 %v1008, %v1004
    %v1257 = vpack.c.b16 %v1009, %v1005
    %v1258 = vpack.c.b16 %v1010, %v1006
    %v1259 = vpack.c.b16 %v1015, %v1011
    %v1260 = vpack.c.b16 %v1016, %v1012
    %v1261 = vpack.c.b16 %v1017, %v1013
    %v1262 = vpack.c.b16 %v1018, %v1014
    %v1263 = vpack.c.b16 %v1023, %v1019
    %v1264 = vpack.c.b16 %v1024, %v1020
    %v1265 = vpack.c.b16 %v1025, %v1021
    %v1266 = vpack.c.b16 %v1026, %v1022
    %v1267 = vpack.c.b16 %v1031, %v1027
    %v1268 = vpack.c.b16 %v1032, %v1028
    %v1269 = vpack.c.b16 %v1033, %v1029
    %v1270 = vpack.c.b16 %v1034, %v1030
    %v1271 = vpack.c.b16 %v1039, %v1035
    %v1272 = vpack.c.b16 %v1040, %v1036
    %v1273 = vpack.c.b16 %v1041, %v1037
    %v1274 = vpack.c.b16 %v1042, %v1038
    %v1275 = vpack.c.b16 %v1047, %v1043
    %v1276 = vpack.c.b16 %v1048, %v1044
    %v1277 = vpack.c.b16 %v1049, %v1045
    %v1278 = vpack.c.b16 %v1050, %v1046
    %v1279 = vpack.c.b16 %v1055, %v1051
    %v1280 = vpack.c.b16 %v1056, %v1052
    %v1281 = vpack.c.b16 %v1057, %v1053
    %v1282 = vpack.c.b16 %v1058, %v1054
    %1507 = vmatprep.subr.bf16.mxu0 %v1060
    %1508 = vmatpush1.bf16.msra.mxu0 %v1059
    %1509 = vmatprep.subr.bf16.mxu0 %v1064
    %1510 = vmatpush1.bf16.msra.mxu0 %v1063
    %1511 = vmatprep.subr.bf16.mxu0 %v1068
    %1512 = vmatpush1.bf16.msra.mxu0 %v1067
    %1513 = vmatprep.subr.bf16.mxu0 %v1072
    %1514 = vmatpush1.bf16.msra.mxu0 %v1071
    %1515 = vmatprep.subr.bf16.mxu0 %v1076
    %1516 = vmatpush1.bf16.msra.mxu0 %v1075
    %1517 = vmatprep.subr.bf16.mxu0 %v1080
    %1518 = vmatpush1.bf16.msra.mxu0 %v1079
    %1519 = vmatprep.subr.bf16.mxu0 %v1084
    %1520 = vmatpush1.bf16.msra.mxu0 %v1083
    %1521 = vmatprep.subr.bf16.mxu0 %v1088
    %1522 = vmatpush1.bf16.msra.mxu0 %v1087
    %1523 = vmatprep.subr.bf16.mxu0 %v1092
    %1524 = vmatpush1.bf16.msra.mxu0 %v1091
    %1525 = vmatprep.subr.bf16.mxu0 %v1096
    %1526 = vmatpush1.bf16.msra.mxu0 %v1095
    %1527 = vmatprep.subr.bf16.mxu0 %v1100
    %1528 = vmatpush1.bf16.msra.mxu0 %v1099
    %1529 = vmatprep.subr.bf16.mxu0 %v1104
    %1530 = vmatpush1.bf16.msra.mxu0 %v1103
    %1531 = vmatprep.subr.bf16.mxu0 %v1108
    %1532 = vmatpush1.bf16.msra.mxu0 %v1107
    %1533 = vmatprep.subr.bf16.mxu0 %v1112
    %1534 = vmatpush1.bf16.msra.mxu0 %v1111
    %1535 = vmatprep.subr.bf16.mxu0 %v1116
    %1536 = vmatpush1.bf16.msra.mxu0 %v1115
    %1537 = vmatprep.subr.bf16.mxu0 %v1120
    %1538 = vmatpush1.bf16.msra.mxu0 %v1119
    %1539 = vmatprep.mubr.bf16.mxu0 %v374
    %1540 = vmatmul.mubr.bf16.gmra.mrb[0].mxu0 %v373
    %v1541 = vpop.f32.mrb[0].mxu0
    %v1542 = vadd.f32 %v345, %v1541
    %v1543 = vpop.f32.mrb[0].mxu0
    %v1544 = vadd.f32 %v349, %v1543
    %v1545 = vpop.f32.mrb[0].mxu0
    %v1546 = vpop.f32.mrb[0].mxu0
    %1547 = vdwg.mxu0
    %1548 = vmatprep.subr.bf16.mxu0 %v1124
    %1549 = vmatpush1.bf16.msra.mxu0 %v1123
    %1550 = vmatprep.subr.bf16.mxu0 %v1128
    %1551 = vmatpush1.bf16.msra.mxu0 %v1127
    %1552 = vmatprep.subr.bf16.mxu0 %v1132
    %1553 = vmatpush1.bf16.msra.mxu0 %v1131
    %1554 = vmatprep.subr.bf16.mxu0 %v1136
    %1555 = vmatpush1.bf16.msra.mxu0 %v1135
    %1556 = vmatprep.subr.bf16.mxu0 %v1140
    %1557 = vmatpush1.bf16.msra.mxu0 %v1139
    %1558 = vmatprep.subr.bf16.mxu0 %v1144
    %1559 = vmatpush1.bf16.msra.mxu0 %v1143
    %1560 = vmatprep.subr.bf16.mxu0 %v1148
    %1561 = vmatpush1.bf16.msra.mxu0 %v1147
    %1562 = vmatprep.subr.bf16.mxu0 %v1152
    %1563 = vmatpush1.bf16.msra.mxu0 %v1151
    %1564 = vmatprep.subr.bf16.mxu0 %v1156
    %1565 = vmatpush1.bf16.msra.mxu0 %v1155
    %1566 = vmatprep.subr.bf16.mxu0 %v1160
    %1567 = vmatpush1.bf16.msra.mxu0 %v1159
    %1568 = vmatprep.subr.bf16.mxu0 %v1164
    %1569 = vmatpush1.bf16.msra.mxu0 %v1163
    %1570 = vmatprep.subr.bf16.mxu0 %v1168
    %1571 = vmatpush1.bf16.msra.mxu0 %v1167
    %1572 = vmatprep.subr.bf16.mxu0 %v1172
    %1573 = vmatpush1.bf16.msra.mxu0 %v1171
    %1574 = vmatprep.subr.bf16.mxu0 %v1176
    %1575 = vmatpush1.bf16.msra.mxu0 %v1175
    %1576 = vmatprep.subr.bf16.mxu0 %v1180
    %1577 = vmatpush1.bf16.msra.mxu0 %v1179
    %1578 = vmatprep.subr.bf16.mxu0 %v1184
    %1579 = vmatpush1.bf16.msra.mxu0 %v1183
    %1580 = vmatprep.mubr.bf16.mxu0 %v376
    %1581 = vmatmul.mubr.bf16.gmra.mrb[0].mxu0 %v375
    %v1582 = vpop.f32.mrb[0].mxu0
    %v1583 = vadd.f32 %v1542, %v1582
    %v1584 = vpop.f32.mrb[0].mxu0
    %v1585 = vadd.f32 %v1544, %v1584
    %v1586 = vpop.f32.mrb[0].mxu0
    %v1587 = vpop.f32.mrb[0].mxu0
    %1588 = vdwg.mxu0
    %1589 = vmatprep.subr.bf16.mxu0 %v1188
    %1590 = vmatpush1.bf16.msra.mxu0 %v1187
    %1591 = vmatprep.subr.bf16.mxu0 %v1192
    %1592 = vmatpush1.bf16.msra.mxu0 %v1191
    %1593 = vmatprep.subr.bf16.mxu0 %v1196
    %1594 = vmatpush1.bf16.msra.mxu0 %v1195
    %1595 = vmatprep.subr.bf16.mxu0 %v1200
    %1596 = vmatpush1.bf16.msra.mxu0 %v1199
    %1597 = vmatprep.subr.bf16.mxu0 %v1204
    %1598 = vmatpush1.bf16.msra.mxu0 %v1203
    %1599 = vmatprep.subr.bf16.mxu0 %v1208
    %1600 = vmatpush1.bf16.msra.mxu0 %v1207
    %1601 = vmatprep.subr.bf16.mxu0 %v1212
    %1602 = vmatpush1.bf16.msra.mxu0 %v1211
    %1603 = vmatprep.subr.bf16.mxu0 %v1216
    %1604 = vmatpush1.bf16.msra.mxu0 %v1215
    %1605 = vmatprep.subr.bf16.mxu0 %v1220
    %1606 = vmatpush1.bf16.msra.mxu0 %v1219
    %1607 = vmatprep.subr.bf16.mxu0 %v1224
    %1608 = vmatpush1.bf16.msra.mxu0 %v1223
    %1609 = vmatprep.subr.bf16.mxu0 %v1228
    %1610 = vmatpush1.bf16.msra.mxu0 %v1227
    %1611 = vmatprep.subr.bf16.mxu0 %v1232
    %1612 = vmatpush1.bf16.msra.mxu0 %v1231
    %1613 = vmatprep.subr.bf16.mxu0 %v1236
    %1614 = vmatpush1.bf16.msra.mxu0 %v1235
    %1615 = vmatprep.subr.bf16.mxu0 %v1240
    %1616 = vmatpush1.bf16.msra.mxu0 %v1239
    %1617 = vmatprep.subr.bf16.mxu0 %v1244
    %1618 = vmatpush1.bf16.msra.mxu0 %v1243
    %1619 = vmatprep.subr.bf16.mxu0 %v1248
    %1620 = vmatpush1.bf16.msra.mxu0 %v1247
    %1621 = vmatprep.mubr.bf16.mxu0 %v378
    %1622 = vmatmul.mubr.bf16.gmra.mrb[0].mxu0 %v377
    %v1623 = vpop.f32.mrb[0].mxu0
    %v1624 = vadd.f32 %v1583, %v1623
    %v1625 = vpop.f32.mrb[0].mxu0
    %v1626 = vadd.f32 %v1585, %v1625
    %v1627 = vpop.f32.mrb[0].mxu0
    %v1628 = vpop.f32.mrb[0].mxu0
    %1629 = vdwg.mxu0
    %1630 = vmatprep.subr.bf16.mxu0 %v1252
    %1631 = vmatpush1.bf16.msra.mxu0 %v1251
    %1632 = vmatprep.subr.bf16.mxu0 %v1256
    %1633 = vmatpush1.bf16.msra.mxu0 %v1255
    %1634 = vmatprep.subr.bf16.mxu0 %v1260
    %1635 = vmatpush1.bf16.msra.mxu0 %v1259
    %1636 = vmatprep.subr.bf16.mxu0 %v1264
    %1637 = vmatpush1.bf16.msra.mxu0 %v1263
    %1638 = vmatprep.subr.bf16.mxu0 %v1268
    %1639 = vmatpush1.bf16.msra.mxu0 %v1267
    %1640 = vmatprep.subr.bf16.mxu0 %v1272
    %1641 = vmatpush1.bf16.msra.mxu0 %v1271
    %1642 = vmatprep.subr.bf16.mxu0 %v1276
    %1643 = vmatpush1.bf16.msra.mxu0 %v1275
    %1644 = vmatprep.subr.bf16.mxu0 %v1280
    %1645 = vmatpush1.bf16.msra.mxu0 %v1279
    %1646 = vmatprep.subr.bf16.mxu0 0
    %1647 = vmatpush1.bf16.msra.mxu0 0
    %1648 = vmatprep.subr.bf16.mxu0 0
    %1649 = vmatpush1.bf16.msra.mxu0 0
    %1650 = vmatprep.subr.bf16.mxu0 0
    %1651 = vmatpush1.bf16.msra.mxu0 0
    %1652 = vmatprep.subr.bf16.mxu0 0
    %1653 = vmatpush1.bf16.msra.mxu0 0
    %1654 = vmatprep.subr.bf16.mxu0 0
    %1655 = vmatpush1.bf16.msra.mxu0 0
    %1656 = vmatprep.subr.bf16.mxu0 0
    %1657 = vmatpush1.bf16.msra.mxu0 0
    %1658 = vmatprep.subr.bf16.mxu0 0
    %1659 = vmatpush1.bf16.msra.mxu0 0
    %1660 = vmatprep.subr.bf16.mxu0 0
    %1661 = vmatpush1.bf16.msra.mxu0 0
    %1662 = vmatprep.mubr.bf16.mxu0 0
    %1663 = vmatmul.mubr.bf16.gmra.mrb[0].mxu0 %v379
    %v1664 = vpop.f32.mrb[0].mxu0
    %v1665 = vadd.f32 %v1624, %v1664
    %v1666 = vpop.f32.mrb[0].mxu0
    %v1667 = vadd.f32 %v1626, %v1666
    %v1668 = vpop.f32.mrb[0].mxu0
    %v1669 = vpop.f32.mrb[0].mxu0
    %1670 = vdwg.mxu0
    %1671 = vmatprep.subr.bf16.mxu0 %v1062
    %1672 = vmatpush1.bf16.msra.mxu0 %v1061
    %1673 = vmatprep.subr.bf16.mxu0 %v1066
    %1674 = vmatpush1.bf16.msra.mxu0 %v1065
    %1675 = vmatprep.subr.bf16.mxu0 %v1070
    %1676 = vmatpush1.bf16.msra.mxu0 %v1069
    %1677 = vmatprep.subr.bf16.mxu0 %v1074
    %1678 = vmatpush1.bf16.msra.mxu0 %v1073
    %1679 = vmatprep.subr.bf16.mxu0 %v1078
    %1680 = vmatpush1.bf16.msra.mxu0 %v1077
    %1681 = vmatprep.subr.bf16.mxu0 %v1082
    %1682 = vmatpush1.bf16.msra.mxu0 %v1081
    %1683 = vmatprep.subr.bf16.mxu0 %v1086
    %1684 = vmatpush1.bf16.msra.mxu0 %v1085
    %1685 = vmatprep.subr.bf16.mxu0 %v1090
    %1686 = vmatpush1.bf16.msra.mxu0 %v1089
    %1687 = vmatprep.subr.bf16.mxu0 %v1094
    %1688 = vmatpush1.bf16.msra.mxu0 %v1093
    %1689 = vmatprep.subr.bf16.mxu0 %v1098
    %1690 = vmatpush1.bf16.msra.mxu0 %v1097
    %1691 = vmatprep.subr.bf16.mxu0 %v1102
    %1692 = vmatpush1.bf16.msra.mxu0 %v1101
    %1693 = vmatprep.subr.bf16.mxu0 %v1106
    %1694 = vmatpush1.bf16.msra.mxu0 %v1105
    %1695 = vmatprep.subr.bf16.mxu0 %v1110
    %1696 = vmatpush1.bf16.msra.mxu0 %v1109
    %1697 = vmatprep.subr.bf16.mxu0 %v1114
    %1698 = vmatpush1.bf16.msra.mxu0 %v1113
    %1699 = vmatprep.subr.bf16.mxu0 %v1118
    %1700 = vmatpush1.bf16.msra.mxu0 %v1117
    %1701 = vmatprep.subr.bf16.mxu0 %v1122
    %1702 = vmatpush1.bf16.msra.mxu0 %v1121
    %1703 = vmatprep.mubr.bf16.mxu0 %v374
    %1704 = vmatmul.mubr.bf16.gmra.mrb[0].mxu0 %v373
    %v1705 = vpop.f32.mrb[0].mxu0
    %v1706 = vadd.f32 %v353, %v1705
    %v1707 = vpop.f32.mrb[0].mxu0
    %v1708 = vadd.f32 %v357, %v1707
    %v1709 = vpop.f32.mrb[0].mxu0
    %v1710 = vpop.f32.mrb[0].mxu0
    %1711 = vdwg.mxu0
    %1712 = vmatprep.subr.bf16.mxu0 %v1126
    %1713 = vmatpush1.bf16.msra.mxu0 %v1125
    %1714 = vmatprep.subr.bf16.mxu0 %v1130
    %1715 = vmatpush1.bf16.msra.mxu0 %v1129
    %1716 = vmatprep.subr.bf16.mxu0 %v1134
    %1717 = vmatpush1.bf16.msra.mxu0 %v1133
    %1718 = vmatprep.subr.bf16.mxu0 %v1138
    %1719 = vmatpush1.bf16.msra.mxu0 %v1137
    %1720 = vmatprep.subr.bf16.mxu0 %v1142
    %1721 = vmatpush1.bf16.msra.mxu0 %v1141
    %1722 = vmatprep.subr.bf16.mxu0 %v1146
    %1723 = vmatpush1.bf16.msra.mxu0 %v1145
    %1724 = vmatprep.subr.bf16.mxu0 %v1150
    %1725 = vmatpush1.bf16.msra.mxu0 %v1149
    %1726 = vmatprep.subr.bf16.mxu0 %v1154
    %1727 = vmatpush1.bf16.msra.mxu0 %v1153
    %1728 = vmatprep.subr.bf16.mxu0 %v1158
    %1729 = vmatpush1.bf16.msra.mxu0 %v1157
    %1730 = vmatprep.subr.bf16.mxu0 %v1162
    %1731 = vmatpush1.bf16.msra.mxu0 %v1161
    %1732 = vmatprep.subr.bf16.mxu0 %v1166
    %1733 = vmatpush1.bf16.msra.mxu0 %v1165
    %1734 = vmatprep.subr.bf16.mxu0 %v1170
    %1735 = vmatpush1.bf16.msra.mxu0 %v1169
    %1736 = vmatprep.subr.bf16.mxu0 %v1174
    %1737 = vmatpush1.bf16.msra.mxu0 %v1173
    %1738 = vmatprep.subr.bf16.mxu0 %v1178
    %1739 = vmatpush1.bf16.msra.mxu0 %v1177
    %1740 = vmatprep.subr.bf16.mxu0 %v1182
    %1741 = vmatpush1.bf16.msra.mxu0 %v1181
    %1742 = vmatprep.subr.bf16.mxu0 %v1186
    %1743 = vmatpush1.bf16.msra.mxu0 %v1185
    %1744 = vmatprep.mubr.bf16.mxu0 %v376
    %1745 = vmatmul.mubr.bf16.gmra.mrb[0].mxu0 %v375
    %v1746 = vpop.f32.mrb[0].mxu0
    %v1747 = vadd.f32 %v1706, %v1746
    %v1748 = vpop.f32.mrb[0].mxu0
    %v1749 = vadd.f32 %v1708, %v1748
    %v1750 = vpop.f32.mrb[0].mxu0
    %v1751 = vpop.f32.mrb[0].mxu0
    %1752 = vdwg.mxu0
    %1753 = vmatprep.subr.bf16.mxu0 %v1190
    %1754 = vmatpush1.bf16.msra.mxu0 %v1189
    %1755 = vmatprep.subr.bf16.mxu0 %v1194
    %1756 = vmatpush1.bf16.msra.mxu0 %v1193
    %1757 = vmatprep.subr.bf16.mxu0 %v1198
    %1758 = vmatpush1.bf16.msra.mxu0 %v1197
    %1759 = vmatprep.subr.bf16.mxu0 %v1202
    %1760 = vmatpush1.bf16.msra.mxu0 %v1201
    %1761 = vmatprep.subr.bf16.mxu0 %v1206
    %1762 = vmatpush1.bf16.msra.mxu0 %v1205
    %1763 = vmatprep.subr.bf16.mxu0 %v1210
    %1764 = vmatpush1.bf16.msra.mxu0 %v1209
    %1765 = vmatprep.subr.bf16.mxu0 %v1214
    %1766 = vmatpush1.bf16.msra.mxu0 %v1213
    %1767 = vmatprep.subr.bf16.mxu0 %v1218
    %1768 = vmatpush1.bf16.msra.mxu0 %v1217
    %1769 = vmatprep.subr.bf16.mxu0 %v1222
    %1770 = vmatpush1.bf16.msra.mxu0 %v1221
    %1771 = vmatprep.subr.bf16.mxu0 %v1226
    %1772 = vmatpush1.bf16.msra.mxu0 %v1225
    %1773 = vmatprep.subr.bf16.mxu0 %v1230
    %1774 = vmatpush1.bf16.msra.mxu0 %v1229
    %1775 = vmatprep.subr.bf16.mxu0 %v1234
    %1776 = vmatpush1.bf16.msra.mxu0 %v1233
    %1777 = vmatprep.subr.bf16.mxu0 %v1238
    %1778 = vmatpush1.bf16.msra.mxu0 %v1237
    %1779 = vmatprep.subr.bf16.mxu0 %v1242
    %1780 = vmatpush1.bf16.msra.mxu0 %v1241
    %1781 = vmatprep.subr.bf16.mxu0 %v1246
    %1782 = vmatpush1.bf16.msra.mxu0 %v1245
    %1783 = vmatprep.subr.bf16.mxu0 %v1250
    %1784 = vmatpush1.bf16.msra.mxu0 %v1249
    %1785 = vmatprep.mubr.bf16.mxu0 %v378
    %1786 = vmatmul.mubr.bf16.gmra.mrb[0].mxu0 %v377
    %v1787 = vpop.f32.mrb[0].mxu0
    %v1788 = vadd.f32 %v1747, %v1787
    %v1789 = vpop.f32.mrb[0].mxu0
    %v1790 = vadd.f32 %v1749, %v1789
    %v1791 = vpop.f32.mrb[0].mxu0
    %v1792 = vpop.f32.mrb[0].mxu0
    %1793 = vdwg.mxu0
    %1794 = vmatprep.subr.bf16.mxu0 %v1254
    %1795 = vmatpush1.bf16.msra.mxu0 %v1253
    %1796 = vmatprep.subr.bf16.mxu0 %v1258
    %1797 = vmatpush1.bf16.msra.mxu0 %v1257
    %1798 = vmatprep.subr.bf16.mxu0 %v1262
    %1799 = vmatpush1.bf16.msra.mxu0 %v1261
    %1800 = vmatprep.subr.bf16.mxu0 %v1266
    %1801 = vmatpush1.bf16.msra.mxu0 %v1265
    %1802 = vmatprep.subr.bf16.mxu0 %v1270
    %1803 = vmatpush1.bf16.msra.mxu0 %v1269
    %1804 = vmatprep.subr.bf16.mxu0 %v1274
    %1805 = vmatpush1.bf16.msra.mxu0 %v1273
    %1806 = vmatprep.subr.bf16.mxu0 %v1278
    %1807 = vmatpush1.bf16.msra.mxu0 %v1277
    %1808 = vmatprep.subr.bf16.mxu0 %v1282
    %1809 = vmatpush1.bf16.msra.mxu0 %v1281
    %1810 = vmatprep.subr.bf16.mxu0 0
    %1811 = vmatpush1.bf16.msra.mxu0 0
    %1812 = vmatprep.subr.bf16.mxu0 0
    %1813 = vmatpush1.bf16.msra.mxu0 0
    %1814 = vmatprep.subr.bf16.mxu0 0
    %1815 = vmatpush1.bf16.msra.mxu0 0
    %1816 = vmatprep.subr.bf16.mxu0 0
    %1817 = vmatpush1.bf16.msra.mxu0 0
    %1818 = vmatprep.subr.bf16.mxu0 0
    %1819 = vmatpush1.bf16.msra.mxu0 0
    %1820 = vmatprep.subr.bf16.mxu0 0
    %1821 = vmatpush1.bf16.msra.mxu0 0
    %1822 = vmatprep.subr.bf16.mxu0 0
    %1823 = vmatpush1.bf16.msra.mxu0 0
    %1824 = vmatprep.subr.bf16.mxu0 0
    %1825 = vmatpush1.bf16.msra.mxu0 0
    %1826 = vmatprep.mubr.bf16.mxu0 0
    %1827 = vmatmul.mubr.bf16.gmra.mrb[0].mxu0 %v379
    %v1828 = vpop.f32.mrb[0].mxu0
    %v1829 = vadd.f32 %v1788, %v1828
    %v1830 = vpop.f32.mrb[0].mxu0
    %v1831 = vadd.f32 %v1790, %v1830
    %v1832 = vpop.f32.mrb[0].mxu0
    %v1833 = vpop.f32.mrb[0].mxu0
    %1834 = vdwg.mxu0
    %v1835 = vmax.f32 %v1665, 0.0
    %v1836 = vmax.f32 %v1667, 0.0
    %v1837 = vmax.f32 %v1829, 0.0
    %v1838 = vmax.f32 %v1831, 0.0
    %v1839 = vpack.c.bf16 %v1835, %v1835
    %v1840 = vpack.c.bf16 %v1836, %v1836
    %v1841 = vpack.c.bf16 %v1837, %v1837
    %v1842 = vpack.c.bf16 %v1838, %v1838
    %v1843 = vld [vmem:[#allocation7] sm:$0xf]
    %v1844 = vld [vmem:[#allocation7 + $0x4] sm:$0xf]
    %v1845 = vld [vmem:[#allocation7 + $0x8] sm:$0xf]
    %v1846 = vld [vmem:[#allocation7 + $0xc] sm:$0xf]
    %v1847 = vld [vmem:[#allocation7 + $0x10] sm:$0xf]
    %v1848 = vld [vmem:[#allocation7 + $0x14] sm:$0xf]
    %v1849 = vld [vmem:[#allocation7 + $0x18] sm:$0xf]
    %v1850 = vld [vmem:[#allocation7 + $0x1c] sm:$0xf]
    %v1851 = vld [vmem:[#allocation7 + $0x20] sm:$0xf]
    %v1852 = vld [vmem:[#allocation7 + $0x24] sm:$0xf]
    %v1853 = vld [vmem:[#allocation7 + $0x28] sm:$0xf]
    %v1854 = vld [vmem:[#allocation7 + $0x2c] sm:$0xf]
    %v1855 = vld [vmem:[#allocation7 + $0x30] sm:$0xf]
    %v1856 = vld [vmem:[#allocation7 + $0x34] sm:$0xf]
    %v1857 = vld [vmem:[#allocation7 + $0x38] sm:$0xf]
    %v1858 = vld [vmem:[#allocation7 + $0x3c] sm:$0xf]
    %v1859 = vld [vmem:[#allocation7 + $0x40] sm:$0xf]
    %v1860 = vld [vmem:[#allocation7 + $0x44] sm:$0xf]
    %v1861 = vld [vmem:[#allocation7 + $0x48] sm:$0xf]
    %v1862 = vld [vmem:[#allocation7 + $0x4c] sm:$0xf]
    %v1863 = vld [vmem:[#allocation7 + $0x50] sm:$0xf]
    %v1864 = vld [vmem:[#allocation7 + $0x54] sm:$0xf]
    %v1865 = vld [vmem:[#allocation7 + $0x58] sm:$0xf]
    %v1866 = vld [vmem:[#allocation7 + $0x5c] sm:$0xf]
    %v1867 = vld [vmem:[#allocation7 + $0x60] sm:$0xf]
    %v1868 = vld [vmem:[#allocation7 + $0x64] sm:$0xf]
    %v1869 = vld [vmem:[#allocation7 + $0x68] sm:$0xf]
    %v1870 = vld [vmem:[#allocation7 + $0x6c] sm:$0xf]
    %v1871 = vld [vmem:[#allocation7 + $0x70] sm:$0xf]
    %v1872 = vld [vmem:[#allocation7 + $0x74] sm:$0xf]
    %v1873 = vld [vmem:[#allocation7 + $0x78] sm:$0xf]
    %v1874 = vld [vmem:[#allocation7 + $0x7c] sm:$0xf]
    %v1875 = vld [vmem:[#allocation7 + $0x80] sm:$0xf]
    %v1876 = vld [vmem:[#allocation7 + $0x84] sm:$0xf]
    %v1877 = vld [vmem:[#allocation7 + $0x88] sm:$0xf]
    %v1878 = vld [vmem:[#allocation7 + $0x8c] sm:$0xf]
    %v1879 = vld [vmem:[#allocation7 + $0x90] sm:$0xf]
    %v1880 = vld [vmem:[#allocation7 + $0x94] sm:$0xf]
    %v1881 = vld [vmem:[#allocation7 + $0x98] sm:$0xf]
    %v1882 = vld [vmem:[#allocation7 + $0x9c] sm:$0xf]
    %v1883 = vld [vmem:[#allocation7 + $0xa0] sm:$0xf]
    %v1884 = vld [vmem:[#allocation7 + $0xa4] sm:$0xf]
    %v1885 = vld [vmem:[#allocation7 + $0xa8] sm:$0xf]
    %v1886 = vld [vmem:[#allocation7 + $0xac] sm:$0xf]
    %v1887 = vld [vmem:[#allocation7 + $0xb0] sm:$0xf]
    %v1888 = vld [vmem:[#allocation7 + $0xb4] sm:$0xf]
    %v1889 = vld [vmem:[#allocation7 + $0xb8] sm:$0xf]
    %v1890 = vld [vmem:[#allocation7 + $0xbc] sm:$0xf]
    %v1891 = vld [vmem:[#allocation7 + $0xc0] sm:$0xf]
    %v1892 = vld [vmem:[#allocation7 + $0xc4] sm:$0xf]
    %v1893 = vld [vmem:[#allocation7 + $0xc8] sm:$0xf]
    %v1894 = vld [vmem:[#allocation7 + $0xcc] sm:$0xf]
    %v1895 = vld [vmem:[#allocation7 + $0xd0] sm:$0xf]
    %v1896 = vld [vmem:[#allocation7 + $0xd4] sm:$0xf]
    %v1897 = vld [vmem:[#allocation7 + $0xd8] sm:$0xf]
    %v1898 = vld [vmem:[#allocation7 + $0xdc] sm:$0xf]
    %v1899 = vld [vmem:[#allocation7 + $0xe0] sm:$0xf]
    %v1900 = vld [vmem:[#allocation7 + $0xe4] sm:$0xf]
    %v1901 = vld [vmem:[#allocation7 + $0xe8] sm:$0xf]
    %v1902 = vld [vmem:[#allocation7 + $0xec] sm:$0xf]
    %v1903 = vld [vmem:[#allocation7 + $0xf0] sm:$0xf]
    %v1904 = vld [vmem:[#allocation7 + $0xf4] sm:$0xf]
    %v1905 = vld [vmem:[#allocation7 + $0xf8] sm:$0xf]
    %v1906 = vld [vmem:[#allocation7 + $0xfc] sm:$0xf]
    %v1907 = vld [vmem:[#allocation8] sm:$0x1]
    %v1909 = vlaneseq
    %v1910 = vshrl.u32 %v1909, 7
    %v1911 = vsub.s32 0, %v1910
    %v1912 = vrot.slane %v1907, %v1911
    %v1978 = vunpack.c.l.b16 %v1843
    %v1979 = vunpack.c.l.b16 %v1844
    %v1980 = vunpack.c.l.b16 %v1845
    %v1981 = vunpack.c.l.b16 %v1846
    %v1982 = vunpack.c.l.b16 %v1847
    %v1983 = vunpack.c.l.b16 %v1848
    %v1984 = vunpack.c.l.b16 %v1849
    %v1985 = vunpack.c.l.b16 %v1850
    %v1986 = vunpack.c.l.b16 %v1851
    %v1987 = vunpack.c.l.b16 %v1852
    %v1988 = vunpack.c.l.b16 %v1853
    %v1989 = vunpack.c.l.b16 %v1854
    %v1990 = vunpack.c.l.b16 %v1855
    %v1991 = vunpack.c.l.b16 %v1856
    %v1992 = vunpack.c.l.b16 %v1857
    %v1993 = vunpack.c.l.b16 %v1858
    %v1994 = vunpack.c.l.b16 %v1859
    %v1995 = vunpack.c.l.b16 %v1860
    %v1996 = vunpack.c.l.b16 %v1861
    %v1997 = vunpack.c.l.b16 %v1862
    %v1998 = vunpack.c.l.b16 %v1863
    %v1999 = vunpack.c.l.b16 %v1864
    %v2000 = vunpack.c.l.b16 %v1865
    %v2001 = vunpack.c.l.b16 %v1866
    %v2002 = vunpack.c.l.b16 %v1867
    %v2003 = vunpack.c.l.b16 %v1868
    %v2004 = vunpack.c.l.b16 %v1869
    %v2005 = vunpack.c.l.b16 %v1870
    %v2006 = vunpack.c.l.b16 %v1871
    %v2007 = vunpack.c.l.b16 %v1872
    %v2008 = vunpack.c.l.b16 %v1873
    %v2009 = vunpack.c.l.b16 %v1874
    %v2010 = vunpack.c.l.b16 %v1875
    %v2011 = vunpack.c.l.b16 %v1876
    %v2012 = vunpack.c.l.b16 %v1877
    %v2013 = vunpack.c.l.b16 %v1878
    %v2014 = vunpack.c.l.b16 %v1879
    %v2015 = vunpack.c.l.b16 %v1880
    %v2016 = vunpack.c.l.b16 %v1881
    %v2017 = vunpack.c.l.b16 %v1882
    %v2018 = vunpack.c.l.b16 %v1883
    %v2019 = vunpack.c.l.b16 %v1884
    %v2020 = vunpack.c.l.b16 %v1885
    %v2021 = vunpack.c.l.b16 %v1886
    %v2022 = vunpack.c.l.b16 %v1887
    %v2023 = vunpack.c.l.b16 %v1888
    %v2024 = vunpack.c.l.b16 %v1889
    %v2025 = vunpack.c.l.b16 %v1890
    %v2026 = vunpack.c.l.b16 %v1891
    %v2027 = vunpack.c.l.b16 %v1892
    %v2028 = vunpack.c.l.b16 %v1893
    %v2029 = vunpack.c.l.b16 %v1894
    %v2030 = vunpack.c.l.b16 %v1895
    %v2031 = vunpack.c.l.b16 %v1896
    %v2032 = vunpack.c.l.b16 %v1897
    %v2033 = vunpack.c.l.b16 %v1898
    %v2034 = vunpack.c.l.b16 %v1899
    %v2035 = vunpack.c.l.b16 %v1900
    %v2036 = vunpack.c.l.b16 %v1901
    %v2037 = vunpack.c.l.b16 %v1902
    %v2038 = vunpack.c.l.b16 %v1903
    %v2039 = vunpack.c.l.b16 %v1904
    %v2040 = vunpack.c.l.b16 %v1905
    %v2041 = vunpack.c.l.b16 %v1906
    %v2042 = vpack.c.b16 %v1979, %v1978
    %v2043 = vpack.c.b16 %v1981, %v1980
    %v2044 = vpack.c.b16 %v1983, %v1982
    %v2045 = vpack.c.b16 %v1985, %v1984
    %v2046 = vpack.c.b16 %v1987, %v1986
    %v2047 = vpack.c.b16 %v1989, %v1988
    %v2048 = vpack.c.b16 %v1991, %v1990
    %v2049 = vpack.c.b16 %v1993, %v1992
    %v2050 = vpack.c.b16 %v1995, %v1994
    %v2051 = vpack.c.b16 %v1997, %v1996
    %v2052 = vpack.c.b16 %v1999, %v1998
    %v2053 = vpack.c.b16 %v2001, %v2000
    %v2054 = vpack.c.b16 %v2003, %v2002
    %v2055 = vpack.c.b16 %v2005, %v2004
    %v2056 = vpack.c.b16 %v2007, %v2006
    %v2057 = vpack.c.b16 %v2009, %v2008
    %v2058 = vpack.c.b16 %v2011, %v2010
    %v2059 = vpack.c.b16 %v2013, %v2012
    %v2060 = vpack.c.b16 %v2015, %v2014
    %v2061 = vpack.c.b16 %v2017, %v2016
    %v2062 = vpack.c.b16 %v2019, %v2018
    %v2063 = vpack.c.b16 %v2021, %v2020
    %v2064 = vpack.c.b16 %v2023, %v2022
    %v2065 = vpack.c.b16 %v2025, %v2024
    %v2066 = vpack.c.b16 %v2027, %v2026
    %v2067 = vpack.c.b16 %v2029, %v2028
    %v2068 = vpack.c.b16 %v2031, %v2030
    %v2069 = vpack.c.b16 %v2033, %v2032
    %v2070 = vpack.c.b16 %v2035, %v2034
    %v2071 = vpack.c.b16 %v2037, %v2036
    %v2072 = vpack.c.b16 %v2039, %v2038
    %v2073 = vpack.c.b16 %v2041, %v2040
    %2106 = vmatprep.subr.bf16.mxu0 0
    %2107 = vmatpush1.bf16.msra.mxu0 %v2042
    %2108 = vmatprep.subr.bf16.mxu0 0
    %2109 = vmatpush1.bf16.msra.mxu0 %v2043
    %2110 = vmatprep.subr.bf16.mxu0 0
    %2111 = vmatpush1.bf16.msra.mxu0 %v2044
    %2112 = vmatprep.subr.bf16.mxu0 0
    %2113 = vmatpush1.bf16.msra.mxu0 %v2045
    %2114 = vmatprep.subr.bf16.mxu0 0
    %2115 = vmatpush1.bf16.msra.mxu0 %v2046
    %2116 = vmatprep.subr.bf16.mxu0 0
    %2117 = vmatpush1.bf16.msra.mxu0 %v2047
    %2118 = vmatprep.subr.bf16.mxu0 0
    %2119 = vmatpush1.bf16.msra.mxu0 %v2048
    %2120 = vmatprep.subr.bf16.mxu0 0
    %2121 = vmatpush1.bf16.msra.mxu0 %v2049
    %2122 = vmatprep.subr.bf16.mxu0 0
    %2123 = vmatpush1.bf16.msra.mxu0 %v2050
    %2124 = vmatprep.subr.bf16.mxu0 0
    %2125 = vmatpush1.bf16.msra.mxu0 %v2051
    %2126 = vmatprep.subr.bf16.mxu0 0
    %2127 = vmatpush1.bf16.msra.mxu0 %v2052
    %2128 = vmatprep.subr.bf16.mxu0 0
    %2129 = vmatpush1.bf16.msra.mxu0 %v2053
    %2130 = vmatprep.subr.bf16.mxu0 0
    %2131 = vmatpush1.bf16.msra.mxu0 %v2054
    %2132 = vmatprep.subr.bf16.mxu0 0
    %2133 = vmatpush1.bf16.msra.mxu0 %v2055
    %2134 = vmatprep.subr.bf16.mxu0 0
    %2135 = vmatpush1.bf16.msra.mxu0 %v2056
    %2136 = vmatprep.subr.bf16.mxu0 0
    %2137 = vmatpush1.bf16.msra.mxu0 %v2057
    %2138 = vmatprep.mubr.bf16.mxu0 %v1840
    %2139 = vmatmul.mubr.bf16.gmra.mrb[0].mxu0 %v1839
    %v2140 = vpop.f32.mrb[0].mxu0
    %v2141 = vadd.f32 %v1912, %v2140
    %v2142 = vpop.f32.mrb[0].mxu0
    %v2143 = vpop.f32.mrb[0].mxu0
    %v2144 = vpop.f32.mrb[0].mxu0
    %2145 = vdwg.mxu0
    %2146 = vmatprep.subr.bf16.mxu0 0
    %2147 = vmatpush1.bf16.msra.mxu0 %v2058
    %2148 = vmatprep.subr.bf16.mxu0 0
    %2149 = vmatpush1.bf16.msra.mxu0 %v2059
    %2150 = vmatprep.subr.bf16.mxu0 0
    %2151 = vmatpush1.bf16.msra.mxu0 %v2060
    %2152 = vmatprep.subr.bf16.mxu0 0
    %2153 = vmatpush1.bf16.msra.mxu0 %v2061
    %2154 = vmatprep.subr.bf16.mxu0 0
    %2155 = vmatpush1.bf16.msra.mxu0 %v2062
    %2156 = vmatprep.subr.bf16.mxu0 0
    %2157 = vmatpush1.bf16.msra.mxu0 %v2063
    %2158 = vmatprep.subr.bf16.mxu0 0
    %2159 = vmatpush1.bf16.msra.mxu0 %v2064
    %2160 = vmatprep.subr.bf16.mxu0 0
    %2161 = vmatpush1.bf16.msra.mxu0 %v2065
    %2162 = vmatprep.subr.bf16.mxu0 0
    %2163 = vmatpush1.bf16.msra.mxu0 %v2066
    %2164 = vmatprep.subr.bf16.mxu0 0
    %2165 = vmatpush1.bf16.msra.mxu0 %v2067
    %2166 = vmatprep.subr.bf16.mxu0 0
    %2167 = vmatpush1.bf16.msra.mxu0 %v2068
    %2168 = vmatprep.subr.bf16.mxu0 0
    %2169 = vmatpush1.bf16.msra.mxu0 %v2069
    %2170 = vmatprep.subr.bf16.mxu0 0
    %2171 = vmatpush1.bf16.msra.mxu0 %v2070
    %2172 = vmatprep.subr.bf16.mxu0 0
    %2173 = vmatpush1.bf16.msra.mxu0 %v2071
    %2174 = vmatprep.subr.bf16.mxu0 0
    %2175 = vmatpush1.bf16.msra.mxu0 %v2072
    %2176 = vmatprep.subr.bf16.mxu0 0
    %2177 = vmatpush1.bf16.msra.mxu0 %v2073
    %2178 = vmatprep.mubr.bf16.mxu0 %v1842
    %2179 = vmatmul.mubr.bf16.gmra.mrb[0].mxu0 %v1841
    %v2180 = vpop.f32.mrb[0].mxu0
    %v2181 = vadd.f32 %v2141, %v2180
    %v2182 = vpop.f32.mrb[0].mxu0
    %v2183 = vpop.f32.mrb[0].mxu0
    %v2184 = vpop.f32.mrb[0].mxu0
    %2185 = vdwg.mxu0
    %v2186 = vmax.f32 %v2181, 0.0
    %v2187 = vpack.c.bf16 %v2186, %v2186
    %v2188 = vld [vmem:[#allocation10] sm:$0xff]
    %v2189 = vld [vmem:[#allocation10 + $0x8] sm:$0xff]
    %v2190 = vld [vmem:[#allocation10 + $0x10] sm:$0xff]
    %v2191 = vld [vmem:[#allocation10 + $0x18] sm:$0xff]
    %v2192 = vld [vmem:[#allocation10 + $0x20] sm:$0xff]
    %v2193 = vld [vmem:[#allocation10 + $0x28] sm:$0xff]
    %v2194 = vld [vmem:[#allocation10 + $0x30] sm:$0xff]
    %v2195 = vld [vmem:[#allocation10 + $0x38] sm:$0xff]
    %v2196 = vld [vmem:[#allocation10 + $0x40] sm:$0xff]
    %v2197 = vld [vmem:[#allocation10 + $0x48] sm:$0xff]
    %v2198 = vld [vmem:[#allocation10 + $0x50] sm:$0xff]
    %v2199 = vld [vmem:[#allocation10 + $0x58] sm:$0xff]
    %v2200 = vld [vmem:[#allocation10 + $0x60] sm:$0xff]
    %v2201 = vld [vmem:[#allocation10 + $0x68] sm:$0xff]
    %v2202 = vld [vmem:[#allocation10 + $0x70] sm:$0xff]
    %v2203 = vld [vmem:[#allocation10 + $0x78] sm:$0xff]
    %v2204 = vld [vmem:[#allocation10 + $0x80] sm:$0xff]
    %v2205 = vld [vmem:[#allocation10 + $0x88] sm:$0xff]
    %v2206 = vld [vmem:[#allocation10 + $0x90] sm:$0xff]
    %v2207 = vld [vmem:[#allocation10 + $0x98] sm:$0xff]
    %v2208 = vld [vmem:[#allocation10 + $0xa0] sm:$0xff]
    %v2209 = vld [vmem:[#allocation10 + $0xa8] sm:$0xff]
    %v2210 = vld [vmem:[#allocation10 + $0xb0] sm:$0xff]
    %v2211 = vld [vmem:[#allocation10 + $0xb8] sm:$0xff]
    %v2212 = vld [vmem:[#allocation10 + $0xc0] sm:$0xff]
    %v2213 = vld [vmem:[#allocation10 + $0xc8] sm:$0xff]
    %v2214 = vld [vmem:[#allocation10 + $0xd0] sm:$0xff]
    %v2215 = vld [vmem:[#allocation10 + $0xd8] sm:$0xff]
    %v2216 = vld [vmem:[#allocation10 + $0xe0] sm:$0xff]
    %v2217 = vld [vmem:[#allocation10 + $0xe8] sm:$0xff]
    %v2218 = vld [vmem:[#allocation10 + $0xf0] sm:$0xff]
    %v2219 = vld [vmem:[#allocation10 + $0xf8] sm:$0xff]
    %v2220 = vld [vmem:[%s6] sm:$0xf]
    %v2222 = vlaneseq
    %v2223 = vshrl.u32 %v2222, 7
    %v2224 = vsub.s32 0, %v2223
    %v2225 = vrot.slane %v2220, %v2224
    %v2226 = vlaneseq
    %v2227 = vshrl.u32 %v2226, 7
    %v2228 = vsub.s32 1, %v2227
    %v2229 = vrot.slane %v2220, %v2228
    %v2230 = vlaneseq
    %v2231 = vshrl.u32 %v2230, 7
    %v2232 = vsub.s32 2, %v2231
    %v2233 = vrot.slane %v2220, %v2232
    %v2234 = vlaneseq
    %v2235 = vshrl.u32 %v2234, 7
    %v2236 = vsub.s32 3, %v2235
    %v2237 = vrot.slane %v2220, %v2236
    %v2274 = vunpack.c.l.b16 %v2188
    %v2275 = vunpack.c.h.b16 %v2188
    %v2276 = vunpack.c.l.b16 %v2189
    %v2277 = vunpack.c.h.b16 %v2189
    %v2278 = vunpack.c.l.b16 %v2190
    %v2279 = vunpack.c.h.b16 %v2190
    %v2280 = vunpack.c.l.b16 %v2191
    %v2281 = vunpack.c.h.b16 %v2191
    %v2282 = vunpack.c.l.b16 %v2192
    %v2283 = vunpack.c.h.b16 %v2192
    %v2284 = vunpack.c.l.b16 %v2193
    %v2285 = vunpack.c.h.b16 %v2193
    %v2286 = vunpack.c.l.b16 %v2194
    %v2287 = vunpack.c.h.b16 %v2194
    %v2288 = vunpack.c.l.b16 %v2195
    %v2289 = vunpack.c.h.b16 %v2195
    %v2290 = vunpack.c.l.b16 %v2196
    %v2291 = vunpack.c.h.b16 %v2196
    %v2292 = vunpack.c.l.b16 %v2197
    %v2293 = vunpack.c.h.b16 %v2197
    %v2294 = vunpack.c.l.b16 %v2198
    %v2295 = vunpack.c.h.b16 %v2198
    %v2296 = vunpack.c.l.b16 %v2199
    %v2297 = vunpack.c.h.b16 %v2199
    %v2298 = vunpack.c.l.b16 %v2200
    %v2299 = vunpack.c.h.b16 %v2200
    %v2300 = vunpack.c.l.b16 %v2201
    %v2301 = vunpack.c.h.b16 %v2201
    %v2302 = vunpack.c.l.b16 %v2202
    %v2303 = vunpack.c.h.b16 %v2202
    %v2304 = vunpack.c.l.b16 %v2203
    %v2305 = vunpack.c.h.b16 %v2203
    %v2306 = vunpack.c.l.b16 %v2204
    %v2307 = vunpack.c.h.b16 %v2204
    %v2308 = vunpack.c.l.b16 %v2205
    %v2309 = vunpack.c.h.b16 %v2205
    %v2310 = vunpack.c.l.b16 %v2206
    %v2311 = vunpack.c.h.b16 %v2206
    %v2312 = vunpack.c.l.b16 %v2207
    %v2313 = vunpack.c.h.b16 %v2207
    %v2314 = vunpack.c.l.b16 %v2208
    %v2315 = vunpack.c.h.b16 %v2208
    %v2316 = vunpack.c.l.b16 %v2209
    %v2317 = vunpack.c.h.b16 %v2209
    %v2318 = vunpack.c.l.b16 %v2210
    %v2319 = vunpack.c.h.b16 %v2210
    %v2320 = vunpack.c.l.b16 %v2211
    %v2321 = vunpack.c.h.b16 %v2211
    %v2322 = vunpack.c.l.b16 %v2212
    %v2323 = vunpack.c.h.b16 %v2212
    %v2324 = vunpack.c.l.b16 %v2213
    %v2325 = vunpack.c.h.b16 %v2213
    %v2326 = vunpack.c.l.b16 %v2214
    %v2327 = vunpack.c.h.b16 %v2214
    %v2328 = vunpack.c.l.b16 %v2215
    %v2329 = vunpack.c.h.b16 %v2215
    %v2330 = vunpack.c.l.b16 %v2216
    %v2331 = vunpack.c.h.b16 %v2216
    %v2332 = vunpack.c.l.b16 %v2217
    %v2333 = vunpack.c.h.b16 %v2217
    %v2334 = vunpack.c.l.b16 %v2218
    %v2335 = vunpack.c.h.b16 %v2218
    %v2336 = vunpack.c.l.b16 %v2219
    %v2337 = vunpack.c.h.b16 %v2219
    %v2338 = vpack.c.b16 %v2278, %v2274
    %v2339 = vpack.c.b16 %v2279, %v2275
    %v2340 = vpack.c.b16 %v2280, %v2276
    %v2341 = vpack.c.b16 %v2281, %v2277
    %v2342 = vpack.c.b16 %v2286, %v2282
    %v2343 = vpack.c.b16 %v2287, %v2283
    %v2344 = vpack.c.b16 %v2288, %v2284
    %v2345 = vpack.c.b16 %v2289, %v2285
    %v2346 = vpack.c.b16 %v2294, %v2290
    %v2347 = vpack.c.b16 %v2295, %v2291
    %v2348 = vpack.c.b16 %v2296, %v2292
    %v2349 = vpack.c.b16 %v2297, %v2293
    %v2350 = vpack.c.b16 %v2302, %v2298
    %v2351 = vpack.c.b16 %v2303, %v2299
    %v2352 = vpack.c.b16 %v2304, %v2300
    %v2353 = vpack.c.b16 %v2305, %v2301
    %v2354 = vpack.c.b16 %v2310, %v2306
    %v2355 = vpack.c.b16 %v2311, %v2307
    %v2356 = vpack.c.b16 %v2312, %v2308
    %v2357 = vpack.c.b16 %v2313, %v2309
    %v2358 = vpack.c.b16 %v2318, %v2314
    %v2359 = vpack.c.b16 %v2319, %v2315
    %v2360 = vpack.c.b16 %v2320, %v2316
    %v2361 = vpack.c.b16 %v2321, %v2317
    %v2362 = vpack.c.b16 %v2326, %v2322
    %v2363 = vpack.c.b16 %v2327, %v2323
    %v2364 = vpack.c.b16 %v2328, %v2324
    %v2365 = vpack.c.b16 %v2329, %v2325
    %v2366 = vpack.c.b16 %v2334, %v2330
    %v2367 = vpack.c.b16 %v2335, %v2331
    %v2368 = vpack.c.b16 %v2336, %v2332
    %v2369 = vpack.c.b16 %v2337, %v2333
    %2402 = vmatprep.subr.bf16.mxu0 %v2339
    %2403 = vmatpush1.bf16.msra.mxu0 %v2338
    %2404 = vmatprep.subr.bf16.mxu0 %v2343
    %2405 = vmatpush1.bf16.msra.mxu0 %v2342
    %2406 = vmatprep.subr.bf16.mxu0 %v2347
    %2407 = vmatpush1.bf16.msra.mxu0 %v2346
    %2408 = vmatprep.subr.bf16.mxu0 %v2351
    %2409 = vmatpush1.bf16.msra.mxu0 %v2350
    %2410 = vmatprep.subr.bf16.mxu0 %v2355
    %2411 = vmatpush1.bf16.msra.mxu0 %v2354
    %2412 = vmatprep.subr.bf16.mxu0 %v2359
    %2413 = vmatpush1.bf16.msra.mxu0 %v2358
    %2414 = vmatprep.subr.bf16.mxu0 %v2363
    %2415 = vmatpush1.bf16.msra.mxu0 %v2362
    %2416 = vmatprep.subr.bf16.mxu0 %v2367
    %2417 = vmatpush1.bf16.msra.mxu0 %v2366
    %2418 = vmatprep.subr.bf16.mxu0 0
    %2419 = vmatpush1.bf16.msra.mxu0 0
    %2420 = vmatprep.subr.bf16.mxu0 0
    %2421 = vmatpush1.bf16.msra.mxu0 0
    %2422 = vmatprep.subr.bf16.mxu0 0
    %2423 = vmatpush1.bf16.msra.mxu0 0
    %2424 = vmatprep.subr.bf16.mxu0 0
    %2425 = vmatpush1.bf16.msra.mxu0 0
    %2426 = vmatprep.subr.bf16.mxu0 0
    %2427 = vmatpush1.bf16.msra.mxu0 0
    %2428 = vmatprep.subr.bf16.mxu0 0
    %2429 = vmatpush1.bf16.msra.mxu0 0
    %2430 = vmatprep.subr.bf16.mxu0 0
    %2431 = vmatpush1.bf16.msra.mxu0 0
    %2432 = vmatprep.subr.bf16.mxu0 0
    %2433 = vmatpush1.bf16.msra.mxu0 0
    %2434 = vmatprep.mubr.bf16.mxu0 0
    %2435 = vmatmul.mubr.bf16.gmra.mrb[0].mxu0 %v2187
    %v2436 = vpop.f32.mrb[0].mxu0
    %v2437 = vadd.f32 %v2225, %v2436
    %v2438 = vpop.f32.mrb[0].mxu0
    %v2439 = vadd.f32 %v2229, %v2438
    %v2440 = vpop.f32.mrb[0].mxu0
    %v2441 = vpop.f32.mrb[0].mxu0
    %2442 = vdwg.mxu0
    %2443 = vmatprep.subr.bf16.mxu0 %v2341
    %2444 = vmatpush1.bf16.msra.mxu0 %v2340
    %2445 = vmatprep.subr.bf16.mxu0 %v2345
    %2446 = vmatpush1.bf16.msra.mxu0 %v2344
    %2447 = vmatprep.subr.bf16.mxu0 %v2349
    %2448 = vmatpush1.bf16.msra.mxu0 %v2348
    %2449 = vmatprep.subr.bf16.mxu0 %v2353
    %2450 = vmatpush1.bf16.msra.mxu0 %v2352
    %2451 = vmatprep.subr.bf16.mxu0 %v2357
    %2452 = vmatpush1.bf16.msra.mxu0 %v2356
    %2453 = vmatprep.subr.bf16.mxu0 %v2361
    %2454 = vmatpush1.bf16.msra.mxu0 %v2360
    %2455 = vmatprep.subr.bf16.mxu0 %v2365
    %2456 = vmatpush1.bf16.msra.mxu0 %v2364
    %2457 = vmatprep.subr.bf16.mxu0 %v2369
    %2458 = vmatpush1.bf16.msra.mxu0 %v2368
    %2459 = vmatprep.subr.bf16.mxu0 0
    %2460 = vmatpush1.bf16.msra.mxu0 0
    %2461 = vmatprep.subr.bf16.mxu0 0
    %2462 = vmatpush1.bf16.msra.mxu0 0
    %2463 = vmatprep.subr.bf16.mxu0 0
    %2464 = vmatpush1.bf16.msra.mxu0 0
    %2465 = vmatprep.subr.bf16.mxu0 0
    %2466 = vmatpush1.bf16.msra.mxu0 0
    %2467 = vmatprep.subr.bf16.mxu0 0
    %2468 = vmatpush1.bf16.msra.mxu0 0
    %2469 = vmatprep.subr.bf16.mxu0 0
    %2470 = vmatpush1.bf16.msra.mxu0 0
    %2471 = vmatprep.subr.bf16.mxu0 0
    %2472 = vmatpush1.bf16.msra.mxu0 0
    %2473 = vmatprep.subr.bf16.mxu0 0
    %2474 = vmatpush1.bf16.msra.mxu0 0
    %2475 = vmatprep.mubr.bf16.mxu0 0
    %2476 = vmatmul.mubr.bf16.gmra.mrb[0].mxu0 %v2187
    %v2477 = vpop.f32.mrb[0].mxu0
    %v2478 = vadd.f32 %v2233, %v2477
    %v2479 = vpop.f32.mrb[0].mxu0
    %v2480 = vadd.f32 %v2237, %v2479
    %v2481 = vpop.f32.mrb[0].mxu0
    %v2482 = vpop.f32.mrb[0].mxu0
    %2483 = vdwg.mxu0
    %v2484 = vmax.f32 %v2437, 0.0
    %v2485 = vmax.f32 %v2439, 0.0
    %v2486 = vmax.f32 %v2478, 0.0
    %v2487 = vmax.f32 %v2480, 0.0
    %v2488 = vpack.c.bf16 %v2484, %v2484
    %v2489 = vpack.c.bf16 %v2485, %v2485
    %v2490 = vpack.c.bf16 %v2486, %v2486
    %v2491 = vpack.c.bf16 %v2487, %v2487
    %v2492 = vld [vmem:[#allocation11] sm:$0xff]
    %v2493 = vld [vmem:[#allocation11 + $0x8] sm:$0xff]
    %v2494 = vld [vmem:[#allocation11 + $0x10] sm:$0xff]
    %v2495 = vld [vmem:[#allocation11 + $0x18] sm:$0xf]
    %v2496 = vld [vmem:[#allocation11 + $0x1c] sm:$0xff]
    %v2497 = vld [vmem:[#allocation11 + $0x24] sm:$0xff]
    %v2498 = vld [vmem:[#allocation11 + $0x2c] sm:$0xff]
    %v2499 = vld [vmem:[#allocation11 + $0x34] sm:$0xf]
    %v2500 = vld [vmem:[#allocation11 + $0x38] sm:$0xff]
    %v2501 = vld [vmem:[#allocation11 + $0x40] sm:$0xff]
    %v2502 = vld [vmem:[#allocation11 + $0x48] sm:$0xff]
    %v2503 = vld [vmem:[#allocation11 + $0x50] sm:$0xf]
    %v2504 = vld [vmem:[#allocation11 + $0x54] sm:$0xff]
    %v2505 = vld [vmem:[#allocation11 + $0x5c] sm:$0xff]
    %v2506 = vld [vmem:[#allocation11 + $0x64] sm:$0xff]
    %v2507 = vld [vmem:[#allocation11 + $0x6c] sm:$0xf]
    %v2508 = vld [vmem:[#allocation11 + $0x70] sm:$0xff]
    %v2509 = vld [vmem:[#allocation11 + $0x78] sm:$0xff]
    %v2510 = vld [vmem:[#allocation11 + $0x80] sm:$0xff]
    %v2511 = vld [vmem:[#allocation11 + $0x88] sm:$0xf]
    %v2512 = vld [vmem:[#allocation11 + $0x8c] sm:$0xff]
    %v2513 = vld [vmem:[#allocation11 + $0x94] sm:$0xff]
    %v2514 = vld [vmem:[#allocation11 + $0x9c] sm:$0xff]
    %v2515 = vld [vmem:[#allocation11 + $0xa4] sm:$0xf]
    %v2516 = vld [vmem:[#allocation11 + $0xa8] sm:$0xff]
    %v2517 = vld [vmem:[#allocation11 + $0xb0] sm:$0xff]
    %v2518 = vld [vmem:[#allocation11 + $0xb8] sm:$0xff]
    %v2519 = vld [vmem:[#allocation11 + $0xc0] sm:$0xf]
    %v2520 = vld [vmem:[#allocation11 + $0xc4] sm:$0xff]
    %v2521 = vld [vmem:[#allocation11 + $0xcc] sm:$0xff]
    %v2522 = vld [vmem:[#allocation11 + $0xd4] sm:$0xff]
    %v2523 = vld [vmem:[#allocation11 + $0xdc] sm:$0xf]
    %v2524 = vld [vmem:[#allocation11 + $0xe0] sm:$0xff]
    %v2525 = vld [vmem:[#allocation11 + $0xe8] sm:$0xff]
    %v2526 = vld [vmem:[#allocation11 + $0xf0] sm:$0xff]
    %v2527 = vld [vmem:[#allocation11 + $0xf8] sm:$0xf]
    %v2528 = vld [vmem:[#allocation11 + $0xfc] sm:$0xff]
    %v2529 = vld [vmem:[#allocation11 + $0x104] sm:$0xff]
    %v2530 = vld [vmem:[#allocation11 + $0x10c] sm:$0xff]
    %v2531 = vld [vmem:[#allocation11 + $0x114] sm:$0xf]
    %v2532 = vld [vmem:[#allocation11 + $0x118] sm:$0xff]
    %v2533 = vld [vmem:[#allocation11 + $0x120] sm:$0xff]
    %v2534 = vld [vmem:[#allocation11 + $0x128] sm:$0xff]
    %v2535 = vld [vmem:[#allocation11 + $0x130] sm:$0xf]
    %v2536 = vld [vmem:[#allocation11 + $0x134] sm:$0xff]
    %v2537 = vld [vmem:[#allocation11 + $0x13c] sm:$0xff]
    %v2538 = vld [vmem:[#allocation11 + $0x144] sm:$0xff]
    %v2539 = vld [vmem:[#allocation11 + $0x14c] sm:$0xf]
    %v2540 = vld [vmem:[#allocation11 + $0x150] sm:$0xff]
    %v2541 = vld [vmem:[#allocation11 + $0x158] sm:$0xff]
    %v2542 = vld [vmem:[#allocation11 + $0x160] sm:$0xff]
    %v2543 = vld [vmem:[#allocation11 + $0x168] sm:$0xf]
    %v2544 = vld [vmem:[#allocation11 + $0x16c] sm:$0xff]
    %v2545 = vld [vmem:[#allocation11 + $0x174] sm:$0xff]
    %v2546 = vld [vmem:[#allocation11 + $0x17c] sm:$0xff]
    %v2547 = vld [vmem:[#allocation11 + $0x184] sm:$0xf]
    %v2548 = vld [vmem:[#allocation11 + $0x188] sm:$0xff]
    %v2549 = vld [vmem:[#allocation11 + $0x190] sm:$0xff]
    %v2550 = vld [vmem:[#allocation11 + $0x198] sm:$0xff]
    %v2551 = vld [vmem:[#allocation11 + $0x1a0] sm:$0xf]
    %v2552 = vld [vmem:[#allocation11 + $0x1a4] sm:$0xff]
    %v2553 = vld [vmem:[#allocation11 + $0x1ac] sm:$0xff]
    %v2554 = vld [vmem:[#allocation11 + $0x1b4] sm:$0xff]
    %v2555 = vld [vmem:[#allocation11 + $0x1bc] sm:$0xf]
    %v2556 = vld [vmem:[#allocation11 + $0x1c0] sm:$0xff]
    %v2557 = vld [vmem:[#allocation11 + $0x1c8] sm:$0xff]
    %v2558 = vld [vmem:[#allocation11 + $0x1d0] sm:$0xff]
    %v2559 = vld [vmem:[#allocation11 + $0x1d8] sm:$0xf]
    %v2560 = vld [vmem:[#allocation11 + $0x1dc] sm:$0xff]
    %v2561 = vld [vmem:[#allocation11 + $0x1e4] sm:$0xff]
    %v2562 = vld [vmem:[#allocation11 + $0x1ec] sm:$0xff]
    %v2563 = vld [vmem:[#allocation11 + $0x1f4] sm:$0xf]
    %v2564 = vld [vmem:[#allocation11 + $0x1f8] sm:$0xff]
    %v2565 = vld [vmem:[#allocation11 + $0x200] sm:$0xff]
    %v2566 = vld [vmem:[#allocation11 + $0x208] sm:$0xff]
    %v2567 = vld [vmem:[#allocation11 + $0x210] sm:$0xf]
    %v2568 = vld [vmem:[#allocation11 + $0x214] sm:$0xff]
    %v2569 = vld [vmem:[#allocation11 + $0x21c] sm:$0xff]
    %v2570 = vld [vmem:[#allocation11 + $0x224] sm:$0xff]
    %v2571 = vld [vmem:[#allocation11 + $0x22c] sm:$0xf]
    %v2572 = vld [vmem:[#allocation11 + $0x230] sm:$0xff]
    %v2573 = vld [vmem:[#allocation11 + $0x238] sm:$0xff]
    %v2574 = vld [vmem:[#allocation11 + $0x240] sm:$0xff]
    %v2575 = vld [vmem:[#allocation11 + $0x248] sm:$0xf]
    %v2576 = vld [vmem:[#allocation11 + $0x24c] sm:$0xff]
    %v2577 = vld [vmem:[#allocation11 + $0x254] sm:$0xff]
    %v2578 = vld [vmem:[#allocation11 + $0x25c] sm:$0xff]
    %v2579 = vld [vmem:[#allocation11 + $0x264] sm:$0xf]
    %v2580 = vld [vmem:[#allocation11 + $0x268] sm:$0xff]
    %v2581 = vld [vmem:[#allocation11 + $0x270] sm:$0xff]
    %v2582 = vld [vmem:[#allocation11 + $0x278] sm:$0xff]
    %v2583 = vld [vmem:[#allocation11 + $0x280] sm:$0xf]
    %v2584 = vld [vmem:[#allocation11 + $0x284] sm:$0xff]
    %v2585 = vld [vmem:[#allocation11 + $0x28c] sm:$0xff]
    %v2586 = vld [vmem:[#allocation11 + $0x294] sm:$0xff]
    %v2587 = vld [vmem:[#allocation11 + $0x29c] sm:$0xf]
    %v2588 = vld [vmem:[#allocation11 + $0x2a0] sm:$0xff]
    %v2589 = vld [vmem:[#allocation11 + $0x2a8] sm:$0xff]
    %v2590 = vld [vmem:[#allocation11 + $0x2b0] sm:$0xff]
    %v2591 = vld [vmem:[#allocation11 + $0x2b8] sm:$0xf]
    %v2592 = vld [vmem:[#allocation11 + $0x2bc] sm:$0xff]
    %v2593 = vld [vmem:[#allocation11 + $0x2c4] sm:$0xff]
    %v2594 = vld [vmem:[#allocation11 + $0x2cc] sm:$0xff]
    %v2595 = vld [vmem:[#allocation11 + $0x2d4] sm:$0xf]
    %v2596 = vld [vmem:[#allocation11 + $0x2d8] sm:$0xff]
    %v2597 = vld [vmem:[#allocation11 + $0x2e0] sm:$0xff]
    %v2598 = vld [vmem:[#allocation11 + $0x2e8] sm:$0xff]
    %v2599 = vld [vmem:[#allocation11 + $0x2f0] sm:$0xf]
    %v2600 = vld [vmem:[#allocation11 + $0x2f4] sm:$0xff]
    %v2601 = vld [vmem:[#allocation11 + $0x2fc] sm:$0xff]
    %v2602 = vld [vmem:[#allocation11 + $0x304] sm:$0xff]
    %v2603 = vld [vmem:[#allocation11 + $0x30c] sm:$0xf]
    %v2604 = vld [vmem:[#allocation11 + $0x310] sm:$0xff]
    %v2605 = vld [vmem:[#allocation11 + $0x318] sm:$0xff]
    %v2606 = vld [vmem:[#allocation11 + $0x320] sm:$0xff]
    %v2607 = vld [vmem:[#allocation11 + $0x328] sm:$0xf]
    %v2608 = vld [vmem:[#allocation11 + $0x32c] sm:$0xff]
    %v2609 = vld [vmem:[#allocation11 + $0x334] sm:$0xff]
    %v2610 = vld [vmem:[#allocation11 + $0x33c] sm:$0xff]
    %v2611 = vld [vmem:[#allocation11 + $0x344] sm:$0xf]
    %v2612 = vld [vmem:[#allocation11 + $0x348] sm:$0xff]
    %v2613 = vld [vmem:[#allocation11 + $0x350] sm:$0xff]
    %v2614 = vld [vmem:[#allocation11 + $0x358] sm:$0xff]
    %v2615 = vld [vmem:[#allocation11 + $0x360] sm:$0xf]
    %v2616 = vld [vmem:[#allocation11 + $0x364] sm:$0xff]
    %v2617 = vld [vmem:[#allocation11 + $0x36c] sm:$0xff]
    %v2618 = vld [vmem:[#allocation11 + $0x374] sm:$0xff]
    %v2619 = vld [vmem:[#allocation11 + $0x37c] sm:$0xf]
    %v2620 = vld [vmem:[#allocation11 + $0x380] sm:$0xff]
    %v2621 = vld [vmem:[#allocation11 + $0x388] sm:$0xff]
    %v2622 = vld [vmem:[#allocation11 + $0x390] sm:$0xff]
    %v2623 = vld [vmem:[#allocation11 + $0x398] sm:$0xf]
    %v2624 = vld [vmem:[#allocation11 + $0x39c] sm:$0xff]
    %v2625 = vld [vmem:[#allocation11 + $0x3a4] sm:$0xff]
    %v2626 = vld [vmem:[#allocation11 + $0x3ac] sm:$0xff]
    %v2627 = vld [vmem:[#allocation11 + $0x3b4] sm:$0xf]
    %v2628 = vld [vmem:[#allocation11 + $0x3b8] sm:$0xff]
    %v2629 = vld [vmem:[#allocation11 + $0x3c0] sm:$0xff]
    %v2630 = vld [vmem:[#allocation11 + $0x3c8] sm:$0xff]
    %v2631 = vld [vmem:[#allocation11 + $0x3d0] sm:$0xf]
    %v2632 = vld [vmem:[#allocation11 + $0x3d4] sm:$0xff]
    %v2633 = vld [vmem:[#allocation11 + $0x3dc] sm:$0xff]
    %v2634 = vld [vmem:[#allocation11 + $0x3e4] sm:$0xff]
    %v2635 = vld [vmem:[#allocation11 + $0x3ec] sm:$0xf]
    %v2636 = vld [vmem:[#allocation11 + $0x3f0] sm:$0xff]
    %v2637 = vld [vmem:[#allocation11 + $0x3f8] sm:$0xff]
    %v2638 = vld [vmem:[#allocation11 + $0x400] sm:$0xff]
    %v2639 = vld [vmem:[#allocation11 + $0x408] sm:$0xf]
    %v2640 = vld [vmem:[#allocation11 + $0x40c] sm:$0xff]
    %v2641 = vld [vmem:[#allocation11 + $0x414] sm:$0xff]
    %v2642 = vld [vmem:[#allocation11 + $0x41c] sm:$0xff]
    %v2643 = vld [vmem:[#allocation11 + $0x424] sm:$0xf]
    %v2644 = vld [vmem:[#allocation11 + $0x428] sm:$0xff]
    %v2645 = vld [vmem:[#allocation11 + $0x430] sm:$0xff]
    %v2646 = vld [vmem:[#allocation11 + $0x438] sm:$0xff]
    %v2647 = vld [vmem:[#allocation11 + $0x440] sm:$0xf]
    %v2648 = vld [vmem:[#allocation11 + $0x444] sm:$0xff]
    %v2649 = vld [vmem:[#allocation11 + $0x44c] sm:$0xff]
    %v2650 = vld [vmem:[#allocation11 + $0x454] sm:$0xff]
    %v2651 = vld [vmem:[#allocation11 + $0x45c] sm:$0xf]
    %v2652 = vld [vmem:[#allocation11 + $0x460] sm:$0xff]
    %v2653 = vld [vmem:[#allocation11 + $0x468] sm:$0xff]
    %v2654 = vld [vmem:[#allocation11 + $0x470] sm:$0xff]
    %v2655 = vld [vmem:[#allocation11 + $0x478] sm:$0xf]
    %v2656 = vld [vmem:[#allocation11 + $0x47c] sm:$0xff]
    %v2657 = vld [vmem:[#allocation11 + $0x484] sm:$0xff]
    %v2658 = vld [vmem:[#allocation11 + $0x48c] sm:$0xff]
    %v2659 = vld [vmem:[#allocation11 + $0x494] sm:$0xf]
    %v2660 = vld [vmem:[#allocation11 + $0x498] sm:$0xff]
    %v2661 = vld [vmem:[#allocation11 + $0x4a0] sm:$0xff]
    %v2662 = vld [vmem:[#allocation11 + $0x4a8] sm:$0xff]
    %v2663 = vld [vmem:[#allocation11 + $0x4b0] sm:$0xf]
    %v2664 = vld [vmem:[#allocation11 + $0x4b4] sm:$0xff]
    %v2665 = vld [vmem:[#allocation11 + $0x4bc] sm:$0xff]
    %v2666 = vld [vmem:[#allocation11 + $0x4c4] sm:$0xff]
    %v2667 = vld [vmem:[#allocation11 + $0x4cc] sm:$0xf]
    %v2668 = vld [vmem:[#allocation11 + $0x4d0] sm:$0xff]
    %v2669 = vld [vmem:[#allocation11 + $0x4d8] sm:$0xff]
    %v2670 = vld [vmem:[#allocation11 + $0x4e0] sm:$0xff]
    %v2671 = vld [vmem:[#allocation11 + $0x4e8] sm:$0xf]
    %v2672 = vld [vmem:[#allocation11 + $0x4ec] sm:$0xff]
    %v2673 = vld [vmem:[#allocation11 + $0x4f4] sm:$0xff]
    %v2674 = vld [vmem:[#allocation11 + $0x4fc] sm:$0xff]
    %v2675 = vld [vmem:[#allocation11 + $0x504] sm:$0xf]
    %v2676 = vld [vmem:[#allocation11 + $0x508] sm:$0xff]
    %v2677 = vld [vmem:[#allocation11 + $0x510] sm:$0xff]
    %v2678 = vld [vmem:[#allocation11 + $0x518] sm:$0xff]
    %v2679 = vld [vmem:[#allocation11 + $0x520] sm:$0xf]
    %v2680 = vld [vmem:[#allocation11 + $0x524] sm:$0xff]
    %v2681 = vld [vmem:[#allocation11 + $0x52c] sm:$0xff]
    %v2682 = vld [vmem:[#allocation11 + $0x534] sm:$0xff]
    %v2683 = vld [vmem:[#allocation11 + $0x53c] sm:$0xf]
    %v2684 = vld [vmem:[#allocation11 + $0x540] sm:$0xff]
    %v2685 = vld [vmem:[#allocation11 + $0x548] sm:$0xff]
    %v2686 = vld [vmem:[#allocation11 + $0x550] sm:$0xff]
    %v2687 = vld [vmem:[#allocation11 + $0x558] sm:$0xf]
    %v2688 = vld [vmem:[#allocation11 + $0x55c] sm:$0xff]
    %v2689 = vld [vmem:[#allocation11 + $0x564] sm:$0xff]
    %v2690 = vld [vmem:[#allocation11 + $0x56c] sm:$0xff]
    %v2691 = vld [vmem:[#allocation11 + $0x574] sm:$0xf]
    %v2692 = vld [vmem:[#allocation11 + $0x578] sm:$0xff]
    %v2693 = vld [vmem:[#allocation11 + $0x580] sm:$0xff]
    %v2694 = vld [vmem:[#allocation11 + $0x588] sm:$0xff]
    %v2695 = vld [vmem:[#allocation11 + $0x590] sm:$0xf]
    %v2696 = vld [vmem:[#allocation11 + $0x594] sm:$0xff]
    %v2697 = vld [vmem:[#allocation11 + $0x59c] sm:$0xff]
    %v2698 = vld [vmem:[#allocation11 + $0x5a4] sm:$0xff]
    %v2699 = vld [vmem:[#allocation11 + $0x5ac] sm:$0xf]
    %v2700 = vld [vmem:[#allocation11 + $0x5b0] sm:$0xff]
    %v2701 = vld [vmem:[#allocation11 + $0x5b8] sm:$0xff]
    %v2702 = vld [vmem:[#allocation11 + $0x5c0] sm:$0xff]
    %v2703 = vld [vmem:[#allocation11 + $0x5c8] sm:$0xf]
    %v2704 = vld [vmem:[#allocation11 + $0x5cc] sm:$0xff]
    %v2705 = vld [vmem:[#allocation11 + $0x5d4] sm:$0xff]
    %v2706 = vld [vmem:[#allocation11 + $0x5dc] sm:$0xff]
    %v2707 = vld [vmem:[#allocation11 + $0x5e4] sm:$0xf]
    %v2708 = vld [vmem:[#allocation11 + $0x5e8] sm:$0xff]
    %v2709 = vld [vmem:[#allocation11 + $0x5f0] sm:$0xff]
    %v2710 = vld [vmem:[#allocation11 + $0x5f8] sm:$0xff]
    %v2711 = vld [vmem:[#allocation11 + $0x600] sm:$0xf]
    %v2712 = vld [vmem:[#allocation11 + $0x604] sm:$0xff]
    %v2713 = vld [vmem:[#allocation11 + $0x60c] sm:$0xff]
    %v2714 = vld [vmem:[#allocation11 + $0x614] sm:$0xff]
    %v2715 = vld [vmem:[#allocation11 + $0x61c] sm:$0xf]
    %v2716 = vld [vmem:[#allocation11 + $0x620] sm:$0xff]
    %v2717 = vld [vmem:[#allocation11 + $0x628] sm:$0xff]
    %v2718 = vld [vmem:[#allocation11 + $0x630] sm:$0xff]
    %v2719 = vld [vmem:[#allocation11 + $0x638] sm:$0xf]
    %v2720 = vld [vmem:[#allocation11 + $0x63c] sm:$0xff]
    %v2721 = vld [vmem:[#allocation11 + $0x644] sm:$0xff]
    %v2722 = vld [vmem:[#allocation11 + $0x64c] sm:$0xff]
    %v2723 = vld [vmem:[#allocation11 + $0x654] sm:$0xf]
    %v2724 = vld [vmem:[#allocation11 + $0x658] sm:$0xff]
    %v2725 = vld [vmem:[#allocation11 + $0x660] sm:$0xff]
    %v2726 = vld [vmem:[#allocation11 + $0x668] sm:$0xff]
    %v2727 = vld [vmem:[#allocation11 + $0x670] sm:$0xf]
    %v2728 = vld [vmem:[#allocation11 + $0x674] sm:$0xff]
    %v2729 = vld [vmem:[#allocation11 + $0x67c] sm:$0xff]
    %v2730 = vld [vmem:[#allocation11 + $0x684] sm:$0xff]
    %v2731 = vld [vmem:[#allocation11 + $0x68c] sm:$0xf]
    %v2732 = vld [vmem:[#allocation11 + $0x690] sm:$0xff]
    %v2733 = vld [vmem:[#allocation11 + $0x698] sm:$0xff]
    %v2734 = vld [vmem:[#allocation11 + $0x6a0] sm:$0xff]
    %v2735 = vld [vmem:[#allocation11 + $0x6a8] sm:$0xf]
    %v2736 = vld [vmem:[#allocation11 + $0x6ac] sm:$0xff]
    %v2737 = vld [vmem:[#allocation11 + $0x6b4] sm:$0xff]
    %v2738 = vld [vmem:[#allocation11 + $0x6bc] sm:$0xff]
    %v2739 = vld [vmem:[#allocation11 + $0x6c4] sm:$0xf]
    %v2740 = vld [vmem:[#allocation11 + $0x6c8] sm:$0xff]
    %v2741 = vld [vmem:[#allocation11 + $0x6d0] sm:$0xff]
    %v2742 = vld [vmem:[#allocation11 + $0x6d8] sm:$0xff]
    %v2743 = vld [vmem:[#allocation11 + $0x6e0] sm:$0xf]
    %v2744 = vld [vmem:[#allocation11 + $0x6e4] sm:$0xff]
    %v2745 = vld [vmem:[#allocation11 + $0x6ec] sm:$0xff]
    %v2746 = vld [vmem:[#allocation11 + $0x6f4] sm:$0xff]
    %v2747 = vld [vmem:[#allocation11 + $0x6fc] sm:$0xf]
    %v2748 = vld [vmem:[%s8] sm:$0xff]
    %v2750 = vlaneseq
    %v2751 = vshrl.u32 %v2750, 7
    %v2752 = vsub.s32 0, %v2751
    %v2753 = vrot.slane %v2748, %v2752
    %v2754 = vlaneseq
    %v2755 = vshrl.u32 %v2754, 7
    %v2756 = vsub.s32 1, %v2755
    %v2757 = vrot.slane %v2748, %v2756
    %v2758 = vlaneseq
    %v2759 = vshrl.u32 %v2758, 7
    %v2760 = vsub.s32 2, %v2759
    %v2761 = vrot.slane %v2748, %v2760
    %v2762 = vlaneseq
    %v2763 = vshrl.u32 %v2762, 7
    %v2764 = vsub.s32 3, %v2763
    %v2765 = vrot.slane %v2748, %v2764
    %v2766 = vlaneseq
    %v2767 = vshrl.u32 %v2766, 7
    %v2768 = vsub.s32 4, %v2767
    %v2769 = vrot.slane %v2748, %v2768
    %v2770 = vlaneseq
    %v2771 = vshrl.u32 %v2770, 7
    %v2772 = vsub.s32 5, %v2771
    %v2773 = vrot.slane %v2748, %v2772
    %v2774 = vlaneseq
    %v2775 = vshrl.u32 %v2774, 7
    %v2776 = vsub.s32 6, %v2775
    %v2777 = vrot.slane %v2748, %v2776
    %v3041 = vunpack.c.l.b16 %v2492
    %v3042 = vunpack.c.h.b16 %v2492
    %v3043 = vunpack.c.l.b16 %v2493
    %v3044 = vunpack.c.h.b16 %v2493
    %v3045 = vunpack.c.l.b16 %v2494
    %v3046 = vunpack.c.h.b16 %v2494
    %v3047 = vunpack.c.l.b16 %v2495
    %v3048 = vunpack.c.l.b16 %v2496
    %v3049 = vunpack.c.h.b16 %v2496
    %v3050 = vunpack.c.l.b16 %v2497
    %v3051 = vunpack.c.h.b16 %v2497
    %v3052 = vunpack.c.l.b16 %v2498
    %v3053 = vunpack.c.h.b16 %v2498
    %v3054 = vunpack.c.l.b16 %v2499
    %v3055 = vunpack.c.l.b16 %v2500
    %v3056 = vunpack.c.h.b16 %v2500
    %v3057 = vunpack.c.l.b16 %v2501
    %v3058 = vunpack.c.h.b16 %v2501
    %v3059 = vunpack.c.l.b16 %v2502
    %v3060 = vunpack.c.h.b16 %v2502
    %v3061 = vunpack.c.l.b16 %v2503
    %v3062 = vunpack.c.l.b16 %v2504
    %v3063 = vunpack.c.h.b16 %v2504
    %v3064 = vunpack.c.l.b16 %v2505
    %v3065 = vunpack.c.h.b16 %v2505
    %v3066 = vunpack.c.l.b16 %v2506
    %v3067 = vunpack.c.h.b16 %v2506
    %v3068 = vunpack.c.l.b16 %v2507
    %v3069 = vunpack.c.l.b16 %v2508
    %v3070 = vunpack.c.h.b16 %v2508
    %v3071 = vunpack.c.l.b16 %v2509
    %v3072 = vunpack.c.h.b16 %v2509
    %v3073 = vunpack.c.l.b16 %v2510
    %v3074 = vunpack.c.h.b16 %v2510
    %v3075 = vunpack.c.l.b16 %v2511
    %v3076 = vunpack.c.l.b16 %v2512
    %v3077 = vunpack.c.h.b16 %v2512
    %v3078 = vunpack.c.l.b16 %v2513
    %v3079 = vunpack.c.h.b16 %v2513
    %v3080 = vunpack.c.l.b16 %v2514
    %v3081 = vunpack.c.h.b16 %v2514
    %v3082 = vunpack.c.l.b16 %v2515
    %v3083 = vunpack.c.l.b16 %v2516
    %v3084 = vunpack.c.h.b16 %v2516
    %v3085 = vunpack.c.l.b16 %v2517
    %v3086 = vunpack.c.h.b16 %v2517
    %v3087 = vunpack.c.l.b16 %v2518
    %v3088 = vunpack.c.h.b16 %v2518
    %v3089 = vunpack.c.l.b16 %v2519
    %v3090 = vunpack.c.l.b16 %v2520
    %v3091 = vunpack.c.h.b16 %v2520
    %v3092 = vunpack.c.l.b16 %v2521
    %v3093 = vunpack.c.h.b16 %v2521
    %v3094 = vunpack.c.l.b16 %v2522
    %v3095 = vunpack.c.h.b16 %v2522
    %v3096 = vunpack.c.l.b16 %v2523
    %v3097 = vunpack.c.l.b16 %v2524
    %v3098 = vunpack.c.h.b16 %v2524
    %v3099 = vunpack.c.l.b16 %v2525
    %v3100 = vunpack.c.h.b16 %v2525
    %v3101 = vunpack.c.l.b16 %v2526
    %v3102 = vunpack.c.h.b16 %v2526
    %v3103 = vunpack.c.l.b16 %v2527
    %v3104 = vunpack.c.l.b16 %v2528
    %v3105 = vunpack.c.h.b16 %v2528
    %v3106 = vunpack.c.l.b16 %v2529
    %v3107 = vunpack.c.h.b16 %v2529
    %v3108 = vunpack.c.l.b16 %v2530
    %v3109 = vunpack.c.h.b16 %v2530
    %v3110 = vunpack.c.l.b16 %v2531
    %v3111 = vunpack.c.l.b16 %v2532
    %v3112 = vunpack.c.h.b16 %v2532
    %v3113 = vunpack.c.l.b16 %v2533
    %v3114 = vunpack.c.h.b16 %v2533
    %v3115 = vunpack.c.l.b16 %v2534
    %v3116 = vunpack.c.h.b16 %v2534
    %v3117 = vunpack.c.l.b16 %v2535
    %v3118 = vunpack.c.l.b16 %v2536
    %v3119 = vunpack.c.h.b16 %v2536
    %v3120 = vunpack.c.l.b16 %v2537
    %v3121 = vunpack.c.h.b16 %v2537
    %v3122 = vunpack.c.l.b16 %v2538
    %v3123 = vunpack.c.h.b16 %v2538
    %v3124 = vunpack.c.l.b16 %v2539
    %v3125 = vunpack.c.l.b16 %v2540
    %v3126 = vunpack.c.h.b16 %v2540
    %v3127 = vunpack.c.l.b16 %v2541
    %v3128 = vunpack.c.h.b16 %v2541
    %v3129 = vunpack.c.l.b16 %v2542
    %v3130 = vunpack.c.h.b16 %v2542
    %v3131 = vunpack.c.l.b16 %v2543
    %v3132 = vunpack.c.l.b16 %v2544
    %v3133 = vunpack.c.h.b16 %v2544
    %v3134 = vunpack.c.l.b16 %v2545
    %v3135 = vunpack.c.h.b16 %v2545
    %v3136 = vunpack.c.l.b16 %v2546
    %v3137 = vunpack.c.h.b16 %v2546
    %v3138 = vunpack.c.l.b16 %v2547
    %v3139 = vunpack.c.l.b16 %v2548
    %v3140 = vunpack.c.h.b16 %v2548
    %v3141 = vunpack.c.l.b16 %v2549
    %v3142 = vunpack.c.h.b16 %v2549
    %v3143 = vunpack.c.l.b16 %v2550
    %v3144 = vunpack.c.h.b16 %v2550
    %v3145 = vunpack.c.l.b16 %v2551
    %v3146 = vunpack.c.l.b16 %v2552
    %v3147 = vunpack.c.h.b16 %v2552
    %v3148 = vunpack.c.l.b16 %v2553
    %v3149 = vunpack.c.h.b16 %v2553
    %v3150 = vunpack.c.l.b16 %v2554
    %v3151 = vunpack.c.h.b16 %v2554
    %v3152 = vunpack.c.l.b16 %v2555
    %v3153 = vunpack.c.l.b16 %v2556
    %v3154 = vunpack.c.h.b16 %v2556
    %v3155 = vunpack.c.l.b16 %v2557
    %v3156 = vunpack.c.h.b16 %v2557
    %v3157 = vunpack.c.l.b16 %v2558
    %v3158 = vunpack.c.h.b16 %v2558
    %v3159 = vunpack.c.l.b16 %v2559
    %v3160 = vunpack.c.l.b16 %v2560
    %v3161 = vunpack.c.h.b16 %v2560
    %v3162 = vunpack.c.l.b16 %v2561
    %v3163 = vunpack.c.h.b16 %v2561
    %v3164 = vunpack.c.l.b16 %v2562
    %v3165 = vunpack.c.h.b16 %v2562
    %v3166 = vunpack.c.l.b16 %v2563
    %v3167 = vunpack.c.l.b16 %v2564
    %v3168 = vunpack.c.h.b16 %v2564
    %v3169 = vunpack.c.l.b16 %v2565
    %v3170 = vunpack.c.h.b16 %v2565
    %v3171 = vunpack.c.l.b16 %v2566
    %v3172 = vunpack.c.h.b16 %v2566
    %v3173 = vunpack.c.l.b16 %v2567
    %v3174 = vunpack.c.l.b16 %v2568
    %v3175 = vunpack.c.h.b16 %v2568
    %v3176 = vunpack.c.l.b16 %v2569
    %v3177 = vunpack.c.h.b16 %v2569
    %v3178 = vunpack.c.l.b16 %v2570
    %v3179 = vunpack.c.h.b16 %v2570
    %v3180 = vunpack.c.l.b16 %v2571
    %v3181 = vunpack.c.l.b16 %v2572
    %v3182 = vunpack.c.h.b16 %v2572
    %v3183 = vunpack.c.l.b16 %v2573
    %v3184 = vunpack.c.h.b16 %v2573
    %v3185 = vunpack.c.l.b16 %v2574
    %v3186 = vunpack.c.h.b16 %v2574
    %v3187 = vunpack.c.l.b16 %v2575
    %v3188 = vunpack.c.l.b16 %v2576
    %v3189 = vunpack.c.h.b16 %v2576
    %v3190 = vunpack.c.l.b16 %v2577
    %v3191 = vunpack.c.h.b16 %v2577
    %v3192 = vunpack.c.l.b16 %v2578
    %v3193 = vunpack.c.h.b16 %v2578
    %v3194 = vunpack.c.l.b16 %v2579
    %v3195 = vunpack.c.l.b16 %v2580
    %v3196 = vunpack.c.h.b16 %v2580
    %v3197 = vunpack.c.l.b16 %v2581
    %v3198 = vunpack.c.h.b16 %v2581
    %v3199 = vunpack.c.l.b16 %v2582
    %v3200 = vunpack.c.h.b16 %v2582
    %v3201 = vunpack.c.l.b16 %v2583
    %v3202 = vunpack.c.l.b16 %v2584
    %v3203 = vunpack.c.h.b16 %v2584
    %v3204 = vunpack.c.l.b16 %v2585
    %v3205 = vunpack.c.h.b16 %v2585
    %v3206 = vunpack.c.l.b16 %v2586
    %v3207 = vunpack.c.h.b16 %v2586
    %v3208 = vunpack.c.l.b16 %v2587
    %v3209 = vunpack.c.l.b16 %v2588
    %v3210 = vunpack.c.h.b16 %v2588
    %v3211 = vunpack.c.l.b16 %v2589
    %v3212 = vunpack.c.h.b16 %v2589
    %v3213 = vunpack.c.l.b16 %v2590
    %v3214 = vunpack.c.h.b16 %v2590
    %v3215 = vunpack.c.l.b16 %v2591
    %v3216 = vunpack.c.l.b16 %v2592
    %v3217 = vunpack.c.h.b16 %v2592
    %v3218 = vunpack.c.l.b16 %v2593
    %v3219 = vunpack.c.h.b16 %v2593
    %v3220 = vunpack.c.l.b16 %v2594
    %v3221 = vunpack.c.h.b16 %v2594
    %v3222 = vunpack.c.l.b16 %v2595
    %v3223 = vunpack.c.l.b16 %v2596
    %v3224 = vunpack.c.h.b16 %v2596
    %v3225 = vunpack.c.l.b16 %v2597
    %v3226 = vunpack.c.h.b16 %v2597
    %v3227 = vunpack.c.l.b16 %v2598
    %v3228 = vunpack.c.h.b16 %v2598
    %v3229 = vunpack.c.l.b16 %v2599
    %v3230 = vunpack.c.l.b16 %v2600
    %v3231 = vunpack.c.h.b16 %v2600
    %v3232 = vunpack.c.l.b16 %v2601
    %v3233 = vunpack.c.h.b16 %v2601
    %v3234 = vunpack.c.l.b16 %v2602
    %v3235 = vunpack.c.h.b16 %v2602
    %v3236 = vunpack.c.l.b16 %v2603
    %v3237 = vunpack.c.l.b16 %v2604
    %v3238 = vunpack.c.h.b16 %v2604
    %v3239 = vunpack.c.l.b16 %v2605
    %v3240 = vunpack.c.h.b16 %v2605
    %v3241 = vunpack.c.l.b16 %v2606
    %v3242 = vunpack.c.h.b16 %v2606
    %v3243 = vunpack.c.l.b16 %v2607
    %v3244 = vunpack.c.l.b16 %v2608
    %v3245 = vunpack.c.h.b16 %v2608
    %v3246 = vunpack.c.l.b16 %v2609
    %v3247 = vunpack.c.h.b16 %v2609
    %v3248 = vunpack.c.l.b16 %v2610
    %v3249 = vunpack.c.h.b16 %v2610
    %v3250 = vunpack.c.l.b16 %v2611
    %v3251 = vunpack.c.l.b16 %v2612
    %v3252 = vunpack.c.h.b16 %v2612
    %v3253 = vunpack.c.l.b16 %v2613
    %v3254 = vunpack.c.h.b16 %v2613
    %v3255 = vunpack.c.l.b16 %v2614
    %v3256 = vunpack.c.h.b16 %v2614
    %v3257 = vunpack.c.l.b16 %v2615
    %v3258 = vunpack.c.l.b16 %v2616
    %v3259 = vunpack.c.h.b16 %v2616
    %v3260 = vunpack.c.l.b16 %v2617
    %v3261 = vunpack.c.h.b16 %v2617
    %v3262 = vunpack.c.l.b16 %v2618
    %v3263 = vunpack.c.h.b16 %v2618
    %v3264 = vunpack.c.l.b16 %v2619
    %v3265 = vunpack.c.l.b16 %v2620
    %v3266 = vunpack.c.h.b16 %v2620
    %v3267 = vunpack.c.l.b16 %v2621
    %v3268 = vunpack.c.h.b16 %v2621
    %v3269 = vunpack.c.l.b16 %v2622
    %v3270 = vunpack.c.h.b16 %v2622
    %v3271 = vunpack.c.l.b16 %v2623
    %v3272 = vunpack.c.l.b16 %v2624
    %v3273 = vunpack.c.h.b16 %v2624
    %v3274 = vunpack.c.l.b16 %v2625
    %v3275 = vunpack.c.h.b16 %v2625
    %v3276 = vunpack.c.l.b16 %v2626
    %v3277 = vunpack.c.h.b16 %v2626
    %v3278 = vunpack.c.l.b16 %v2627
    %v3279 = vunpack.c.l.b16 %v2628
    %v3280 = vunpack.c.h.b16 %v2628
    %v3281 = vunpack.c.l.b16 %v2629
    %v3282 = vunpack.c.h.b16 %v2629
    %v3283 = vunpack.c.l.b16 %v2630
    %v3284 = vunpack.c.h.b16 %v2630
    %v3285 = vunpack.c.l.b16 %v2631
    %v3286 = vunpack.c.l.b16 %v2632
    %v3287 = vunpack.c.h.b16 %v2632
    %v3288 = vunpack.c.l.b16 %v2633
    %v3289 = vunpack.c.h.b16 %v2633
    %v3290 = vunpack.c.l.b16 %v2634
    %v3291 = vunpack.c.h.b16 %v2634
    %v3292 = vunpack.c.l.b16 %v2635
    %v3293 = vunpack.c.l.b16 %v2636
    %v3294 = vunpack.c.h.b16 %v2636
    %v3295 = vunpack.c.l.b16 %v2637
    %v3296 = vunpack.c.h.b16 %v2637
    %v3297 = vunpack.c.l.b16 %v2638
    %v3298 = vunpack.c.h.b16 %v2638
    %v3299 = vunpack.c.l.b16 %v2639
    %v3300 = vunpack.c.l.b16 %v2640
    %v3301 = vunpack.c.h.b16 %v2640
    %v3302 = vunpack.c.l.b16 %v2641
    %v3303 = vunpack.c.h.b16 %v2641
    %v3304 = vunpack.c.l.b16 %v2642
    %v3305 = vunpack.c.h.b16 %v2642
    %v3306 = vunpack.c.l.b16 %v2643
    %v3307 = vunpack.c.l.b16 %v2644
    %v3308 = vunpack.c.h.b16 %v2644
    %v3309 = vunpack.c.l.b16 %v2645
    %v3310 = vunpack.c.h.b16 %v2645
    %v3311 = vunpack.c.l.b16 %v2646
    %v3312 = vunpack.c.h.b16 %v2646
    %v3313 = vunpack.c.l.b16 %v2647
    %v3314 = vunpack.c.l.b16 %v2648
    %v3315 = vunpack.c.h.b16 %v2648
    %v3316 = vunpack.c.l.b16 %v2649
    %v3317 = vunpack.c.h.b16 %v2649
    %v3318 = vunpack.c.l.b16 %v2650
    %v3319 = vunpack.c.h.b16 %v2650
    %v3320 = vunpack.c.l.b16 %v2651
    %v3321 = vunpack.c.l.b16 %v2652
    %v3322 = vunpack.c.h.b16 %v2652
    %v3323 = vunpack.c.l.b16 %v2653
    %v3324 = vunpack.c.h.b16 %v2653
    %v3325 = vunpack.c.l.b16 %v2654
    %v3326 = vunpack.c.h.b16 %v2654
    %v3327 = vunpack.c.l.b16 %v2655
    %v3328 = vunpack.c.l.b16 %v2656
    %v3329 = vunpack.c.h.b16 %v2656
    %v3330 = vunpack.c.l.b16 %v2657
    %v3331 = vunpack.c.h.b16 %v2657
    %v3332 = vunpack.c.l.b16 %v2658
    %v3333 = vunpack.c.h.b16 %v2658
    %v3334 = vunpack.c.l.b16 %v2659
    %v3335 = vunpack.c.l.b16 %v2660
    %v3336 = vunpack.c.h.b16 %v2660
    %v3337 = vunpack.c.l.b16 %v2661
    %v3338 = vunpack.c.h.b16 %v2661
    %v3339 = vunpack.c.l.b16 %v2662
    %v3340 = vunpack.c.h.b16 %v2662
    %v3341 = vunpack.c.l.b16 %v2663
    %v3342 = vunpack.c.l.b16 %v2664
    %v3343 = vunpack.c.h.b16 %v2664
    %v3344 = vunpack.c.l.b16 %v2665
    %v3345 = vunpack.c.h.b16 %v2665
    %v3346 = vunpack.c.l.b16 %v2666
    %v3347 = vunpack.c.h.b16 %v2666
    %v3348 = vunpack.c.l.b16 %v2667
    %v3349 = vunpack.c.l.b16 %v2668
    %v3350 = vunpack.c.h.b16 %v2668
    %v3351 = vunpack.c.l.b16 %v2669
    %v3352 = vunpack.c.h.b16 %v2669
    %v3353 = vunpack.c.l.b16 %v2670
    %v3354 = vunpack.c.h.b16 %v2670
    %v3355 = vunpack.c.l.b16 %v2671
    %v3356 = vunpack.c.l.b16 %v2672
    %v3357 = vunpack.c.h.b16 %v2672
    %v3358 = vunpack.c.l.b16 %v2673
    %v3359 = vunpack.c.h.b16 %v2673
    %v3360 = vunpack.c.l.b16 %v2674
    %v3361 = vunpack.c.h.b16 %v2674
    %v3362 = vunpack.c.l.b16 %v2675
    %v3363 = vunpack.c.l.b16 %v2676
    %v3364 = vunpack.c.h.b16 %v2676
    %v3365 = vunpack.c.l.b16 %v2677
    %v3366 = vunpack.c.h.b16 %v2677
    %v3367 = vunpack.c.l.b16 %v2678
    %v3368 = vunpack.c.h.b16 %v2678
    %v3369 = vunpack.c.l.b16 %v2679
    %v3370 = vunpack.c.l.b16 %v2680
    %v3371 = vunpack.c.h.b16 %v2680
    %v3372 = vunpack.c.l.b16 %v2681
    %v3373 = vunpack.c.h.b16 %v2681
    %v3374 = vunpack.c.l.b16 %v2682
    %v3375 = vunpack.c.h.b16 %v2682
    %v3376 = vunpack.c.l.b16 %v2683
    %v3377 = vunpack.c.l.b16 %v2684
    %v3378 = vunpack.c.h.b16 %v2684
    %v3379 = vunpack.c.l.b16 %v2685
    %v3380 = vunpack.c.h.b16 %v2685
    %v3381 = vunpack.c.l.b16 %v2686
    %v3382 = vunpack.c.h.b16 %v2686
    %v3383 = vunpack.c.l.b16 %v2687
    %v3384 = vunpack.c.l.b16 %v2688
    %v3385 = vunpack.c.h.b16 %v2688
    %v3386 = vunpack.c.l.b16 %v2689
    %v3387 = vunpack.c.h.b16 %v2689
    %v3388 = vunpack.c.l.b16 %v2690
    %v3389 = vunpack.c.h.b16 %v2690
    %v3390 = vunpack.c.l.b16 %v2691
    %v3391 = vunpack.c.l.b16 %v2692
    %v3392 = vunpack.c.h.b16 %v2692
    %v3393 = vunpack.c.l.b16 %v2693
    %v3394 = vunpack.c.h.b16 %v2693
    %v3395 = vunpack.c.l.b16 %v2694
    %v3396 = vunpack.c.h.b16 %v2694
    %v3397 = vunpack.c.l.b16 %v2695
    %v3398 = vunpack.c.l.b16 %v2696
    %v3399 = vunpack.c.h.b16 %v2696
    %v3400 = vunpack.c.l.b16 %v2697
    %v3401 = vunpack.c.h.b16 %v2697
    %v3402 = vunpack.c.l.b16 %v2698
    %v3403 = vunpack.c.h.b16 %v2698
    %v3404 = vunpack.c.l.b16 %v2699
    %v3405 = vunpack.c.l.b16 %v2700
    %v3406 = vunpack.c.h.b16 %v2700
    %v3407 = vunpack.c.l.b16 %v2701
    %v3408 = vunpack.c.h.b16 %v2701
    %v3409 = vunpack.c.l.b16 %v2702
    %v3410 = vunpack.c.h.b16 %v2702
    %v3411 = vunpack.c.l.b16 %v2703
    %v3412 = vunpack.c.l.b16 %v2704
    %v3413 = vunpack.c.h.b16 %v2704
    %v3414 = vunpack.c.l.b16 %v2705
    %v3415 = vunpack.c.h.b16 %v2705
    %v3416 = vunpack.c.l.b16 %v2706
    %v3417 = vunpack.c.h.b16 %v2706
    %v3418 = vunpack.c.l.b16 %v2707
    %v3419 = vunpack.c.l.b16 %v2708
    %v3420 = vunpack.c.h.b16 %v2708
    %v3421 = vunpack.c.l.b16 %v2709
    %v3422 = vunpack.c.h.b16 %v2709
    %v3423 = vunpack.c.l.b16 %v2710
    %v3424 = vunpack.c.h.b16 %v2710
    %v3425 = vunpack.c.l.b16 %v2711
    %v3426 = vunpack.c.l.b16 %v2712
    %v3427 = vunpack.c.h.b16 %v2712
    %v3428 = vunpack.c.l.b16 %v2713
    %v3429 = vunpack.c.h.b16 %v2713
    %v3430 = vunpack.c.l.b16 %v2714
    %v3431 = vunpack.c.h.b16 %v2714
    %v3432 = vunpack.c.l.b16 %v2715
    %v3433 = vunpack.c.l.b16 %v2716
    %v3434 = vunpack.c.h.b16 %v2716
    %v3435 = vunpack.c.l.b16 %v2717
    %v3436 = vunpack.c.h.b16 %v2717
    %v3437 = vunpack.c.l.b16 %v2718
    %v3438 = vunpack.c.h.b16 %v2718
    %v3439 = vunpack.c.l.b16 %v2719
    %v3440 = vunpack.c.l.b16 %v2720
    %v3441 = vunpack.c.h.b16 %v2720
    %v3442 = vunpack.c.l.b16 %v2721
    %v3443 = vunpack.c.h.b16 %v2721
    %v3444 = vunpack.c.l.b16 %v2722
    %v3445 = vunpack.c.h.b16 %v2722
    %v3446 = vunpack.c.l.b16 %v2723
    %v3447 = vunpack.c.l.b16 %v2724
    %v3448 = vunpack.c.h.b16 %v2724
    %v3449 = vunpack.c.l.b16 %v2725
    %v3450 = vunpack.c.h.b16 %v2725
    %v3451 = vunpack.c.l.b16 %v2726
    %v3452 = vunpack.c.h.b16 %v2726
    %v3453 = vunpack.c.l.b16 %v2727
    %v3454 = vunpack.c.l.b16 %v2728
    %v3455 = vunpack.c.h.b16 %v2728
    %v3456 = vunpack.c.l.b16 %v2729
    %v3457 = vunpack.c.h.b16 %v2729
    %v3458 = vunpack.c.l.b16 %v2730
    %v3459 = vunpack.c.h.b16 %v2730
    %v3460 = vunpack.c.l.b16 %v2731
    %v3461 = vunpack.c.l.b16 %v2732
    %v3462 = vunpack.c.h.b16 %v2732
    %v3463 = vunpack.c.l.b16 %v2733
    %v3464 = vunpack.c.h.b16 %v2733
    %v3465 = vunpack.c.l.b16 %v2734
    %v3466 = vunpack.c.h.b16 %v2734
    %v3467 = vunpack.c.l.b16 %v2735
    %v3468 = vunpack.c.l.b16 %v2736
    %v3469 = vunpack.c.h.b16 %v2736
    %v3470 = vunpack.c.l.b16 %v2737
    %v3471 = vunpack.c.h.b16 %v2737
    %v3472 = vunpack.c.l.b16 %v2738
    %v3473 = vunpack.c.h.b16 %v2738
    %v3474 = vunpack.c.l.b16 %v2739
    %v3475 = vunpack.c.l.b16 %v2740
    %v3476 = vunpack.c.h.b16 %v2740
    %v3477 = vunpack.c.l.b16 %v2741
    %v3478 = vunpack.c.h.b16 %v2741
    %v3479 = vunpack.c.l.b16 %v2742
    %v3480 = vunpack.c.h.b16 %v2742
    %v3481 = vunpack.c.l.b16 %v2743
    %v3482 = vunpack.c.l.b16 %v2744
    %v3483 = vunpack.c.h.b16 %v2744
    %v3484 = vunpack.c.l.b16 %v2745
    %v3485 = vunpack.c.h.b16 %v2745
    %v3486 = vunpack.c.l.b16 %v2746
    %v3487 = vunpack.c.h.b16 %v2746
    %v3488 = vunpack.c.l.b16 %v2747
    %v3489 = vpack.c.b16 %v3048, %v3041
    %v3490 = vpack.c.b16 %v3049, %v3042
    %v3491 = vpack.c.b16 %v3050, %v3043
    %v3492 = vpack.c.b16 %v3051, %v3044
    %v3493 = vpack.c.b16 %v3052, %v3045
    %v3494 = vpack.c.b16 %v3053, %v3046
    %v3495 = vpack.c.b16 %v3054, %v3047
    %v3496 = vpack.c.b16 %v3062, %v3055
    %v3497 = vpack.c.b16 %v3063, %v3056
    %v3498 = vpack.c.b16 %v3064, %v3057
    %v3499 = vpack.c.b16 %v3065, %v3058
    %v3500 = vpack.c.b16 %v3066, %v3059
    %v3501 = vpack.c.b16 %v3067, %v3060
    %v3502 = vpack.c.b16 %v3068, %v3061
    %v3503 = vpack.c.b16 %v3076, %v3069
    %v3504 = vpack.c.b16 %v3077, %v3070
    %v3505 = vpack.c.b16 %v3078, %v3071
    %v3506 = vpack.c.b16 %v3079, %v3072
    %v3507 = vpack.c.b16 %v3080, %v3073
    %v3508 = vpack.c.b16 %v3081, %v3074
    %v3509 = vpack.c.b16 %v3082, %v3075
    %v3510 = vpack.c.b16 %v3090, %v3083
    %v3511 = vpack.c.b16 %v3091, %v3084
    %v3512 = vpack.c.b16 %v3092, %v3085
    %v3513 = vpack.c.b16 %v3093, %v3086
    %v3514 = vpack.c.b16 %v3094, %v3087
    %v3515 = vpack.c.b16 %v3095, %v3088
    %v3516 = vpack.c.b16 %v3096, %v3089
    %v3517 = vpack.c.b16 %v3104, %v3097
    %v3518 = vpack.c.b16 %v3105, %v3098
    %v3519 = vpack.c.b16 %v3106, %v3099
    %v3520 = vpack.c.b16 %v3107, %v3100
    %v3521 = vpack.c.b16 %v3108, %v3101
    %v3522 = vpack.c.b16 %v3109, %v3102
    %v3523 = vpack.c.b16 %v3110, %v3103
    %v3524 = vpack.c.b16 %v3118, %v3111
    %v3525 = vpack.c.b16 %v3119, %v3112
    %v3526 = vpack.c.b16 %v3120, %v3113
    %v3527 = vpack.c.b16 %v3121, %v3114
    %v3528 = vpack.c.b16 %v3122, %v3115
    %v3529 = vpack.c.b16 %v3123, %v3116
    %v3530 = vpack.c.b16 %v3124, %v3117
    %v3531 = vpack.c.b16 %v3132, %v3125
    %v3532 = vpack.c.b16 %v3133, %v3126
    %v3533 = vpack.c.b16 %v3134, %v3127
    %v3534 = vpack.c.b16 %v3135, %v3128
    %v3535 = vpack.c.b16 %v3136, %v3129
    %v3536 = vpack.c.b16 %v3137, %v3130
    %v3537 = vpack.c.b16 %v3138, %v3131
    %v3538 = vpack.c.b16 %v3146, %v3139
    %v3539 = vpack.c.b16 %v3147, %v3140
    %v3540 = vpack.c.b16 %v3148, %v3141
    %v3541 = vpack.c.b16 %v3149, %v3142
    %v3542 = vpack.c.b16 %v3150, %v3143
    %v3543 = vpack.c.b16 %v3151, %v3144
    %v3544 = vpack.c.b16 %v3152, %v3145
    %v3545 = vpack.c.b16 %v3160, %v3153
    %v3546 = vpack.c.b16 %v3161, %v3154
    %v3547 = vpack.c.b16 %v3162, %v3155
    %v3548 = vpack.c.b16 %v3163, %v3156
    %v3549 = vpack.c.b16 %v3164, %v3157
    %v3550 = vpack.c.b16 %v3165, %v3158
    %v3551 = vpack.c.b16 %v3166, %v3159
    %v3552 = vpack.c.b16 %v3174, %v3167
    %v3553 = vpack.c.b16 %v3175, %v3168
    %v3554 = vpack.c.b16 %v3176, %v3169
    %v3555 = vpack.c.b16 %v3177, %v3170
    %v3556 = vpack.c.b16 %v3178, %v3171
    %v3557 = vpack.c.b16 %v3179, %v3172
    %v3558 = vpack.c.b16 %v3180, %v3173
    %v3559 = vpack.c.b16 %v3188, %v3181
    %v3560 = vpack.c.b16 %v3189, %v3182
    %v3561 = vpack.c.b16 %v3190, %v3183
    %v3562 = vpack.c.b16 %v3191, %v3184
    %v3563 = vpack.c.b16 %v3192, %v3185
    %v3564 = vpack.c.b16 %v3193, %v3186
    %v3565 = vpack.c.b16 %v3194, %v3187
    %v3566 = vpack.c.b16 %v3202, %v3195
    %v3567 = vpack.c.b16 %v3203, %v3196
    %v3568 = vpack.c.b16 %v3204, %v3197
    %v3569 = vpack.c.b16 %v3205, %v3198
    %v3570 = vpack.c.b16 %v3206, %v3199
    %v3571 = vpack.c.b16 %v3207, %v3200
    %v3572 = vpack.c.b16 %v3208, %v3201
    %v3573 = vpack.c.b16 %v3216, %v3209
    %v3574 = vpack.c.b16 %v3217, %v3210
    %v3575 = vpack.c.b16 %v3218, %v3211
    %v3576 = vpack.c.b16 %v3219, %v3212
    %v3577 = vpack.c.b16 %v3220, %v3213
    %v3578 = vpack.c.b16 %v3221, %v3214
    %v3579 = vpack.c.b16 %v3222, %v3215
    %v3580 = vpack.c.b16 %v3230, %v3223
    %v3581 = vpack.c.b16 %v3231, %v3224
    %v3582 = vpack.c.b16 %v3232, %v3225
    %v3583 = vpack.c.b16 %v3233, %v3226
    %v3584 = vpack.c.b16 %v3234, %v3227
    %v3585 = vpack.c.b16 %v3235, %v3228
    %v3586 = vpack.c.b16 %v3236, %v3229
    %v3587 = vpack.c.b16 %v3244, %v3237
    %v3588 = vpack.c.b16 %v3245, %v3238
    %v3589 = vpack.c.b16 %v3246, %v3239
    %v3590 = vpack.c.b16 %v3247, %v3240
    %v3591 = vpack.c.b16 %v3248, %v3241
    %v3592 = vpack.c.b16 %v3249, %v3242
    %v3593 = vpack.c.b16 %v3250, %v3243
    %v3594 = vpack.c.b16 %v3258, %v3251
    %v3595 = vpack.c.b16 %v3259, %v3252
    %v3596 = vpack.c.b16 %v3260, %v3253
    %v3597 = vpack.c.b16 %v3261, %v3254
    %v3598 = vpack.c.b16 %v3262, %v3255
    %v3599 = vpack.c.b16 %v3263, %v3256
    %v3600 = vpack.c.b16 %v3264, %v3257
    %v3601 = vpack.c.b16 %v3272, %v3265
    %v3602 = vpack.c.b16 %v3273, %v3266
    %v3603 = vpack.c.b16 %v3274, %v3267
    %v3604 = vpack.c.b16 %v3275, %v3268
    %v3605 = vpack.c.b16 %v3276, %v3269
    %v3606 = vpack.c.b16 %v3277, %v3270
    %v3607 = vpack.c.b16 %v3278, %v3271
    %v3608 = vpack.c.b16 %v3286, %v3279
    %v3609 = vpack.c.b16 %v3287, %v3280
    %v3610 = vpack.c.b16 %v3288, %v3281
    %v3611 = vpack.c.b16 %v3289, %v3282
    %v3612 = vpack.c.b16 %v3290, %v3283
    %v3613 = vpack.c.b16 %v3291, %v3284
    %v3614 = vpack.c.b16 %v3292, %v3285
    %v3615 = vpack.c.b16 %v3300, %v3293
    %v3616 = vpack.c.b16 %v3301, %v3294
    %v3617 = vpack.c.b16 %v3302, %v3295
    %v3618 = vpack.c.b16 %v3303, %v3296
    %v3619 = vpack.c.b16 %v3304, %v3297
    %v3620 = vpack.c.b16 %v3305, %v3298
    %v3621 = vpack.c.b16 %v3306, %v3299
    %v3622 = vpack.c.b16 %v3314, %v3307
    %v3623 = vpack.c.b16 %v3315, %v3308
    %v3624 = vpack.c.b16 %v3316, %v3309
    %v3625 = vpack.c.b16 %v3317, %v3310
    %v3626 = vpack.c.b16 %v3318, %v3311
    %v3627 = vpack.c.b16 %v3319, %v3312
    %v3628 = vpack.c.b16 %v3320, %v3313
    %v3629 = vpack.c.b16 %v3328, %v3321
    %v3630 = vpack.c.b16 %v3329, %v3322
    %v3631 = vpack.c.b16 %v3330, %v3323
    %v3632 = vpack.c.b16 %v3331, %v3324
    %v3633 = vpack.c.b16 %v3332, %v3325
    %v3634 = vpack.c.b16 %v3333, %v3326
    %v3635 = vpack.c.b16 %v3334, %v3327
    %v3636 = vpack.c.b16 %v3342, %v3335
    %v3637 = vpack.c.b16 %v3343, %v3336
    %v3638 = vpack.c.b16 %v3344, %v3337
    %v3639 = vpack.c.b16 %v3345, %v3338
    %v3640 = vpack.c.b16 %v3346, %v3339
    %v3641 = vpack.c.b16 %v3347, %v3340
    %v3642 = vpack.c.b16 %v3348, %v3341
    %v3643 = vpack.c.b16 %v3356, %v3349
    %v3644 = vpack.c.b16 %v3357, %v3350
    %v3645 = vpack.c.b16 %v3358, %v3351
    %v3646 = vpack.c.b16 %v3359, %v3352
    %v3647 = vpack.c.b16 %v3360, %v3353
    %v3648 = vpack.c.b16 %v3361, %v3354
    %v3649 = vpack.c.b16 %v3362, %v3355
    %v3650 = vpack.c.b16 %v3370, %v3363
    %v3651 = vpack.c.b16 %v3371, %v3364
    %v3652 = vpack.c.b16 %v3372, %v3365
    %v3653 = vpack.c.b16 %v3373, %v3366
    %v3654 = vpack.c.b16 %v3374, %v3367
    %v3655 = vpack.c.b16 %v3375, %v3368
    %v3656 = vpack.c.b16 %v3376, %v3369
    %v3657 = vpack.c.b16 %v3384, %v3377
    %v3658 = vpack.c.b16 %v3385, %v3378
    %v3659 = vpack.c.b16 %v3386, %v3379
    %v3660 = vpack.c.b16 %v3387, %v3380
    %v3661 = vpack.c.b16 %v3388, %v3381
    %v3662 = vpack.c.b16 %v3389, %v3382
    %v3663 = vpack.c.b16 %v3390, %v3383
    %v3664 = vpack.c.b16 %v3398, %v3391
    %v3665 = vpack.c.b16 %v3399, %v3392
    %v3666 = vpack.c.b16 %v3400, %v3393
    %v3667 = vpack.c.b16 %v3401, %v3394
    %v3668 = vpack.c.b16 %v3402, %v3395
    %v3669 = vpack.c.b16 %v3403, %v3396
    %v3670 = vpack.c.b16 %v3404, %v3397
    %v3671 = vpack.c.b16 %v3412, %v3405
    %v3672 = vpack.c.b16 %v3413, %v3406
    %v3673 = vpack.c.b16 %v3414, %v3407
    %v3674 = vpack.c.b16 %v3415, %v3408
    %v3675 = vpack.c.b16 %v3416, %v3409
    %v3676 = vpack.c.b16 %v3417, %v3410
    %v3677 = vpack.c.b16 %v3418, %v3411
    %v3678 = vpack.c.b16 %v3426, %v3419
    %v3679 = vpack.c.b16 %v3427, %v3420
    %v3680 = vpack.c.b16 %v3428, %v3421
    %v3681 = vpack.c.b16 %v3429, %v3422
    %v3682 = vpack.c.b16 %v3430, %v3423
    %v3683 = vpack.c.b16 %v3431, %v3424
    %v3684 = vpack.c.b16 %v3432, %v3425
    %v3685 = vpack.c.b16 %v3440, %v3433
    %v3686 = vpack.c.b16 %v3441, %v3434
    %v3687 = vpack.c.b16 %v3442, %v3435
    %v3688 = vpack.c.b16 %v3443, %v3436
    %v3689 = vpack.c.b16 %v3444, %v3437
    %v3690 = vpack.c.b16 %v3445, %v3438
    %v3691 = vpack.c.b16 %v3446, %v3439
    %v3692 = vpack.c.b16 %v3454, %v3447
    %v3693 = vpack.c.b16 %v3455, %v3448
    %v3694 = vpack.c.b16 %v3456, %v3449
    %v3695 = vpack.c.b16 %v3457, %v3450
    %v3696 = vpack.c.b16 %v3458, %v3451
    %v3697 = vpack.c.b16 %v3459, %v3452
    %v3698 = vpack.c.b16 %v3460, %v3453
    %v3699 = vpack.c.b16 %v3468, %v3461
    %v3700 = vpack.c.b16 %v3469, %v3462
    %v3701 = vpack.c.b16 %v3470, %v3463
    %v3702 = vpack.c.b16 %v3471, %v3464
    %v3703 = vpack.c.b16 %v3472, %v3465
    %v3704 = vpack.c.b16 %v3473, %v3466
    %v3705 = vpack.c.b16 %v3474, %v3467
    %v3706 = vpack.c.b16 %v3482, %v3475
    %v3707 = vpack.c.b16 %v3483, %v3476
    %v3708 = vpack.c.b16 %v3484, %v3477
    %v3709 = vpack.c.b16 %v3485, %v3478
    %v3710 = vpack.c.b16 %v3486, %v3479
    %v3711 = vpack.c.b16 %v3487, %v3480
    %v3712 = vpack.c.b16 %v3488, %v3481
    %3937 = vmatprep.subr.bf16.mxu0 %v3490
    %3938 = vmatpush1.bf16.msra.mxu0 %v3489
    %3939 = vmatprep.subr.bf16.mxu0 %v3497
    %3940 = vmatpush1.bf16.msra.mxu0 %v3496
    %3941 = vmatprep.subr.bf16.mxu0 %v3504
    %3942 = vmatpush1.bf16.msra.mxu0 %v3503
    %3943 = vmatprep.subr.bf16.mxu0 %v3511
    %3944 = vmatpush1.bf16.msra.mxu0 %v3510
    %3945 = vmatprep.subr.bf16.mxu0 %v3518
    %3946 = vmatpush1.bf16.msra.mxu0 %v3517
    %3947 = vmatprep.subr.bf16.mxu0 %v3525
    %3948 = vmatpush1.bf16.msra.mxu0 %v3524
    %3949 = vmatprep.subr.bf16.mxu0 %v3532
    %3950 = vmatpush1.bf16.msra.mxu0 %v3531
    %3951 = vmatprep.subr.bf16.mxu0 %v3539
    %3952 = vmatpush1.bf16.msra.mxu0 %v3538
    %3953 = vmatprep.subr.bf16.mxu0 %v3546
    %3954 = vmatpush1.bf16.msra.mxu0 %v3545
    %3955 = vmatprep.subr.bf16.mxu0 %v3553
    %3956 = vmatpush1.bf16.msra.mxu0 %v3552
    %3957 = vmatprep.subr.bf16.mxu0 %v3560
    %3958 = vmatpush1.bf16.msra.mxu0 %v3559
    %3959 = vmatprep.subr.bf16.mxu0 %v3567
    %3960 = vmatpush1.bf16.msra.mxu0 %v3566
    %3961 = vmatprep.subr.bf16.mxu0 %v3574
    %3962 = vmatpush1.bf16.msra.mxu0 %v3573
    %3963 = vmatprep.subr.bf16.mxu0 %v3581
    %3964 = vmatpush1.bf16.msra.mxu0 %v3580
    %3965 = vmatprep.subr.bf16.mxu0 %v3588
    %3966 = vmatpush1.bf16.msra.mxu0 %v3587
    %3967 = vmatprep.subr.bf16.mxu0 %v3595
    %3968 = vmatpush1.bf16.msra.mxu0 %v3594
    %3969 = vmatprep.mubr.bf16.mxu0 %v2489
    %3970 = vmatmul.mubr.bf16.gmra.mrb[0].mxu0 %v2488
    %v3971 = vpop.f32.mrb[0].mxu0
    %v3972 = vadd.f32 %v2753, %v3971
    %v3973 = vpop.f32.mrb[0].mxu0
    %v3974 = vadd.f32 %v2757, %v3973
    %v3975 = vpop.f32.mrb[0].mxu0
    %v3976 = vpop.f32.mrb[0].mxu0
    %3977 = vdwg.mxu0
    %3978 = vmatprep.subr.bf16.mxu0 %v3602
    %3979 = vmatpush1.bf16.msra.mxu0 %v3601
    %3980 = vmatprep.subr.bf16.mxu0 %v3609
    %3981 = vmatpush1.bf16.msra.mxu0 %v3608
    %3982 = vmatprep.subr.bf16.mxu0 %v3616
    %3983 = vmatpush1.bf16.msra.mxu0 %v3615
    %3984 = vmatprep.subr.bf16.mxu0 %v3623
    %3985 = vmatpush1.bf16.msra.mxu0 %v3622
    %3986 = vmatprep.subr.bf16.mxu0 %v3630
    %3987 = vmatpush1.bf16.msra.mxu0 %v3629
    %3988 = vmatprep.subr.bf16.mxu0 %v3637
    %3989 = vmatpush1.bf16.msra.mxu0 %v3636
    %3990 = vmatprep.subr.bf16.mxu0 %v3644
    %3991 = vmatpush1.bf16.msra.mxu0 %v3643
    %3992 = vmatprep.subr.bf16.mxu0 %v3651
    %3993 = vmatpush1.bf16.msra.mxu0 %v3650
    %3994 = vmatprep.subr.bf16.mxu0 %v3658
    %3995 = vmatpush1.bf16.msra.mxu0 %v3657
    %3996 = vmatprep.subr.bf16.mxu0 %v3665
    %3997 = vmatpush1.bf16.msra.mxu0 %v3664
    %3998 = vmatprep.subr.bf16.mxu0 %v3672
    %3999 = vmatpush1.bf16.msra.mxu0 %v3671
    %4000 = vmatprep.subr.bf16.mxu0 %v3679
    %4001 = vmatpush1.bf16.msra.mxu0 %v3678
    %4002 = vmatprep.subr.bf16.mxu0 %v3686
    %4003 = vmatpush1.bf16.msra.mxu0 %v3685
    %4004 = vmatprep.subr.bf16.mxu0 %v3693
    %4005 = vmatpush1.bf16.msra.mxu0 %v3692
    %4006 = vmatprep.subr.bf16.mxu0 %v3700
    %4007 = vmatpush1.bf16.msra.mxu0 %v3699
    %4008 = vmatprep.subr.bf16.mxu0 %v3707
    %4009 = vmatpush1.bf16.msra.mxu0 %v3706
    %4010 = vmatprep.mubr.bf16.mxu0 %v2491
    %4011 = vmatmul.mubr.bf16.gmra.mrb[0].mxu0 %v2490
    %v4012 = vpop.f32.mrb[0].mxu0
    %v4013 = vadd.f32 %v3972, %v4012
    %v4014 = vpop.f32.mrb[0].mxu0
    %v4015 = vadd.f32 %v3974, %v4014
    %v4016 = vpop.f32.mrb[0].mxu0
    %v4017 = vpop.f32.mrb[0].mxu0
    %4018 = vdwg.mxu0
    %4019 = vmatprep.subr.bf16.mxu0 %v3492
    %4020 = vmatpush1.bf16.msra.mxu0 %v3491
    %4021 = vmatprep.subr.bf16.mxu0 %v3499
    %4022 = vmatpush1.bf16.msra.mxu0 %v3498
    %4023 = vmatprep.subr.bf16.mxu0 %v3506
    %4024 = vmatpush1.bf16.msra.mxu0 %v3505
    %4025 = vmatprep.subr.bf16.mxu0 %v3513
    %4026 = vmatpush1.bf16.msra.mxu0 %v3512
    %4027 = vmatprep.subr.bf16.mxu0 %v3520
    %4028 = vmatpush1.bf16.msra.mxu0 %v3519
    %4029 = vmatprep.subr.bf16.mxu0 %v3527
    %4030 = vmatpush1.bf16.msra.mxu0 %v3526
    %4031 = vmatprep.subr.bf16.mxu0 %v3534
    %4032 = vmatpush1.bf16.msra.mxu0 %v3533
    %4033 = vmatprep.subr.bf16.mxu0 %v3541
    %4034 = vmatpush1.bf16.msra.mxu0 %v3540
    %4035 = vmatprep.subr.bf16.mxu0 %v3548
    %4036 = vmatpush1.bf16.msra.mxu0 %v3547
    %4037 = vmatprep.subr.bf16.mxu0 %v3555
    %4038 = vmatpush1.bf16.msra.mxu0 %v3554
    %4039 = vmatprep.subr.bf16.mxu0 %v3562
    %4040 = vmatpush1.bf16.msra.mxu0 %v3561
    %4041 = vmatprep.subr.bf16.mxu0 %v3569
    %4042 = vmatpush1.bf16.msra.mxu0 %v3568
    %4043 = vmatprep.subr.bf16.mxu0 %v3576
    %4044 = vmatpush1.bf16.msra.mxu0 %v3575
    %4045 = vmatprep.subr.bf16.mxu0 %v3583
    %4046 = vmatpush1.bf16.msra.mxu0 %v3582
    %4047 = vmatprep.subr.bf16.mxu0 %v3590
    %4048 = vmatpush1.bf16.msra.mxu0 %v3589
    %4049 = vmatprep.subr.bf16.mxu0 %v3597
    %4050 = vmatpush1.bf16.msra.mxu0 %v3596
    %4051 = vmatprep.mubr.bf16.mxu0 %v2489
    %4052 = vmatmul.mubr.bf16.gmra.mrb[0].mxu0 %v2488
    %v4053 = vpop.f32.mrb[0].mxu0
    %v4054 = vadd.f32 %v2761, %v4053
    %v4055 = vpop.f32.mrb[0].mxu0
    %v4056 = vadd.f32 %v2765, %v4055
    %v4057 = vpop.f32.mrb[0].mxu0
    %v4058 = vpop.f32.mrb[0].mxu0
    %4059 = vdwg.mxu0
    %4060 = vmatprep.subr.bf16.mxu0 %v3604
    %4061 = vmatpush1.bf16.msra.mxu0 %v3603
    %4062 = vmatprep.subr.bf16.mxu0 %v3611
    %4063 = vmatpush1.bf16.msra.mxu0 %v3610
    %4064 = vmatprep.subr.bf16.mxu0 %v3618
    %4065 = vmatpush1.bf16.msra.mxu0 %v3617
    %4066 = vmatprep.subr.bf16.mxu0 %v3625
    %4067 = vmatpush1.bf16.msra.mxu0 %v3624
    %4068 = vmatprep.subr.bf16.mxu0 %v3632
    %4069 = vmatpush1.bf16.msra.mxu0 %v3631
    %4070 = vmatprep.subr.bf16.mxu0 %v3639
    %4071 = vmatpush1.bf16.msra.mxu0 %v3638
    %4072 = vmatprep.subr.bf16.mxu0 %v3646
    %4073 = vmatpush1.bf16.msra.mxu0 %v3645
    %4074 = vmatprep.subr.bf16.mxu0 %v3653
    %4075 = vmatpush1.bf16.msra.mxu0 %v3652
    %4076 = vmatprep.subr.bf16.mxu0 %v3660
    %4077 = vmatpush1.bf16.msra.mxu0 %v3659
    %4078 = vmatprep.subr.bf16.mxu0 %v3667
    %4079 = vmatpush1.bf16.msra.mxu0 %v3666
    %4080 = vmatprep.subr.bf16.mxu0 %v3674
    %4081 = vmatpush1.bf16.msra.mxu0 %v3673
    %4082 = vmatprep.subr.bf16.mxu0 %v3681
    %4083 = vmatpush1.bf16.msra.mxu0 %v3680
    %4084 = vmatprep.subr.bf16.mxu0 %v3688
    %4085 = vmatpush1.bf16.msra.mxu0 %v3687
    %4086 = vmatprep.subr.bf16.mxu0 %v3695
    %4087 = vmatpush1.bf16.msra.mxu0 %v3694
    %4088 = vmatprep.subr.bf16.mxu0 %v3702
    %4089 = vmatpush1.bf16.msra.mxu0 %v3701
    %4090 = vmatprep.subr.bf16.mxu0 %v3709
    %4091 = vmatpush1.bf16.msra.mxu0 %v3708
    %4092 = vmatprep.mubr.bf16.mxu0 %v2491
    %4093 = vmatmul.mubr.bf16.gmra.mrb[0].mxu0 %v2490
    %v4094 = vpop.f32.mrb[0].mxu0
    %v4095 = vadd.f32 %v4054, %v4094
    %v4096 = vpop.f32.mrb[0].mxu0
    %v4097 = vadd.f32 %v4056, %v4096
    %v4098 = vpop.f32.mrb[0].mxu0
    %v4099 = vpop.f32.mrb[0].mxu0
    %4100 = vdwg.mxu0
    %4101 = vmatprep.subr.bf16.mxu0 %v3494
    %4102 = vmatpush1.bf16.msra.mxu0 %v3493
    %4103 = vmatprep.subr.bf16.mxu0 %v3501
    %4104 = vmatpush1.bf16.msra.mxu0 %v3500
    %4105 = vmatprep.subr.bf16.mxu0 %v3508
    %4106 = vmatpush1.bf16.msra.mxu0 %v3507
    %4107 = vmatprep.subr.bf16.mxu0 %v3515
    %4108 = vmatpush1.bf16.msra.mxu0 %v3514
    %4109 = vmatprep.subr.bf16.mxu0 %v3522
    %4110 = vmatpush1.bf16.msra.mxu0 %v3521
    %4111 = vmatprep.subr.bf16.mxu0 %v3529
    %4112 = vmatpush1.bf16.msra.mxu0 %v3528
    %4113 = vmatprep.subr.bf16.mxu0 %v3536
    %4114 = vmatpush1.bf16.msra.mxu0 %v3535
    %4115 = vmatprep.subr.bf16.mxu0 %v3543
    %4116 = vmatpush1.bf16.msra.mxu0 %v3542
    %4117 = vmatprep.subr.bf16.mxu0 %v3550
    %4118 = vmatpush1.bf16.msra.mxu0 %v3549
    %4119 = vmatprep.subr.bf16.mxu0 %v3557
    %4120 = vmatpush1.bf16.msra.mxu0 %v3556
    %4121 = vmatprep.subr.bf16.mxu0 %v3564
    %4122 = vmatpush1.bf16.msra.mxu0 %v3563
    %4123 = vmatprep.subr.bf16.mxu0 %v3571
    %4124 = vmatpush1.bf16.msra.mxu0 %v3570
    %4125 = vmatprep.subr.bf16.mxu0 %v3578
    %4126 = vmatpush1.bf16.msra.mxu0 %v3577
    %4127 = vmatprep.subr.bf16.mxu0 %v3585
    %4128 = vmatpush1.bf16.msra.mxu0 %v3584
    %4129 = vmatprep.subr.bf16.mxu0 %v3592
    %4130 = vmatpush1.bf16.msra.mxu0 %v3591
    %4131 = vmatprep.subr.bf16.mxu0 %v3599
    %4132 = vmatpush1.bf16.msra.mxu0 %v3598
    %4133 = vmatprep.mubr.bf16.mxu0 %v2489
    %4134 = vmatmul.mubr.bf16.gmra.mrb[0].mxu0 %v2488
    %v4135 = vpop.f32.mrb[0].mxu0
    %v4136 = vadd.f32 %v2769, %v4135
    %v4137 = vpop.f32.mrb[0].mxu0
    %v4138 = vadd.f32 %v2773, %v4137
    %v4139 = vpop.f32.mrb[0].mxu0
    %v4140 = vpop.f32.mrb[0].mxu0
    %4141 = vdwg.mxu0
    %4142 = vmatprep.subr.bf16.mxu0 %v3606
    %4143 = vmatpush1.bf16.msra.mxu0 %v3605
    %4144 = vmatprep.subr.bf16.mxu0 %v3613
    %4145 = vmatpush1.bf16.msra.mxu0 %v3612
    %4146 = vmatprep.subr.bf16.mxu0 %v3620
    %4147 = vmatpush1.bf16.msra.mxu0 %v3619
    %4148 = vmatprep.subr.bf16.mxu0 %v3627
    %4149 = vmatpush1.bf16.msra.mxu0 %v3626
    %4150 = vmatprep.subr.bf16.mxu0 %v3634
    %4151 = vmatpush1.bf16.msra.mxu0 %v3633
    %4152 = vmatprep.subr.bf16.mxu0 %v3641
    %4153 = vmatpush1.bf16.msra.mxu0 %v3640
    %4154 = vmatprep.subr.bf16.mxu0 %v3648
    %4155 = vmatpush1.bf16.msra.mxu0 %v3647
    %4156 = vmatprep.subr.bf16.mxu0 %v3655
    %4157 = vmatpush1.bf16.msra.mxu0 %v3654
    %4158 = vmatprep.subr.bf16.mxu0 %v3662
    %4159 = vmatpush1.bf16.msra.mxu0 %v3661
    %4160 = vmatprep.subr.bf16.mxu0 %v3669
    %4161 = vmatpush1.bf16.msra.mxu0 %v3668
    %4162 = vmatprep.subr.bf16.mxu0 %v3676
    %4163 = vmatpush1.bf16.msra.mxu0 %v3675
    %4164 = vmatprep.subr.bf16.mxu0 %v3683
    %4165 = vmatpush1.bf16.msra.mxu0 %v3682
    %4166 = vmatprep.subr.bf16.mxu0 %v3690
    %4167 = vmatpush1.bf16.msra.mxu0 %v3689
    %4168 = vmatprep.subr.bf16.mxu0 %v3697
    %4169 = vmatpush1.bf16.msra.mxu0 %v3696
    %4170 = vmatprep.subr.bf16.mxu0 %v3704
    %4171 = vmatpush1.bf16.msra.mxu0 %v3703
    %4172 = vmatprep.subr.bf16.mxu0 %v3711
    %4173 = vmatpush1.bf16.msra.mxu0 %v3710
    %4174 = vmatprep.mubr.bf16.mxu0 %v2491
    %4175 = vmatmul.mubr.bf16.gmra.mrb[0].mxu0 %v2490
    %v4176 = vpop.f32.mrb[0].mxu0
    %v4177 = vadd.f32 %v4136, %v4176
    %v4178 = vpop.f32.mrb[0].mxu0
    %v4179 = vadd.f32 %v4138, %v4178
    %v4180 = vpop.f32.mrb[0].mxu0
    %v4181 = vpop.f32.mrb[0].mxu0
    %4182 = vdwg.mxu0
    %4183 = vmatprep.subr.bf16.mxu0 0
    %4184 = vmatpush1.bf16.msra.mxu0 %v3495
    %4185 = vmatprep.subr.bf16.mxu0 0
    %4186 = vmatpush1.bf16.msra.mxu0 %v3502
    %4187 = vmatprep.subr.bf16.mxu0 0
    %4188 = vmatpush1.bf16.msra.mxu0 %v3509
    %4189 = vmatprep.subr.bf16.mxu0 0
    %4190 = vmatpush1.bf16.msra.mxu0 %v3516
    %4191 = vmatprep.subr.bf16.mxu0 0
    %4192 = vmatpush1.bf16.msra.mxu0 %v3523
    %4193 = vmatprep.subr.bf16.mxu0 0
    %4194 = vmatpush1.bf16.msra.mxu0 %v3530
    %4195 = vmatprep.subr.bf16.mxu0 0
    %4196 = vmatpush1.bf16.msra.mxu0 %v3537
    %4197 = vmatprep.subr.bf16.mxu0 0
    %4198 = vmatpush1.bf16.msra.mxu0 %v3544
    %4199 = vmatprep.subr.bf16.mxu0 0
    %4200 = vmatpush1.bf16.msra.mxu0 %v3551
    %4201 = vmatprep.subr.bf16.mxu0 0
    %4202 = vmatpush1.bf16.msra.mxu0 %v3558
    %4203 = vmatprep.subr.bf16.mxu0 0
    %4204 = vmatpush1.bf16.msra.mxu0 %v3565
    %4205 = vmatprep.subr.bf16.mxu0 0
    %4206 = vmatpush1.bf16.msra.mxu0 %v3572
    %4207 = vmatprep.subr.bf16.mxu0 0
    %4208 = vmatpush1.bf16.msra.mxu0 %v3579
    %4209 = vmatprep.subr.bf16.mxu0 0
    %4210 = vmatpush1.bf16.msra.mxu0 %v3586
    %4211 = vmatprep.subr.bf16.mxu0 0
    %4212 = vmatpush1.bf16.msra.mxu0 %v3593
    %4213 = vmatprep.subr.bf16.mxu0 0
    %4214 = vmatpush1.bf16.msra.mxu0 %v3600
    %4215 = vmatprep.mubr.bf16.mxu0 %v2489
    %4216 = vmatmul.mubr.bf16.gmra.mrb[0].mxu0 %v2488
    %v4217 = vpop.f32.mrb[0].mxu0
    %v4218 = vadd.f32 %v2777, %v4217
    %v4219 = vpop.f32.mrb[0].mxu0
    %v4220 = vpop.f32.mrb[0].mxu0
    %v4221 = vpop.f32.mrb[0].mxu0
    %4222 = vdwg.mxu0
    %4223 = vmatprep.subr.bf16.mxu0 0
    %4224 = vmatpush1.bf16.msra.mxu0 %v3607
    %4225 = vmatprep.subr.bf16.mxu0 0
    %4226 = vmatpush1.bf16.msra.mxu0 %v3614
    %4227 = vmatprep.subr.bf16.mxu0 0
    %4228 = vmatpush1.bf16.msra.mxu0 %v3621
    %4229 = vmatprep.subr.bf16.mxu0 0
    %4230 = vmatpush1.bf16.msra.mxu0 %v3628
    %4231 = vmatprep.subr.bf16.mxu0 0
    %4232 = vmatpush1.bf16.msra.mxu0 %v3635
    %4233 = vmatprep.subr.bf16.mxu0 0
    %4234 = vmatpush1.bf16.msra.mxu0 %v3642
    %4235 = vmatprep.subr.bf16.mxu0 0
    %4236 = vmatpush1.bf16.msra.mxu0 %v3649
    %4237 = vmatprep.subr.bf16.mxu0 0
    %4238 = vmatpush1.bf16.msra.mxu0 %v3656
    %4239 = vmatprep.subr.bf16.mxu0 0
    %4240 = vmatpush1.bf16.msra.mxu0 %v3663
    %4241 = vmatprep.subr.bf16.mxu0 0
    %4242 = vmatpush1.bf16.msra.mxu0 %v3670
    %4243 = vmatprep.subr.bf16.mxu0 0
    %4244 = vmatpush1.bf16.msra.mxu0 %v3677
    %4245 = vmatprep.subr.bf16.mxu0 0
    %4246 = vmatpush1.bf16.msra.mxu0 %v3684
    %4247 = vmatprep.subr.bf16.mxu0 0
    %4248 = vmatpush1.bf16.msra.mxu0 %v3691
    %4249 = vmatprep.subr.bf16.mxu0 0
    %4250 = vmatpush1.bf16.msra.mxu0 %v3698
    %4251 = vmatprep.subr.bf16.mxu0 0
    %4252 = vmatpush1.bf16.msra.mxu0 %v3705
    %4253 = vmatprep.subr.bf16.mxu0 0
    %4254 = vmatpush1.bf16.msra.mxu0 %v3712
    %4255 = vmatprep.mubr.bf16.mxu0 %v2491
    %4256 = vmatmul.mubr.bf16.gmra.mrb[0].mxu0 %v2490
    %v4257 = vpop.f32.mrb[0].mxu0
    %v4258 = vadd.f32 %v4218, %v4257
    %v4259 = vpop.f32.mrb[0].mxu0
    %v4260 = vpop.f32.mrb[0].mxu0
    %v4261 = vpop.f32.mrb[0].mxu0
    %4262 = vdwg.mxu0
    %v4263 = vxor.u32 %v4013, 2147483648
    %v4264 = vxor.u32 %v4015, 2147483648
    %v4265 = vxor.u32 %v4095, 2147483648
    %v4266 = vxor.u32 %v4097, 2147483648
    %v4267 = vxor.u32 %v4177, 2147483648
    %v4268 = vxor.u32 %v4179, 2147483648
    %v4269 = vxor.u32 %v4258, 2147483648
    %v4270 = vmul.f32 %v4263, 1.442695
    %v4271 = vpow.pop %v4270
    %v4272 = vmul.f32 %v4264, 1.442695
    %v4273 = vpow.pop %v4272
    %v4274 = vmul.f32 %v4265, 1.442695
    %v4275 = vpow.pop %v4274
    %v4276 = vmul.f32 %v4266, 1.442695
    %v4277 = vpow.pop %v4276
    %v4278 = vmul.f32 %v4267, 1.442695
    %v4279 = vpow.pop %v4278
    %v4280 = vmul.f32 %v4268, 1.442695
    %v4281 = vpow.pop %v4280
    %v4282 = vmul.f32 %v4269, 1.442695
    %v4283 = vpow.pop %v4282
    %v4284 = vadd.f32 %v4271, 1.0
    %v4285 = vadd.f32 %v4273, 1.0
    %v4286 = vadd.f32 %v4275, 1.0
    %v4287 = vadd.f32 %v4277, 1.0
    %v4288 = vadd.f32 %v4279, 1.0
    %v4289 = vadd.f32 %v4281, 1.0
    %v4290 = vadd.f32 %v4283, 1.0
    %v4291 = vrcp.pop %v4284
    %v4292 = vmul.f32 1.0, %v4291
    %v4293 = vrcp.pop %v4285
    %v4294 = vmul.f32 1.0, %v4293
    %v4295 = vrcp.pop %v4286
    %v4296 = vmul.f32 1.0, %v4295
    %v4297 = vrcp.pop %v4287
    %v4298 = vmul.f32 1.0, %v4297
    %v4299 = vrcp.pop %v4288
    %v4300 = vmul.f32 1.0, %v4299
    %v4301 = vrcp.pop %v4289
    %v4302 = vmul.f32 1.0, %v4301
    %v4303 = vrcp.pop %v4290
    %v4304 = vmul.f32 1.0, %v4303
    %4305 = vst [vmem:[#allocation13] sm:$0xff] %v4292
    %4306 = vst [vmem:[#allocation13 + $0x8] sm:$0xff] %v4294
    %4307 = vst [vmem:[#allocation13 + $0x10] sm:$0xff] %v4296
    %4308 = vst [vmem:[#allocation13 + $0x18] sm:$0xff] %v4298
    %4309 = vst [vmem:[#allocation13 + $0x20] sm:$0xff] %v4300
    %4310 = vst [vmem:[#allocation13 + $0x28] sm:$0xff] %v4302
    %4311 = vst [vmem:[#allocation13 + $0x30] sm:$0xff] %v4304
    // Predicated region
    $region62: #{tpu_custom_call.1} parent=1 // pred_check
      _
    $region63: #{tpu_custom_call.1} parent=1 // pred_check_branch
      %4313 = sbr.rel (0) target = $region65
    $region64: #{tpu_custom_call.1} parent=1 // pred_region
      %s4315 = ssub.s32 896, 896
      %4316 = vsyncadd [#allocation4], %s4315
      %s4318 = sshll.u32 [#allocation13], 4
      %s4319 = int_to_ptr.vmem [resolvable:$true] %s4318
      %4321 = dma.vmem_to_hbm [thread:$0]  %s4319, 896, %s9, [#allocation4]
    $region65: #{tpu_custom_call.1} parent=1 // pred_fallthru
      _
    // Predicated region
    $region66: #{tpu_custom_call.1} parent=1 // pred_check
      _
    $region67: #{tpu_custom_call.1} parent=1 // pred_check_branch
      %4323 = sbr.rel (0) target = $region69
    $region68: #{tpu_custom_call.1} parent=1 // pred_region
      %4324 = dma.done [#allocation4], 896
    $region69: #{tpu_custom_call.1} parent=1 // pred_fallthru
      _
    %4325 = vsyncpa [#allocation3], 1
    %4326 = vsyncpa [#allocation6], 1
    %4327 = vsyncpa [#allocation9], 1
    %4328 = vsyncpa [#allocation12], 1
    %4329 = vsyncpa [#allocation4], 1

</llo_original>
